<compile_context>
chip_gen: v7x
topology: tpu7x:2x2x1
jax: 0.10.0
libtpu: 0.0.40
codegen_flags: <defaults>
</compile_context>

<pallas_src>
import numpy as np
import jax
import jax.numpy as jnp
from jax.experimental import pallas as pl
from jax.experimental.pallas import tpu as pltpu

# ---- small synthetic config (scaled-down version of the experiment) --------
B = 2
N_SAMPLES = 2048          # exp.n_samples (2**15) scaled down
N_BANDS = 32              # exp.n_bands (model_dim = 256) scaled down
FB_KERNEL = 128           # exp.kernel_size (1024) scaled down
POOL_STEP = 64            # step_size (scaled)
POOL_WINDOW = 128         # window_size = 2 * step (scaled)
N_FRAMES = N_SAMPLES // POOL_STEP   # 32
CHANNELS = 32             # AudioAnalysis(channels)
CONV_K = 7
CONV_PAD = 3
WEIGHT_INIT = 0.05        # exp.weight_init

CHUNK = FB_KERNEL                     # block-Toeplitz chunk length (== kernel length)
NUM_CHUNKS = N_SAMPLES // CHUNK       # 16

assert CHUNK == 2 * POOL_STEP
assert N_SAMPLES % CHUNK == 0
assert N_FRAMES == 2 * NUM_CHUNKS
assert POOL_WINDOW == 2 * POOL_STEP


# ---------------------------- fused kernel ----------------------------------
def audio_analysis_kernel(l0_ref, l1_ref, w0_ref, w1_ref, w2_ref, b2_ref, o_ref):
    # l0_ref/l1_ref : (1, NUM_CHUNKS, CHUNK) bf16  -- padded audio chunks c and c+1
    # w0_ref/w1_ref : (CHUNK, N_BANDS*CHUNK) bf16  -- block-Toeplitz filter bank
    # w2_ref        : (CONV_K, CHANNELS, N_BANDS) f32
    # b2_ref        : (CHANNELS, 1) f32
    # o_ref         : (1, CHANNELS, N_FRAMES) f32  (NCL layout)

    # ---- filter-bank 'same' conv as block-Toeplitz matmul (bf16 MXU, f32 acc)
    # y[c, band*CHUNK + r] = conv output at time t = c*CHUNK + r for `band`
    y = jnp.dot(l0_ref[0], w0_ref[...], preferred_element_type=jnp.float32)
    y = y + jnp.dot(l1_ref[0], w1_ref[...], preferred_element_type=jnp.float32)
    y = jnp.abs(y)                                    # rectified band energies

    # ---- overlapping avg-pool: half-frame means via masked lane reductions ---
    r_idx = jax.lax.broadcasted_iota(jnp.int32, (NUM_CHUNKS, CHUNK), 1)
    m0 = (r_idx < POOL_STEP).astype(jnp.float32)      # first half of each chunk
    m1 = 1.0 - m0                                     # second half
    inv = 1.0 / POOL_STEP
    h0_parts = []
    h1_parts = []
    for b in range(N_BANDS):
        piece = y[:, b * CHUNK:(b + 1) * CHUNK]       # (NUM_CHUNKS, CHUNK), vreg aligned
        h0_parts.append(jnp.sum(piece * m0, axis=-1, keepdims=True))
        h1_parts.append(jnp.sum(piece * m1, axis=-1, keepdims=True))
    h0 = jnp.concatenate(h0_parts, axis=-1) * inv     # (NUM_CHUNKS, N_BANDS): half-frame 2c
    h1 = jnp.concatenate(h1_parts, axis=-1) * inv     # (NUM_CHUNKS, N_BANDS): half-frame 2c+1

    # frame[f] = 0.5*(half[f-1] + half[f]),  half[-1] = 0   (count_include_pad=True)
    h1_prev = jnp.concatenate(
        [jnp.zeros((1, N_BANDS), jnp.float32), h1[:NUM_CHUNKS - 1, :]], axis=0)
    p_even = 0.5 * (h1_prev + h0)                     # frames 2c
    p_odd = 0.5 * (h0 + h1)                           # frames 2c+1

    # padded + row-interleaved pooled features: (N_FRAMES + 2*CONV_PAD, N_BANDS)
    zpad = jnp.zeros((CONV_PAD, N_BANDS), jnp.float32)
    rows = [zpad]
    for c in range(NUM_CHUNKS):
        rows.append(p_even[c:c + 1, :])
        rows.append(p_odd[c:c + 1, :])
    rows.append(zpad)
    pp = jnp.concatenate(rows, axis=0)                # (N_FRAMES + 6, N_BANDS)

    # ---- 7-tap Conv1d epilogue, accumulated directly in (channels, frames) ---
    out_cf = jnp.zeros((CHANNELS, N_FRAMES), jnp.float32)
    for k in range(CONV_K):
        out_cf = out_cf + jax.lax.dot_general(
            w2_ref[k], pp[k:k + N_FRAMES, :],         # (CH, BANDS) x (F, BANDS)^T
            dimension_numbers=(((1,), (1,)), ((), ())),
            preferred_element_type=jnp.float32)
    o_ref[0] = out_cf + b2_ref[...]                   # NCL: (channels, frames)


# ---------------------------- parameter prep (glue) --------------------------
def _block_toeplitz_weights(wfb):
    """Build W0/W1 so that  X[c] @ W0 + X[c+1] @ W1  equals the 'same' conv.

    wfb: (N_BANDS, FB_KERNEL).  Columns flattened as (band, r): col = band*CHUNK + r.
    W0[p, band*CHUNK + r] = wfb[band, p - r]            (0 <= p - r < K)
    W1[p, band*CHUNK + r] = wfb[band, CHUNK + p - r]    (0 <= CHUNK + p - r < K)
    """
    p = jnp.arange(CHUNK)[:, None]
    r = jnp.arange(CHUNK)[None, :]
    wfb_t = wfb.T                                     # (K, N_BANDS)

    def build(koff):
        kk = koff + p - r                             # (CHUNK, CHUNK)
        valid = (kk >= 0) & (kk < FB_KERNEL)
        vals = wfb_t[jnp.clip(kk, 0, FB_KERNEL - 1)]  # (CHUNK, CHUNK, N_BANDS) [p, r, band]
        vals = jnp.where(valid[:, :, None], vals, 0.0)
        vals = jnp.transpose(vals, (0, 2, 1))         # (CHUNK, N_BANDS, CHUNK) [p, band, r]
        return vals.reshape(CHUNK, N_BANDS * CHUNK).astype(jnp.bfloat16)

    return build(0), build(CHUNK)


def audio_analysis(x, wfb, w2, b2):
    """x: (B, N_SAMPLES) raw audio -> (B, CHANNELS, N_FRAMES) in NCL layout."""
    bsz, n = x.shape
    assert n == N_SAMPLES

    pad = FB_KERNEL // 2
    xp = jnp.pad(x, ((0, 0), (pad, pad)))                       # (B, N_SAMPLES + K)
    xc = xp.reshape(bsz, NUM_CHUNKS + 1, CHUNK)
    lhs0 = xc[:, :NUM_CHUNKS, :].astype(jnp.bfloat16)           # chunk c
    lhs1 = xc[:, 1:, :].astype(jnp.bfloat16)                    # chunk c+1

    w0, w1 = _block_toeplitz_weights(wfb)                       # bf16, (CHUNK, N_BANDS*CHUNK)
    w2_t = jnp.transpose(w2, (2, 0, 1))                         # (CONV_K, CHANNELS, N_BANDS)
    b2_c = b2.reshape(CHANNELS, 1)

    grid_spec = pltpu.PrefetchScalarGridSpec(
        num_scalar_prefetch=0,
        grid=(bsz,),
        in_specs=[
            pl.BlockSpec((1, NUM_CHUNKS, CHUNK), lambda b: (b, 0, 0)),
            pl.BlockSpec((1, NUM_CHUNKS, CHUNK), lambda b: (b, 0, 0)),
            pl.BlockSpec((CHUNK, N_BANDS * CHUNK), lambda b: (0, 0)),
            pl.BlockSpec((CHUNK, N_BANDS * CHUNK), lambda b: (0, 0)),
            pl.BlockSpec((CONV_K, CHANNELS, N_BANDS), lambda b: (0, 0, 0)),
            pl.BlockSpec((CHANNELS, 1), lambda b: (0, 0)),
        ],
        out_specs=pl.BlockSpec((1, CHANNELS, N_FRAMES), lambda b: (b, 0, 0)),
    )

    return pl.pallas_call(
        audio_analysis_kernel,
        out_shape=jax.ShapeDtypeStruct((bsz, CHANNELS, N_FRAMES), jnp.float32),
        grid_spec=grid_spec,
        compiler_params=pltpu.CompilerParams(dimension_semantics=("parallel",)),
    )(lhs0, lhs1, w0, w1, w2_t, b2_c)


# ---------------------------- pure-JAX reference -----------------------------
def reference(x, wfb, w2, b2):
    """Same math (with matching bf16 MXU operands) computed with plain XLA ops."""
    pad = FB_KERNEL // 2
    xp = jnp.pad(x, ((0, 0), (pad, pad)))
    idx = jnp.arange(N_SAMPLES)[:, None] + jnp.arange(FB_KERNEL)[None, :]
    windows = xp[:, idx].astype(jnp.bfloat16)                   # (B, T, K)
    y = jax.lax.dot_general(windows, wfb.astype(jnp.bfloat16).T,
                            (((2,), (0,)), ((), ())),
                            preferred_element_type=jnp.float32)  # (B, T, N_BANDS)
    y = jnp.abs(y)
    half = y.reshape(B, N_FRAMES, POOL_STEP, N_BANDS).mean(axis=2)
    prev = jnp.concatenate(
        [jnp.zeros((B, 1, N_BANDS), jnp.float32), half[:, :-1]], axis=1)
    pooled = 0.5 * (prev + half)                                 # (B, F, BANDS)
    pp = jnp.pad(pooled, ((0, 0), (CONV_PAD, CONV_PAD), (0, 0)))
    out = jnp.zeros((B, N_FRAMES, CHANNELS), jnp.float32)
    for k in range(CONV_K):
        out = out + jnp.einsum('bfn,cn->bfc', pp[:, k:k + N_FRAMES], w2[:, :, k])
    out = out + b2[None, None, :]
    return jnp.transpose(out, (0, 2, 1))                         # (B, CH, F)


if __name__ == "__main__":
    key = jax.random.PRNGKey(0)
    k_x, k_fb, k_w, k_b = jax.random.split(key, 4)

    x = jax.random.normal(k_x, (B, N_SAMPLES), dtype=jnp.float32)

    # TODO(synk): exp.pooled_filter_bank builds a morlet filter bank with
    # A-weighting / scaling via the zounds library; synthetic weight_init-scaled
    # filters are used here -- the conv -> abs -> overlapping-avg-pool structure
    # is preserved exactly.
    wfb = WEIGHT_INIT * jax.random.normal(k_fb, (N_BANDS, FB_KERNEL), dtype=jnp.float32)

    # nn.Conv1d(N_BANDS, CHANNELS, 7, 1, 3) default init: U(-1/sqrt(fan_in), +)
    fan_in = N_BANDS * CONV_K
    bound = 1.0 / np.sqrt(fan_in)
    w2 = jax.random.uniform(k_w, (CHANNELS, N_BANDS, CONV_K),
                            minval=-bound, maxval=bound, dtype=jnp.float32)
    b2 = jax.random.uniform(k_b, (CHANNELS,),
                            minval=-bound, maxval=bound, dtype=jnp.float32)

    out = jax.jit(audio_analysis)(x, wfb, w2, b2)
    jax.block_until_ready(out)
    assert out.shape == (B, CHANNELS, N_FRAMES), out.shape

    ref = reference(x, wfb, w2, b2)
    err = float(jnp.max(jnp.abs(out - ref)))
    assert np.isfinite(err) and err < 1e-2, f"max|diff|={err}"
    print("KERNEL_OK")
</pallas_src>

<mosaic_0001>
module attributes {stable_mosaic.version = 11 : i64} {
  func.func @audio_analysis_kernel(%arg0: i32, %arg1: memref<1x16x128xbf16, #tpu.memory_space<vmem>>, %arg2: memref<1x16x128xbf16, #tpu.memory_space<vmem>>, %arg3: memref<128x4096xbf16, #tpu.memory_space<vmem>>, %arg4: memref<128x4096xbf16, #tpu.memory_space<vmem>>, %arg5: memref<7x32x32xf32, #tpu.memory_space<vmem>>, %arg6: memref<32x1xf32, #tpu.memory_space<vmem>>, %arg7: memref<1x32x32xf32, #tpu.memory_space<vmem>>) attributes {dimension_semantics = [#tpu.dimension_semantics<parallel>], iteration_bounds = array<i64: 2>, scalar_prefetch = 0 : i64, scratch_operands = 0 : i64, tpu.core_type = #tpu.core_type<tc>, window_params = [{transform_indices = @transform_0, window_bounds = array<i64: 1, 16, 128>}, {transform_indices = @transform_1, window_bounds = array<i64: 1, 16, 128>}, {pipeline_mode = #tpu.pipeline_mode<synchronous>, transform_indices = @transform_2, window_bounds = array<i64: 128, 4096>}, {pipeline_mode = #tpu.pipeline_mode<synchronous>, transform_indices = @transform_3, window_bounds = array<i64: 128, 4096>}, {pipeline_mode = #tpu.pipeline_mode<synchronous>, transform_indices = @transform_4, window_bounds = array<i64: 7, 32, 32>}, {pipeline_mode = #tpu.pipeline_mode<synchronous>, transform_indices = @transform_5, window_bounds = array<i64: 32, 1>}, {transform_indices = @transform_6, window_bounds = array<i64: 1, 32, 32>}]} {
    %c0 = arith.constant 0 : index
    %c0_0 = arith.constant 0 : index
    %c0_1 = arith.constant 0 : index
    %0 = vector.load %arg1[%c0, %c0_0, %c0_1] : memref<1x16x128xbf16, #tpu.memory_space<vmem>>, vector<1x16x128xbf16>
    %1 = vector.shape_cast %0 : vector<1x16x128xbf16> to vector<16x128xbf16>
    %c0_2 = arith.constant 0 : index
    %c0_3 = arith.constant 0 : index
    %2 = vector.load %arg3[%c0_2, %c0_3] : memref<128x4096xbf16, #tpu.memory_space<vmem>>, vector<128x4096xbf16>
    %cst = arith.constant dense<0.000000e+00> : vector<16x4096xf32>
    %3 = tpu.matmul %1, %2, %cst {dimension_numbers = #tpu.dot_dimension_numbers<[1], [0], [0], [1], [0, 0, 1, 1], [], []>} : vector<16x128xbf16>, vector<128x4096xbf16>, vector<16x4096xf32> -> vector<16x4096xf32>
    %c0_4 = arith.constant 0 : index
    %c0_5 = arith.constant 0 : index
    %c0_6 = arith.constant 0 : index
    %4 = vector.load %arg2[%c0_4, %c0_5, %c0_6] : memref<1x16x128xbf16, #tpu.memory_space<vmem>>, vector<1x16x128xbf16>
    %5 = vector.shape_cast %4 : vector<1x16x128xbf16> to vector<16x128xbf16>
    %c0_7 = arith.constant 0 : index
    %c0_8 = arith.constant 0 : index
    %6 = vector.load %arg4[%c0_7, %c0_8] : memref<128x4096xbf16, #tpu.memory_space<vmem>>, vector<128x4096xbf16>
    %cst_9 = arith.constant dense<0.000000e+00> : vector<16x4096xf32>
    %7 = tpu.matmul %5, %6, %cst_9 {dimension_numbers = #tpu.dot_dimension_numbers<[1], [0], [0], [1], [0, 0, 1, 1], [], []>} : vector<16x128xbf16>, vector<128x4096xbf16>, vector<16x4096xf32> -> vector<16x4096xf32>
    %8 = arith.addf %3, %7 : vector<16x4096xf32>
    %9 = math.absf %8 : vector<16x4096xf32>
    %10 = tpu.iota {dimensions = array<i32: 1>} : vector<16x128xi32>
    %c64_i32 = arith.constant 64 : i32
    %11 = vector.broadcast %c64_i32 : i32 to vector<16x128xi32>
    %12 = arith.cmpi slt, %10, %11 : vector<16x128xi32>
    %13 = arith.extui %12 : vector<16x128xi1> to vector<16x128xi32>
    %14 = arith.sitofp %13 : vector<16x128xi32> to vector<16x128xf32>
    %cst_10 = arith.constant 1.000000e+00 : f32
    %15 = vector.broadcast %cst_10 : f32 to vector<16x128xf32>
    %16 = arith.subf %15, %14 : vector<16x128xf32>
    %17 = vector.extract_strided_slice %9 {offsets = [0, 0], sizes = [16, 128], strides = [1, 1]} : vector<16x4096xf32> to vector<16x128xf32>
    %18 = arith.mulf %17, %14 : vector<16x128xf32>
    %cst_11 = arith.constant dense<0.000000e+00> : vector<16xf32>
    %19 = vector.multi_reduction <add>, %18, %cst_11 [1] : vector<16x128xf32> to vector<16xf32>
    %20 = vector.shape_cast %19 : vector<16xf32> to vector<16x1xf32>
    %21 = arith.mulf %17, %16 : vector<16x128xf32>
    %cst_12 = arith.constant dense<0.000000e+00> : vector<16xf32>
    %22 = vector.multi_reduction <add>, %21, %cst_12 [1] : vector<16x128xf32> to vector<16xf32>
    %23 = vector.shape_cast %22 : vector<16xf32> to vector<16x1xf32>
    %24 = vector.extract_strided_slice %9 {offsets = [0, 128], sizes = [16, 128], strides = [1, 1]} : vector<16x4096xf32> to vector<16x128xf32>
    %25 = arith.mulf %24, %14 : vector<16x128xf32>
    %cst_13 = arith.constant dense<0.000000e+00> : vector<16xf32>
    %26 = vector.multi_reduction <add>, %25, %cst_13 [1] : vector<16x128xf32> to vector<16xf32>
    %27 = vector.shape_cast %26 : vector<16xf32> to vector<16x1xf32>
    %28 = arith.mulf %24, %16 : vector<16x128xf32>
    %cst_14 = arith.constant dense<0.000000e+00> : vector<16xf32>
    %29 = vector.multi_reduction <add>, %28, %cst_14 [1] : vector<16x128xf32> to vector<16xf32>
    %30 = vector.shape_cast %29 : vector<16xf32> to vector<16x1xf32>
    %31 = vector.extract_strided_slice %9 {offsets = [0, 256], sizes = [16, 128], strides = [1, 1]} : vector<16x4096xf32> to vector<16x128xf32>
    %32 = arith.mulf %31, %14 : vector<16x128xf32>
    %cst_15 = arith.constant dense<0.000000e+00> : vector<16xf32>
    %33 = vector.multi_reduction <add>, %32, %cst_15 [1] : vector<16x128xf32> to vector<16xf32>
    %34 = vector.shape_cast %33 : vector<16xf32> to vector<16x1xf32>
    %35 = arith.mulf %31, %16 : vector<16x128xf32>
    %cst_16 = arith.constant dense<0.000000e+00> : vector<16xf32>
    %36 = vector.multi_reduction <add>, %35, %cst_16 [1] : vector<16x128xf32> to vector<16xf32>
    %37 = vector.shape_cast %36 : vector<16xf32> to vector<16x1xf32>
    %38 = vector.extract_strided_slice %9 {offsets = [0, 384], sizes = [16, 128], strides = [1, 1]} : vector<16x4096xf32> to vector<16x128xf32>
    %39 = arith.mulf %38, %14 : vector<16x128xf32>
    %cst_17 = arith.constant dense<0.000000e+00> : vector<16xf32>
    %40 = vector.multi_reduction <add>, %39, %cst_17 [1] : vector<16x128xf32> to vector<16xf32>
    %41 = vector.shape_cast %40 : vector<16xf32> to vector<16x1xf32>
    %42 = arith.mulf %38, %16 : vector<16x128xf32>
    %cst_18 = arith.constant dense<0.000000e+00> : vector<16xf32>
    %43 = vector.multi_reduction <add>, %42, %cst_18 [1] : vector<16x128xf32> to vector<16xf32>
    %44 = vector.shape_cast %43 : vector<16xf32> to vector<16x1xf32>
    %45 = vector.extract_strided_slice %9 {offsets = [0, 512], sizes = [16, 128], strides = [1, 1]} : vector<16x4096xf32> to vector<16x128xf32>
    %46 = arith.mulf %45, %14 : vector<16x128xf32>
    %cst_19 = arith.constant dense<0.000000e+00> : vector<16xf32>
    %47 = vector.multi_reduction <add>, %46, %cst_19 [1] : vector<16x128xf32> to vector<16xf32>
    %48 = vector.shape_cast %47 : vector<16xf32> to vector<16x1xf32>
    %49 = arith.mulf %45, %16 : vector<16x128xf32>
    %cst_20 = arith.constant dense<0.000000e+00> : vector<16xf32>
    %50 = vector.multi_reduction <add>, %49, %cst_20 [1] : vector<16x128xf32> to vector<16xf32>
    %51 = vector.shape_cast %50 : vector<16xf32> to vector<16x1xf32>
    %52 = vector.extract_strided_slice %9 {offsets = [0, 640], sizes = [16, 128], strides = [1, 1]} : vector<16x4096xf32> to vector<16x128xf32>
    %53 = arith.mulf %52, %14 : vector<16x128xf32>
    %cst_21 = arith.constant dense<0.000000e+00> : vector<16xf32>
    %54 = vector.multi_reduction <add>, %53, %cst_21 [1] : vector<16x128xf32> to vector<16xf32>
    %55 = vector.shape_cast %54 : vector<16xf32> to vector<16x1xf32>
    %56 = arith.mulf %52, %16 : vector<16x128xf32>
    %cst_22 = arith.constant dense<0.000000e+00> : vector<16xf32>
    %57 = vector.multi_reduction <add>, %56, %cst_22 [1] : vector<16x128xf32> to vector<16xf32>
    %58 = vector.shape_cast %57 : vector<16xf32> to vector<16x1xf32>
    %59 = vector.extract_strided_slice %9 {offsets = [0, 768], sizes = [16, 128], strides = [1, 1]} : vector<16x4096xf32> to vector<16x128xf32>
    %60 = arith.mulf %59, %14 : vector<16x128xf32>
    %cst_23 = arith.constant dense<0.000000e+00> : vector<16xf32>
    %61 = vector.multi_reduction <add>, %60, %cst_23 [1] : vector<16x128xf32> to vector<16xf32>
    %62 = vector.shape_cast %61 : vector<16xf32> to vector<16x1xf32>
    %63 = arith.mulf %59, %16 : vector<16x128xf32>
    %cst_24 = arith.constant dense<0.000000e+00> : vector<16xf32>
    %64 = vector.multi_reduction <add>, %63, %cst_24 [1] : vector<16x128xf32> to vector<16xf32>
    %65 = vector.shape_cast %64 : vector<16xf32> to vector<16x1xf32>
    %66 = vector.extract_strided_slice %9 {offsets = [0, 896], sizes = [16, 128], strides = [1, 1]} : vector<16x4096xf32> to vector<16x128xf32>
    %67 = arith.mulf %66, %14 : vector<16x128xf32>
    %cst_25 = arith.constant dense<0.000000e+00> : vector<16xf32>
    %68 = vector.multi_reduction <add>, %67, %cst_25 [1] : vector<16x128xf32> to vector<16xf32>
    %69 = vector.shape_cast %68 : vector<16xf32> to vector<16x1xf32>
    %70 = arith.mulf %66, %16 : vector<16x128xf32>
    %cst_26 = arith.constant dense<0.000000e+00> : vector<16xf32>
    %71 = vector.multi_reduction <add>, %70, %cst_26 [1] : vector<16x128xf32> to vector<16xf32>
    %72 = vector.shape_cast %71 : vector<16xf32> to vector<16x1xf32>
    %73 = vector.extract_strided_slice %9 {offsets = [0, 1024], sizes = [16, 128], strides = [1, 1]} : vector<16x4096xf32> to vector<16x128xf32>
    %74 = arith.mulf %73, %14 : vector<16x128xf32>
    %cst_27 = arith.constant dense<0.000000e+00> : vector<16xf32>
    %75 = vector.multi_reduction <add>, %74, %cst_27 [1] : vector<16x128xf32> to vector<16xf32>
    %76 = vector.shape_cast %75 : vector<16xf32> to vector<16x1xf32>
    %77 = arith.mulf %73, %16 : vector<16x128xf32>
    %cst_28 = arith.constant dense<0.000000e+00> : vector<16xf32>
    %78 = vector.multi_reduction <add>, %77, %cst_28 [1] : vector<16x128xf32> to vector<16xf32>
    %79 = vector.shape_cast %78 : vector<16xf32> to vector<16x1xf32>
    %80 = vector.extract_strided_slice %9 {offsets = [0, 1152], sizes = [16, 128], strides = [1, 1]} : vector<16x4096xf32> to vector<16x128xf32>
    %81 = arith.mulf %80, %14 : vector<16x128xf32>
    %cst_29 = arith.constant dense<0.000000e+00> : vector<16xf32>
    %82 = vector.multi_reduction <add>, %81, %cst_29 [1] : vector<16x128xf32> to vector<16xf32>
    %83 = vector.shape_cast %82 : vector<16xf32> to vector<16x1xf32>
    %84 = arith.mulf %80, %16 : vector<16x128xf32>
    %cst_30 = arith.constant dense<0.000000e+00> : vector<16xf32>
    %85 = vector.multi_reduction <add>, %84, %cst_30 [1] : vector<16x128xf32> to vector<16xf32>
    %86 = vector.shape_cast %85 : vector<16xf32> to vector<16x1xf32>
    %87 = vector.extract_strided_slice %9 {offsets = [0, 1280], sizes = [16, 128], strides = [1, 1]} : vector<16x4096xf32> to vector<16x128xf32>
    %88 = arith.mulf %87, %14 : vector<16x128xf32>
    %cst_31 = arith.constant dense<0.000000e+00> : vector<16xf32>
    %89 = vector.multi_reduction <add>, %88, %cst_31 [1] : vector<16x128xf32> to vector<16xf32>
    %90 = vector.shape_cast %89 : vector<16xf32> to vector<16x1xf32>
    %91 = arith.mulf %87, %16 : vector<16x128xf32>
    %cst_32 = arith.constant dense<0.000000e+00> : vector<16xf32>
    %92 = vector.multi_reduction <add>, %91, %cst_32 [1] : vector<16x128xf32> to vector<16xf32>
    %93 = vector.shape_cast %92 : vector<16xf32> to vector<16x1xf32>
    %94 = vector.extract_strided_slice %9 {offsets = [0, 1408], sizes = [16, 128], strides = [1, 1]} : vector<16x4096xf32> to vector<16x128xf32>
    %95 = arith.mulf %94, %14 : vector<16x128xf32>
    %cst_33 = arith.constant dense<0.000000e+00> : vector<16xf32>
    %96 = vector.multi_reduction <add>, %95, %cst_33 [1] : vector<16x128xf32> to vector<16xf32>
    %97 = vector.shape_cast %96 : vector<16xf32> to vector<16x1xf32>
    %98 = arith.mulf %94, %16 : vector<16x128xf32>
    %cst_34 = arith.constant dense<0.000000e+00> : vector<16xf32>
    %99 = vector.multi_reduction <add>, %98, %cst_34 [1] : vector<16x128xf32> to vector<16xf32>
    %100 = vector.shape_cast %99 : vector<16xf32> to vector<16x1xf32>
    %101 = vector.extract_strided_slice %9 {offsets = [0, 1536], sizes = [16, 128], strides = [1, 1]} : vector<16x4096xf32> to vector<16x128xf32>
    %102 = arith.mulf %101, %14 : vector<16x128xf32>
    %cst_35 = arith.constant dense<0.000000e+00> : vector<16xf32>
    %103 = vector.multi_reduction <add>, %102, %cst_35 [1] : vector<16x128xf32> to vector<16xf32>
    %104 = vector.shape_cast %103 : vector<16xf32> to vector<16x1xf32>
    %105 = arith.mulf %101, %16 : vector<16x128xf32>
    %cst_36 = arith.constant dense<0.000000e+00> : vector<16xf32>
    %106 = vector.multi_reduction <add>, %105, %cst_36 [1] : vector<16x128xf32> to vector<16xf32>
    %107 = vector.shape_cast %106 : vector<16xf32> to vector<16x1xf32>
    %108 = vector.extract_strided_slice %9 {offsets = [0, 1664], sizes = [16, 128], strides = [1, 1]} : vector<16x4096xf32> to vector<16x128xf32>
    %109 = arith.mulf %108, %14 : vector<16x128xf32>
    %cst_37 = arith.constant dense<0.000000e+00> : vector<16xf32>
    %110 = vector.multi_reduction <add>, %109, %cst_37 [1] : vector<16x128xf32> to vector<16xf32>
    %111 = vector.shape_cast %110 : vector<16xf32> to vector<16x1xf32>
    %112 = arith.mulf %108, %16 : vector<16x128xf32>
    %cst_38 = arith.constant dense<0.000000e+00> : vector<16xf32>
    %113 = vector.multi_reduction <add>, %112, %cst_38 [1] : vector<16x128xf32> to vector<16xf32>
    %114 = vector.shape_cast %113 : vector<16xf32> to vector<16x1xf32>
    %115 = vector.extract_strided_slice %9 {offsets = [0, 1792], sizes = [16, 128], strides = [1, 1]} : vector<16x4096xf32> to vector<16x128xf32>
    %116 = arith.mulf %115, %14 : vector<16x128xf32>
    %cst_39 = arith.constant dense<0.000000e+00> : vector<16xf32>
    %117 = vector.multi_reduction <add>, %116, %cst_39 [1] : vector<16x128xf32> to vector<16xf32>
    %118 = vector.shape_cast %117 : vector<16xf32> to vector<16x1xf32>
    %119 = arith.mulf %115, %16 : vector<16x128xf32>
    %cst_40 = arith.constant dense<0.000000e+00> : vector<16xf32>
    %120 = vector.multi_reduction <add>, %119, %cst_40 [1] : vector<16x128xf32> to vector<16xf32>
    %121 = vector.shape_cast %120 : vector<16xf32> to vector<16x1xf32>
    %122 = vector.extract_strided_slice %9 {offsets = [0, 1920], sizes = [16, 128], strides = [1, 1]} : vector<16x4096xf32> to vector<16x128xf32>
    %123 = arith.mulf %122, %14 : vector<16x128xf32>
    %cst_41 = arith.constant dense<0.000000e+00> : vector<16xf32>
    %124 = vector.multi_reduction <add>, %123, %cst_41 [1] : vector<16x128xf32> to vector<16xf32>
    %125 = vector.shape_cast %124 : vector<16xf32> to vector<16x1xf32>
    %126 = arith.mulf %122, %16 : vector<16x128xf32>
    %cst_42 = arith.constant dense<0.000000e+00> : vector<16xf32>
    %127 = vector.multi_reduction <add>, %126, %cst_42 [1] : vector<16x128xf32> to vector<16xf32>
    %128 = vector.shape_cast %127 : vector<16xf32> to vector<16x1xf32>
    %129 = vector.extract_strided_slice %9 {offsets = [0, 2048], sizes = [16, 128], strides = [1, 1]} : vector<16x4096xf32> to vector<16x128xf32>
    %130 = arith.mulf %129, %14 : vector<16x128xf32>
    %cst_43 = arith.constant dense<0.000000e+00> : vector<16xf32>
    %131 = vector.multi_reduction <add>, %130, %cst_43 [1] : vector<16x128xf32> to vector<16xf32>
    %132 = vector.shape_cast %131 : vector<16xf32> to vector<16x1xf32>
    %133 = arith.mulf %129, %16 : vector<16x128xf32>
    %cst_44 = arith.constant dense<0.000000e+00> : vector<16xf32>
    %134 = vector.multi_reduction <add>, %133, %cst_44 [1] : vector<16x128xf32> to vector<16xf32>
    %135 = vector.shape_cast %134 : vector<16xf32> to vector<16x1xf32>
    %136 = vector.extract_strided_slice %9 {offsets = [0, 2176], sizes = [16, 128], strides = [1, 1]} : vector<16x4096xf32> to vector<16x128xf32>
    %137 = arith.mulf %136, %14 : vector<16x128xf32>
    %cst_45 = arith.constant dense<0.000000e+00> : vector<16xf32>
    %138 = vector.multi_reduction <add>, %137, %cst_45 [1] : vector<16x128xf32> to vector<16xf32>
    %139 = vector.shape_cast %138 : vector<16xf32> to vector<16x1xf32>
    %140 = arith.mulf %136, %16 : vector<16x128xf32>
    %cst_46 = arith.constant dense<0.000000e+00> : vector<16xf32>
    %141 = vector.multi_reduction <add>, %140, %cst_46 [1] : vector<16x128xf32> to vector<16xf32>
    %142 = vector.shape_cast %141 : vector<16xf32> to vector<16x1xf32>
    %143 = vector.extract_strided_slice %9 {offsets = [0, 2304], sizes = [16, 128], strides = [1, 1]} : vector<16x4096xf32> to vector<16x128xf32>
    %144 = arith.mulf %143, %14 : vector<16x128xf32>
    %cst_47 = arith.constant dense<0.000000e+00> : vector<16xf32>
    %145 = vector.multi_reduction <add>, %144, %cst_47 [1] : vector<16x128xf32> to vector<16xf32>
    %146 = vector.shape_cast %145 : vector<16xf32> to vector<16x1xf32>
    %147 = arith.mulf %143, %16 : vector<16x128xf32>
    %cst_48 = arith.constant dense<0.000000e+00> : vector<16xf32>
    %148 = vector.multi_reduction <add>, %147, %cst_48 [1] : vector<16x128xf32> to vector<16xf32>
    %149 = vector.shape_cast %148 : vector<16xf32> to vector<16x1xf32>
    %150 = vector.extract_strided_slice %9 {offsets = [0, 2432], sizes = [16, 128], strides = [1, 1]} : vector<16x4096xf32> to vector<16x128xf32>
    %151 = arith.mulf %150, %14 : vector<16x128xf32>
    %cst_49 = arith.constant dense<0.000000e+00> : vector<16xf32>
    %152 = vector.multi_reduction <add>, %151, %cst_49 [1] : vector<16x128xf32> to vector<16xf32>
    %153 = vector.shape_cast %152 : vector<16xf32> to vector<16x1xf32>
    %154 = arith.mulf %150, %16 : vector<16x128xf32>
    %cst_50 = arith.constant dense<0.000000e+00> : vector<16xf32>
    %155 = vector.multi_reduction <add>, %154, %cst_50 [1] : vector<16x128xf32> to vector<16xf32>
    %156 = vector.shape_cast %155 : vector<16xf32> to vector<16x1xf32>
    %157 = vector.extract_strided_slice %9 {offsets = [0, 2560], sizes = [16, 128], strides = [1, 1]} : vector<16x4096xf32> to vector<16x128xf32>
    %158 = arith.mulf %157, %14 : vector<16x128xf32>
    %cst_51 = arith.constant dense<0.000000e+00> : vector<16xf32>
    %159 = vector.multi_reduction <add>, %158, %cst_51 [1] : vector<16x128xf32> to vector<16xf32>
    %160 = vector.shape_cast %159 : vector<16xf32> to vector<16x1xf32>
    %161 = arith.mulf %157, %16 : vector<16x128xf32>
    %cst_52 = arith.constant dense<0.000000e+00> : vector<16xf32>
    %162 = vector.multi_reduction <add>, %161, %cst_52 [1] : vector<16x128xf32> to vector<16xf32>
    %163 = vector.shape_cast %162 : vector<16xf32> to vector<16x1xf32>
    %164 = vector.extract_strided_slice %9 {offsets = [0, 2688], sizes = [16, 128], strides = [1, 1]} : vector<16x4096xf32> to vector<16x128xf32>
    %165 = arith.mulf %164, %14 : vector<16x128xf32>
    %cst_53 = arith.constant dense<0.000000e+00> : vector<16xf32>
    %166 = vector.multi_reduction <add>, %165, %cst_53 [1] : vector<16x128xf32> to vector<16xf32>
    %167 = vector.shape_cast %166 : vector<16xf32> to vector<16x1xf32>
    %168 = arith.mulf %164, %16 : vector<16x128xf32>
    %cst_54 = arith.constant dense<0.000000e+00> : vector<16xf32>
    %169 = vector.multi_reduction <add>, %168, %cst_54 [1] : vector<16x128xf32> to vector<16xf32>
    %170 = vector.shape_cast %169 : vector<16xf32> to vector<16x1xf32>
    %171 = vector.extract_strided_slice %9 {offsets = [0, 2816], sizes = [16, 128], strides = [1, 1]} : vector<16x4096xf32> to vector<16x128xf32>
    %172 = arith.mulf %171, %14 : vector<16x128xf32>
    %cst_55 = arith.constant dense<0.000000e+00> : vector<16xf32>
    %173 = vector.multi_reduction <add>, %172, %cst_55 [1] : vector<16x128xf32> to vector<16xf32>
    %174 = vector.shape_cast %173 : vector<16xf32> to vector<16x1xf32>
    %175 = arith.mulf %171, %16 : vector<16x128xf32>
    %cst_56 = arith.constant dense<0.000000e+00> : vector<16xf32>
    %176 = vector.multi_reduction <add>, %175, %cst_56 [1] : vector<16x128xf32> to vector<16xf32>
    %177 = vector.shape_cast %176 : vector<16xf32> to vector<16x1xf32>
    %178 = vector.extract_strided_slice %9 {offsets = [0, 2944], sizes = [16, 128], strides = [1, 1]} : vector<16x4096xf32> to vector<16x128xf32>
    %179 = arith.mulf %178, %14 : vector<16x128xf32>
    %cst_57 = arith.constant dense<0.000000e+00> : vector<16xf32>
    %180 = vector.multi_reduction <add>, %179, %cst_57 [1] : vector<16x128xf32> to vector<16xf32>
    %181 = vector.shape_cast %180 : vector<16xf32> to vector<16x1xf32>
    %182 = arith.mulf %178, %16 : vector<16x128xf32>
    %cst_58 = arith.constant dense<0.000000e+00> : vector<16xf32>
    %183 = vector.multi_reduction <add>, %182, %cst_58 [1] : vector<16x128xf32> to vector<16xf32>
    %184 = vector.shape_cast %183 : vector<16xf32> to vector<16x1xf32>
    %185 = vector.extract_strided_slice %9 {offsets = [0, 3072], sizes = [16, 128], strides = [1, 1]} : vector<16x4096xf32> to vector<16x128xf32>
    %186 = arith.mulf %185, %14 : vector<16x128xf32>
    %cst_59 = arith.constant dense<0.000000e+00> : vector<16xf32>
    %187 = vector.multi_reduction <add>, %186, %cst_59 [1] : vector<16x128xf32> to vector<16xf32>
    %188 = vector.shape_cast %187 : vector<16xf32> to vector<16x1xf32>
    %189 = arith.mulf %185, %16 : vector<16x128xf32>
    %cst_60 = arith.constant dense<0.000000e+00> : vector<16xf32>
    %190 = vector.multi_reduction <add>, %189, %cst_60 [1] : vector<16x128xf32> to vector<16xf32>
    %191 = vector.shape_cast %190 : vector<16xf32> to vector<16x1xf32>
    %192 = vector.extract_strided_slice %9 {offsets = [0, 3200], sizes = [16, 128], strides = [1, 1]} : vector<16x4096xf32> to vector<16x128xf32>
    %193 = arith.mulf %192, %14 : vector<16x128xf32>
    %cst_61 = arith.constant dense<0.000000e+00> : vector<16xf32>
    %194 = vector.multi_reduction <add>, %193, %cst_61 [1] : vector<16x128xf32> to vector<16xf32>
    %195 = vector.shape_cast %194 : vector<16xf32> to vector<16x1xf32>
    %196 = arith.mulf %192, %16 : vector<16x128xf32>
    %cst_62 = arith.constant dense<0.000000e+00> : vector<16xf32>
    %197 = vector.multi_reduction <add>, %196, %cst_62 [1] : vector<16x128xf32> to vector<16xf32>
    %198 = vector.shape_cast %197 : vector<16xf32> to vector<16x1xf32>
    %199 = vector.extract_strided_slice %9 {offsets = [0, 3328], sizes = [16, 128], strides = [1, 1]} : vector<16x4096xf32> to vector<16x128xf32>
    %200 = arith.mulf %199, %14 : vector<16x128xf32>
    %cst_63 = arith.constant dense<0.000000e+00> : vector<16xf32>
    %201 = vector.multi_reduction <add>, %200, %cst_63 [1] : vector<16x128xf32> to vector<16xf32>
    %202 = vector.shape_cast %201 : vector<16xf32> to vector<16x1xf32>
    %203 = arith.mulf %199, %16 : vector<16x128xf32>
    %cst_64 = arith.constant dense<0.000000e+00> : vector<16xf32>
    %204 = vector.multi_reduction <add>, %203, %cst_64 [1] : vector<16x128xf32> to vector<16xf32>
    %205 = vector.shape_cast %204 : vector<16xf32> to vector<16x1xf32>
    %206 = vector.extract_strided_slice %9 {offsets = [0, 3456], sizes = [16, 128], strides = [1, 1]} : vector<16x4096xf32> to vector<16x128xf32>
    %207 = arith.mulf %206, %14 : vector<16x128xf32>
    %cst_65 = arith.constant dense<0.000000e+00> : vector<16xf32>
    %208 = vector.multi_reduction <add>, %207, %cst_65 [1] : vector<16x128xf32> to vector<16xf32>
    %209 = vector.shape_cast %208 : vector<16xf32> to vector<16x1xf32>
    %210 = arith.mulf %206, %16 : vector<16x128xf32>
    %cst_66 = arith.constant dense<0.000000e+00> : vector<16xf32>
    %211 = vector.multi_reduction <add>, %210, %cst_66 [1] : vector<16x128xf32> to vector<16xf32>
    %212 = vector.shape_cast %211 : vector<16xf32> to vector<16x1xf32>
    %213 = vector.extract_strided_slice %9 {offsets = [0, 3584], sizes = [16, 128], strides = [1, 1]} : vector<16x4096xf32> to vector<16x128xf32>
    %214 = arith.mulf %213, %14 : vector<16x128xf32>
    %cst_67 = arith.constant dense<0.000000e+00> : vector<16xf32>
    %215 = vector.multi_reduction <add>, %214, %cst_67 [1] : vector<16x128xf32> to vector<16xf32>
    %216 = vector.shape_cast %215 : vector<16xf32> to vector<16x1xf32>
    %217 = arith.mulf %213, %16 : vector<16x128xf32>
    %cst_68 = arith.constant dense<0.000000e+00> : vector<16xf32>
    %218 = vector.multi_reduction <add>, %217, %cst_68 [1] : vector<16x128xf32> to vector<16xf32>
    %219 = vector.shape_cast %218 : vector<16xf32> to vector<16x1xf32>
    %220 = vector.extract_strided_slice %9 {offsets = [0, 3712], sizes = [16, 128], strides = [1, 1]} : vector<16x4096xf32> to vector<16x128xf32>
    %221 = arith.mulf %220, %14 : vector<16x128xf32>
    %cst_69 = arith.constant dense<0.000000e+00> : vector<16xf32>
    %222 = vector.multi_reduction <add>, %221, %cst_69 [1] : vector<16x128xf32> to vector<16xf32>
    %223 = vector.shape_cast %222 : vector<16xf32> to vector<16x1xf32>
    %224 = arith.mulf %220, %16 : vector<16x128xf32>
    %cst_70 = arith.constant dense<0.000000e+00> : vector<16xf32>
    %225 = vector.multi_reduction <add>, %224, %cst_70 [1] : vector<16x128xf32> to vector<16xf32>
    %226 = vector.shape_cast %225 : vector<16xf32> to vector<16x1xf32>
    %227 = vector.extract_strided_slice %9 {offsets = [0, 3840], sizes = [16, 128], strides = [1, 1]} : vector<16x4096xf32> to vector<16x128xf32>
    %228 = arith.mulf %227, %14 : vector<16x128xf32>
    %cst_71 = arith.constant dense<0.000000e+00> : vector<16xf32>
    %229 = vector.multi_reduction <add>, %228, %cst_71 [1] : vector<16x128xf32> to vector<16xf32>
    %230 = vector.shape_cast %229 : vector<16xf32> to vector<16x1xf32>
    %231 = arith.mulf %227, %16 : vector<16x128xf32>
    %cst_72 = arith.constant dense<0.000000e+00> : vector<16xf32>
    %232 = vector.multi_reduction <add>, %231, %cst_72 [1] : vector<16x128xf32> to vector<16xf32>
    %233 = vector.shape_cast %232 : vector<16xf32> to vector<16x1xf32>
    %234 = vector.extract_strided_slice %9 {offsets = [0, 3968], sizes = [16, 128], strides = [1, 1]} : vector<16x4096xf32> to vector<16x128xf32>
    %235 = arith.mulf %234, %14 : vector<16x128xf32>
    %cst_73 = arith.constant dense<0.000000e+00> : vector<16xf32>
    %236 = vector.multi_reduction <add>, %235, %cst_73 [1] : vector<16x128xf32> to vector<16xf32>
    %237 = vector.shape_cast %236 : vector<16xf32> to vector<16x1xf32>
    %238 = arith.mulf %234, %16 : vector<16x128xf32>
    %cst_74 = arith.constant dense<0.000000e+00> : vector<16xf32>
    %239 = vector.multi_reduction <add>, %238, %cst_74 [1] : vector<16x128xf32> to vector<16xf32>
    %240 = vector.shape_cast %239 : vector<16xf32> to vector<16x1xf32>
    %241 = tpu.concatenate %20, %27, %34, %41, %48, %55, %62, %69, %76, %83, %90, %97, %104, %111, %118, %125 in 1 : vector<16x1xf32>, vector<16x1xf32>, vector<16x1xf32>, vector<16x1xf32>, vector<16x1xf32>, vector<16x1xf32>, vector<16x1xf32>, vector<16x1xf32>, vector<16x1xf32>, vector<16x1xf32>, vector<16x1xf32>, vector<16x1xf32>, vector<16x1xf32>, vector<16x1xf32>, vector<16x1xf32>, vector<16x1xf32> -> vector<16x16xf32>
    %242 = tpu.concatenate %132, %139, %146, %153, %160, %167, %174, %181, %188, %195, %202, %209, %216, %223, %230, %237 in 1 : vector<16x1xf32>, vector<16x1xf32>, vector<16x1xf32>, vector<16x1xf32>, vector<16x1xf32>, vector<16x1xf32>, vector<16x1xf32>, vector<16x1xf32>, vector<16x1xf32>, vector<16x1xf32>, vector<16x1xf32>, vector<16x1xf32>, vector<16x1xf32>, vector<16x1xf32>, vector<16x1xf32>, vector<16x1xf32> -> vector<16x16xf32>
    %243 = tpu.concatenate %241, %242 in 1 : vector<16x16xf32>, vector<16x16xf32> -> vector<16x32xf32>
    %cst_75 = arith.constant 1.562500e-02 : f32
    %244 = vector.broadcast %cst_75 : f32 to vector<16x32xf32>
    %245 = arith.mulf %243, %244 : vector<16x32xf32>
    %246 = tpu.concatenate %23, %30, %37, %44, %51, %58, %65, %72, %79, %86, %93, %100, %107, %114, %121, %128 in 1 : vector<16x1xf32>, vector<16x1xf32>, vector<16x1xf32>, vector<16x1xf32>, vector<16x1xf32>, vector<16x1xf32>, vector<16x1xf32>, vector<16x1xf32>, vector<16x1xf32>, vector<16x1xf32>, vector<16x1xf32>, vector<16x1xf32>, vector<16x1xf32>, vector<16x1xf32>, vector<16x1xf32>, vector<16x1xf32> -> vector<16x16xf32>
    %247 = tpu.concatenate %135, %142, %149, %156, %163, %170, %177, %184, %191, %198, %205, %212, %219, %226, %233, %240 in 1 : vector<16x1xf32>, vector<16x1xf32>, vector<16x1xf32>, vector<16x1xf32>, vector<16x1xf32>, vector<16x1xf32>, vector<16x1xf32>, vector<16x1xf32>, vector<16x1xf32>, vector<16x1xf32>, vector<16x1xf32>, vector<16x1xf32>, vector<16x1xf32>, vector<16x1xf32>, vector<16x1xf32>, vector<16x1xf32> -> vector<16x16xf32>
    %248 = tpu.concatenate %246, %247 in 1 : vector<16x16xf32>, vector<16x16xf32> -> vector<16x32xf32>
    %cst_76 = arith.constant 1.562500e-02 : f32
    %249 = vector.broadcast %cst_76 : f32 to vector<16x32xf32>
    %250 = arith.mulf %248, %249 : vector<16x32xf32>
    %cst_77 = arith.constant 0.000000e+00 : f32
    %251 = vector.broadcast %cst_77 : f32 to vector<1x32xf32>
    %252 = vector.extract_strided_slice %250 {offsets = [0, 0], sizes = [15, 32], strides = [1, 1]} : vector<16x32xf32> to vector<15x32xf32>
    %253 = tpu.concatenate %251, %252 in 0 : vector<1x32xf32>, vector<15x32xf32> -> vector<16x32xf32>
    %254 = arith.addf %253, %245 : vector<16x32xf32>
    %cst_78 = arith.constant 5.000000e-01 : f32
    %255 = vector.broadcast %cst_78 : f32 to vector<16x32xf32>
    %256 = arith.mulf %255, %254 : vector<16x32xf32>
    %257 = arith.addf %245, %250 : vector<16x32xf32>
    %cst_79 = arith.constant 5.000000e-01 : f32
    %258 = vector.broadcast %cst_79 : f32 to vector<16x32xf32>
    %259 = arith.mulf %258, %257 : vector<16x32xf32>
    %cst_80 = arith.constant 0.000000e+00 : f32
    %260 = vector.broadcast %cst_80 : f32 to vector<3x32xf32>
    %261 = vector.extract_strided_slice %256 {offsets = [0, 0], sizes = [1, 32], strides = [1, 1]} : vector<16x32xf32> to vector<1x32xf32>
    %262 = vector.extract_strided_slice %259 {offsets = [0, 0], sizes = [1, 32], strides = [1, 1]} : vector<16x32xf32> to vector<1x32xf32>
    %263 = vector.extract_strided_slice %256 {offsets = [1, 0], sizes = [1, 32], strides = [1, 1]} : vector<16x32xf32> to vector<1x32xf32>
    %264 = vector.extract_strided_slice %259 {offsets = [1, 0], sizes = [1, 32], strides = [1, 1]} : vector<16x32xf32> to vector<1x32xf32>
    %265 = vector.extract_strided_slice %256 {offsets = [2, 0], sizes = [1, 32], strides = [1, 1]} : vector<16x32xf32> to vector<1x32xf32>
    %266 = vector.extract_strided_slice %259 {offsets = [2, 0], sizes = [1, 32], strides = [1, 1]} : vector<16x32xf32> to vector<1x32xf32>
    %267 = vector.extract_strided_slice %256 {offsets = [3, 0], sizes = [1, 32], strides = [1, 1]} : vector<16x32xf32> to vector<1x32xf32>
    %268 = vector.extract_strided_slice %259 {offsets = [3, 0], sizes = [1, 32], strides = [1, 1]} : vector<16x32xf32> to vector<1x32xf32>
    %269 = vector.extract_strided_slice %256 {offsets = [4, 0], sizes = [1, 32], strides = [1, 1]} : vector<16x32xf32> to vector<1x32xf32>
    %270 = vector.extract_strided_slice %259 {offsets = [4, 0], sizes = [1, 32], strides = [1, 1]} : vector<16x32xf32> to vector<1x32xf32>
    %271 = vector.extract_strided_slice %256 {offsets = [5, 0], sizes = [1, 32], strides = [1, 1]} : vector<16x32xf32> to vector<1x32xf32>
    %272 = vector.extract_strided_slice %259 {offsets = [5, 0], sizes = [1, 32], strides = [1, 1]} : vector<16x32xf32> to vector<1x32xf32>
    %273 = vector.extract_strided_slice %256 {offsets = [6, 0], sizes = [1, 32], strides = [1, 1]} : vector<16x32xf32> to vector<1x32xf32>
    %274 = vector.extract_strided_slice %259 {offsets = [6, 0], sizes = [1, 32], strides = [1, 1]} : vector<16x32xf32> to vector<1x32xf32>
    %275 = vector.extract_strided_slice %256 {offsets = [7, 0], sizes = [1, 32], strides = [1, 1]} : vector<16x32xf32> to vector<1x32xf32>
    %276 = vector.extract_strided_slice %259 {offsets = [7, 0], sizes = [1, 32], strides = [1, 1]} : vector<16x32xf32> to vector<1x32xf32>
    %277 = vector.extract_strided_slice %256 {offsets = [8, 0], sizes = [1, 32], strides = [1, 1]} : vector<16x32xf32> to vector<1x32xf32>
    %278 = vector.extract_strided_slice %259 {offsets = [8, 0], sizes = [1, 32], strides = [1, 1]} : vector<16x32xf32> to vector<1x32xf32>
    %279 = vector.extract_strided_slice %256 {offsets = [9, 0], sizes = [1, 32], strides = [1, 1]} : vector<16x32xf32> to vector<1x32xf32>
    %280 = vector.extract_strided_slice %259 {offsets = [9, 0], sizes = [1, 32], strides = [1, 1]} : vector<16x32xf32> to vector<1x32xf32>
    %281 = vector.extract_strided_slice %256 {offsets = [10, 0], sizes = [1, 32], strides = [1, 1]} : vector<16x32xf32> to vector<1x32xf32>
    %282 = vector.extract_strided_slice %259 {offsets = [10, 0], sizes = [1, 32], strides = [1, 1]} : vector<16x32xf32> to vector<1x32xf32>
    %283 = vector.extract_strided_slice %256 {offsets = [11, 0], sizes = [1, 32], strides = [1, 1]} : vector<16x32xf32> to vector<1x32xf32>
    %284 = vector.extract_strided_slice %259 {offsets = [11, 0], sizes = [1, 32], strides = [1, 1]} : vector<16x32xf32> to vector<1x32xf32>
    %285 = vector.extract_strided_slice %256 {offsets = [12, 0], sizes = [1, 32], strides = [1, 1]} : vector<16x32xf32> to vector<1x32xf32>
    %286 = vector.extract_strided_slice %259 {offsets = [12, 0], sizes = [1, 32], strides = [1, 1]} : vector<16x32xf32> to vector<1x32xf32>
    %287 = vector.extract_strided_slice %256 {offsets = [13, 0], sizes = [1, 32], strides = [1, 1]} : vector<16x32xf32> to vector<1x32xf32>
    %288 = vector.extract_strided_slice %259 {offsets = [13, 0], sizes = [1, 32], strides = [1, 1]} : vector<16x32xf32> to vector<1x32xf32>
    %289 = vector.extract_strided_slice %256 {offsets = [14, 0], sizes = [1, 32], strides = [1, 1]} : vector<16x32xf32> to vector<1x32xf32>
    %290 = vector.extract_strided_slice %259 {offsets = [14, 0], sizes = [1, 32], strides = [1, 1]} : vector<16x32xf32> to vector<1x32xf32>
    %291 = vector.extract_strided_slice %256 {offsets = [15, 0], sizes = [1, 32], strides = [1, 1]} : vector<16x32xf32> to vector<1x32xf32>
    %292 = vector.extract_strided_slice %259 {offsets = [15, 0], sizes = [1, 32], strides = [1, 1]} : vector<16x32xf32> to vector<1x32xf32>
    %293 = tpu.concatenate %260, %261, %262, %263, %264, %265, %266, %267, %268, %269, %270, %271, %272, %273, %274, %275 in 0 : vector<3x32xf32>, vector<1x32xf32>, vector<1x32xf32>, vector<1x32xf32>, vector<1x32xf32>, vector<1x32xf32>, vector<1x32xf32>, vector<1x32xf32>, vector<1x32xf32>, vector<1x32xf32>, vector<1x32xf32>, vector<1x32xf32>, vector<1x32xf32>, vector<1x32xf32>, vector<1x32xf32>, vector<1x32xf32> -> vector<18x32xf32>
    %294 = tpu.concatenate %276, %277, %278, %279, %280, %281, %282, %283, %284, %285, %286, %287, %288, %289, %290, %291 in 0 : vector<1x32xf32>, vector<1x32xf32>, vector<1x32xf32>, vector<1x32xf32>, vector<1x32xf32>, vector<1x32xf32>, vector<1x32xf32>, vector<1x32xf32>, vector<1x32xf32>, vector<1x32xf32>, vector<1x32xf32>, vector<1x32xf32>, vector<1x32xf32>, vector<1x32xf32>, vector<1x32xf32>, vector<1x32xf32> -> vector<16x32xf32>
    %295 = tpu.concatenate %292, %260 in 0 : vector<1x32xf32>, vector<3x32xf32> -> vector<4x32xf32>
    %296 = tpu.concatenate %293, %294, %295 in 0 : vector<18x32xf32>, vector<16x32xf32>, vector<4x32xf32> -> vector<38x32xf32>
    %cst_81 = arith.constant 0.000000e+00 : f32
    %297 = vector.broadcast %cst_81 : f32 to vector<32x32xf32>
    %c0_82 = arith.constant 0 : index
    %c0_83 = arith.constant 0 : index
    %c0_84 = arith.constant 0 : index
    %298 = vector.load %arg5[%c0_82, %c0_83, %c0_84] : memref<7x32x32xf32, #tpu.memory_space<vmem>>, vector<1x32x32xf32>
    %299 = vector.shape_cast %298 : vector<1x32x32xf32> to vector<32x32xf32>
    %300 = vector.extract_strided_slice %296 {offsets = [0, 0], sizes = [32, 32], strides = [1, 1]} : vector<38x32xf32> to vector<32x32xf32>
    %cst_85 = arith.constant dense<0.000000e+00> : vector<32x32xf32>
    %301 = tpu.matmul %299, %300, %cst_85 {dimension_numbers = #tpu.dot_dimension_numbers<[1], [1], [0], [0], [0, 0, 1, 0], [], []>} : vector<32x32xf32>, vector<32x32xf32>, vector<32x32xf32> -> vector<32x32xf32>
    %302 = arith.addf %297, %301 : vector<32x32xf32>
    %c1 = arith.constant 1 : index
    %c0_86 = arith.constant 0 : index
    %c0_87 = arith.constant 0 : index
    %303 = vector.load %arg5[%c1, %c0_86, %c0_87] : memref<7x32x32xf32, #tpu.memory_space<vmem>>, vector<1x32x32xf32>
    %304 = vector.shape_cast %303 : vector<1x32x32xf32> to vector<32x32xf32>
    %305 = vector.extract_strided_slice %296 {offsets = [1, 0], sizes = [32, 32], strides = [1, 1]} : vector<38x32xf32> to vector<32x32xf32>
    %cst_88 = arith.constant dense<0.000000e+00> : vector<32x32xf32>
    %306 = tpu.matmul %304, %305, %cst_88 {dimension_numbers = #tpu.dot_dimension_numbers<[1], [1], [0], [0], [0, 0, 1, 0], [], []>} : vector<32x32xf32>, vector<32x32xf32>, vector<32x32xf32> -> vector<32x32xf32>
    %307 = arith.addf %302, %306 : vector<32x32xf32>
    %c2 = arith.constant 2 : index
    %c0_89 = arith.constant 0 : index
    %c0_90 = arith.constant 0 : index
    %308 = vector.load %arg5[%c2, %c0_89, %c0_90] : memref<7x32x32xf32, #tpu.memory_space<vmem>>, vector<1x32x32xf32>
    %309 = vector.shape_cast %308 : vector<1x32x32xf32> to vector<32x32xf32>
    %310 = vector.extract_strided_slice %296 {offsets = [2, 0], sizes = [32, 32], strides = [1, 1]} : vector<38x32xf32> to vector<32x32xf32>
    %cst_91 = arith.constant dense<0.000000e+00> : vector<32x32xf32>
    %311 = tpu.matmul %309, %310, %cst_91 {dimension_numbers = #tpu.dot_dimension_numbers<[1], [1], [0], [0], [0, 0, 1, 0], [], []>} : vector<32x32xf32>, vector<32x32xf32>, vector<32x32xf32> -> vector<32x32xf32>
    %312 = arith.addf %307, %311 : vector<32x32xf32>
    %c3 = arith.constant 3 : index
    %c0_92 = arith.constant 0 : index
    %c0_93 = arith.constant 0 : index
    %313 = vector.load %arg5[%c3, %c0_92, %c0_93] : memref<7x32x32xf32, #tpu.memory_space<vmem>>, vector<1x32x32xf32>
    %314 = vector.shape_cast %313 : vector<1x32x32xf32> to vector<32x32xf32>
    %315 = vector.extract_strided_slice %296 {offsets = [3, 0], sizes = [32, 32], strides = [1, 1]} : vector<38x32xf32> to vector<32x32xf32>
    %cst_94 = arith.constant dense<0.000000e+00> : vector<32x32xf32>
    %316 = tpu.matmul %314, %315, %cst_94 {dimension_numbers = #tpu.dot_dimension_numbers<[1], [1], [0], [0], [0, 0, 1, 0], [], []>} : vector<32x32xf32>, vector<32x32xf32>, vector<32x32xf32> -> vector<32x32xf32>
    %317 = arith.addf %312, %316 : vector<32x32xf32>
    %c4 = arith.constant 4 : index
    %c0_95 = arith.constant 0 : index
    %c0_96 = arith.constant 0 : index
    %318 = vector.load %arg5[%c4, %c0_95, %c0_96] : memref<7x32x32xf32, #tpu.memory_space<vmem>>, vector<1x32x32xf32>
    %319 = vector.shape_cast %318 : vector<1x32x32xf32> to vector<32x32xf32>
    %320 = vector.extract_strided_slice %296 {offsets = [4, 0], sizes = [32, 32], strides = [1, 1]} : vector<38x32xf32> to vector<32x32xf32>
    %cst_97 = arith.constant dense<0.000000e+00> : vector<32x32xf32>
    %321 = tpu.matmul %319, %320, %cst_97 {dimension_numbers = #tpu.dot_dimension_numbers<[1], [1], [0], [0], [0, 0, 1, 0], [], []>} : vector<32x32xf32>, vector<32x32xf32>, vector<32x32xf32> -> vector<32x32xf32>
    %322 = arith.addf %317, %321 : vector<32x32xf32>
    %c5 = arith.constant 5 : index
    %c0_98 = arith.constant 0 : index
    %c0_99 = arith.constant 0 : index
    %323 = vector.load %arg5[%c5, %c0_98, %c0_99] : memref<7x32x32xf32, #tpu.memory_space<vmem>>, vector<1x32x32xf32>
    %324 = vector.shape_cast %323 : vector<1x32x32xf32> to vector<32x32xf32>
    %325 = vector.extract_strided_slice %296 {offsets = [5, 0], sizes = [32, 32], strides = [1, 1]} : vector<38x32xf32> to vector<32x32xf32>
    %cst_100 = arith.constant dense<0.000000e+00> : vector<32x32xf32>
    %326 = tpu.matmul %324, %325, %cst_100 {dimension_numbers = #tpu.dot_dimension_numbers<[1], [1], [0], [0], [0, 0, 1, 0], [], []>} : vector<32x32xf32>, vector<32x32xf32>, vector<32x32xf32> -> vector<32x32xf32>
    %327 = arith.addf %322, %326 : vector<32x32xf32>
    %c6 = arith.constant 6 : index
    %c0_101 = arith.constant 0 : index
    %c0_102 = arith.constant 0 : index
    %328 = vector.load %arg5[%c6, %c0_101, %c0_102] : memref<7x32x32xf32, #tpu.memory_space<vmem>>, vector<1x32x32xf32>
    %329 = vector.shape_cast %328 : vector<1x32x32xf32> to vector<32x32xf32>
    %330 = vector.extract_strided_slice %296 {offsets = [6, 0], sizes = [32, 32], strides = [1, 1]} : vector<38x32xf32> to vector<32x32xf32>
    %cst_103 = arith.constant dense<0.000000e+00> : vector<32x32xf32>
    %331 = tpu.matmul %329, %330, %cst_103 {dimension_numbers = #tpu.dot_dimension_numbers<[1], [1], [0], [0], [0, 0, 1, 0], [], []>} : vector<32x32xf32>, vector<32x32xf32>, vector<32x32xf32> -> vector<32x32xf32>
    %332 = arith.addf %327, %331 : vector<32x32xf32>
    %c0_104 = arith.constant 0 : index
    %c0_105 = arith.constant 0 : index
    %333 = vector.load %arg6[%c0_104, %c0_105] : memref<32x1xf32, #tpu.memory_space<vmem>>, vector<32x1xf32>
    %334 = vector.broadcast %333 : vector<32x1xf32> to vector<32x32xf32>
    %335 = arith.addf %332, %334 : vector<32x32xf32>
    %c0_106 = arith.constant 0 : index
    %c0_107 = arith.constant 0 : index
    %c0_108 = arith.constant 0 : index
    %336 = vector.load %arg7[%c0_106, %c0_107, %c0_108] : memref<1x32x32xf32, #tpu.memory_space<vmem>>, vector<1x32x32xf32>
    %337 = vector.shape_cast %336 : vector<1x32x32xf32> to vector<32x32xf32>
    %338 = vector.shape_cast %335 : vector<32x32xf32> to vector<1x32x32xf32>
    tpu.vector_store %arg7[%c0_106, %c0_107, %c0_108], %338 {strides = array<i32>} : memref<1x32x32xf32, #tpu.memory_space<vmem>>, vector<1x32x32xf32>,
    return
  }
  func.func @transform_0(%arg0: i32) -> (i32, i32, i32) {
    %c0_i32 = arith.constant 0 : i32
    %c0_i32_0 = arith.constant 0 : i32
    %c0_i32_1 = arith.constant 0 : i32
    return %arg0, %c0_i32, %c0_i32_0 : i32, i32, i32
  }
  func.func @transform_1(%arg0: i32) -> (i32, i32, i32) {
    %c0_i32 = arith.constant 0 : i32
    %c0_i32_0 = arith.constant 0 : i32
    %c0_i32_1 = arith.constant 0 : i32
    return %arg0, %c0_i32, %c0_i32_0 : i32, i32, i32
  }
  func.func @transform_2(%arg0: i32) -> (i32, i32) {
    %c0_i32 = arith.constant 0 : i32
    %c0_i32_0 = arith.constant 0 : i32
    %c0_i32_1 = arith.constant 0 : i32
    return %c0_i32, %c0_i32_0 : i32, i32
  }
  func.func @transform_3(%arg0: i32) -> (i32, i32) {
    %c0_i32 = arith.constant 0 : i32
    %c0_i32_0 = arith.constant 0 : i32
    %c0_i32_1 = arith.constant 0 : i32
    return %c0_i32, %c0_i32_0 : i32, i32
  }
  func.func @transform_4(%arg0: i32) -> (i32, i32, i32) {
    %c0_i32 = arith.constant 0 : i32
    %c0_i32_0 = arith.constant 0 : i32
    %c0_i32_1 = arith.constant 0 : i32
    %c0_i32_2 = arith.constant 0 : i32
    return %c0_i32, %c0_i32_0, %c0_i32_1 : i32, i32, i32
  }
  func.func @transform_5(%arg0: i32) -> (i32, i32) {
    %c0_i32 = arith.constant 0 : i32
    %c0_i32_0 = arith.constant 0 : i32
    %c0_i32_1 = arith.constant 0 : i32
    return %c0_i32, %c0_i32_0 : i32, i32
  }
  func.func @transform_6(%arg0: i32) -> (i32, i32, i32) {
    %c0_i32 = arith.constant 0 : i32
    %c0_i32_0 = arith.constant 0 : i32
    %c0_i32_1 = arith.constant 0 : i32
    return %arg0, %c0_i32, %c0_i32_0 : i32, i32, i32
  }
}

</mosaic_0001>

<llo_original>
// kernel: audio_analysis.1
$region0: #{audio_analysis.1}
  #allocation0 [shape = 'u32[]', space=smem, size = 0x4, offset = 0x4, fixed_abs, tag = 'smem constant byte address 0x4 - core index']
  #allocation1 [shape = 'u32[144,128]{1,0:T(1,128)}', space=vmem, size = 0x12000, scoped, tag = 'internal scratch']
  %s0 = inlined_call_operand.vmem [shape: bf16[2,16,128], index: 0, kind: input, shape index: {}]
  %s1 = inlined_call_operand.vmem [shape: bf16[2,16,128], index: 1, kind: input, shape index: {}]
  %s2 = inlined_call_operand.vmem [shape: bf16[128,4096], index: 2, kind: input, shape index: {}]
  %s3 = inlined_call_operand.vmem [shape: bf16[128,4096], index: 3, kind: input, shape index: {}]
  %s4 = inlined_call_operand.vmem [shape: f32[7,32,32], index: 4, kind: input, shape index: {}]
  %s5 = inlined_call_operand.vmem [shape: f32[32,1], index: 5, kind: input, shape index: {}]
  %s6 = inlined_call_operand.hbm [shape: f32[2,32,32], index: 6, kind: output, shape index: {}]
  %s7 = sld [smem:[#allocation0]]
  $region57: #{audio_analysis.1} parent=0
    _
  %s9 = ssub.s32 1, %s7
  %s10 = scalar_select 0, %s9, %s7
  $region1: #{audio_analysis.1} parent=0
    #allocation2 [shape = 'u8[32768]{0}', space=vmem, size = 0x8000, scoped, tag = 'output window, operand 0']
    #allocation3 [shape = 's32[2]{0}', space=sflag, size = 0x8, scoped, tag = 'scoped memory for audio_analysis.1']
    %11 = vsyncpa [#allocation3], 0
    %s12 = scalar_lea.sflag [#allocation3], 1
    %13 = vsyncpa %s12, 0
    loop: start=0, step=1, limit=4
    $region2: #{audio_analysis.1} parent=1 // loop_pre_header
      _
    $region3: #{audio_analysis.1} parent=1 // loop_header
      %s15 = sphi 0, %s19
      %p16 = scmp.ge.s32.totalorder %s15, 4
      %s25 = sphi 0, %s27
      %s28 = sphi 0, %s25
      %s29 = sphi 0, %s28
      %s45 = sphi 0, %s29
      %s51 = sphi 0, %s53
      %s54 = sphi 0, %s51
      %s55 = sphi 0, %s54
      %s71 = sphi 0, %s55
      %s75 = sphi 0, %s75
      %s77 = sphi 0, %s75
      %s78 = sphi 0, %s77
      %s92 = sphi 0, %s78
      %s96 = sphi 0, %s96
      %s98 = sphi 0, %s96
      %s99 = sphi 0, %s98
      %s113 = sphi 0, %s99
      %s117 = sphi 0, %s117
      %s119 = sphi 0, %s117
      %s120 = sphi 0, %s119
      %s134 = sphi 0, %s120
      %s138 = sphi 0, %s138
      %s140 = sphi 0, %s138
      %s141 = sphi 0, %s140
      %s155 = sphi 0, %s141
      %s161 = sphi 0, %s163
      %s164 = sphi 0, %s161
      %s165 = sphi 0, %s164
      %s181 = sphi 0, %s165
    $region4: #{audio_analysis.1} parent=1 // loop_header_branch
      %18 = sbr.rel (%p16) target = $region8
    $region5: #{audio_analysis.1} parent=1 // loop_body
      %s20 = ssub.s32 %s15, 1
      %s21 = ssub.s32 %s15, 2
      %s22 = sadd.s32 %s15, 1
      %s23 = ssub.s32 %s15, %s22
      %p24 = scmp.eq.s32.totalorder %s23, 0
      %s26 = sadd.s32 %s25, 1
      %s27 = scalar_select %p24, %s25, %s26
      %p30 = pneg %p24
      %p31 = scmp.eq.s32.totalorder %s15, 1
      %p32 = por %p30, %p31
      %p33 = scmp.ne.s32.totalorder %s25, %s28
      %p34 = scmp.eq.s32.totalorder %s15, 0
      %p35 = por %p33, %p34
      %p36 = scmp.ne.s32.totalorder %s25, %s28
      %p37 = scmp.eq.s32.totalorder %s20, 1
      %p38 = por %p36, %p37
      %p39 = scmp.ne.s32.totalorder %s28, %s29
      %p40 = scmp.eq.s32.totalorder %s20, 0
      %p41 = por %p39, %p40
      %p42 = scmp.ne.s32.totalorder %s28, %s29
      %p43 = scmp.eq.s32.totalorder %s21, 1
      %p44 = por %p42, %p43
      %p46 = scmp.ne.s32.totalorder %s29, %s45
      %p47 = scmp.eq.s32.totalorder %s21, 0
      %p48 = por %p46, %p47
      %s49 = ssub.s32 %s15, %s22
      %p50 = scmp.eq.s32.totalorder %s49, 0
      %s52 = sadd.s32 %s51, 1
      %s53 = scalar_select %p50, %s51, %s52
      %p56 = pneg %p50
      %p57 = scmp.eq.s32.totalorder %s15, 1
      %p58 = por %p56, %p57
      %p59 = scmp.ne.s32.totalorder %s51, %s54
      %p60 = scmp.eq.s32.totalorder %s15, 0
      %p61 = por %p59, %p60
      %p62 = scmp.ne.s32.totalorder %s51, %s54
      %p63 = scmp.eq.s32.totalorder %s20, 1
      %p64 = por %p62, %p63
      %p65 = scmp.ne.s32.totalorder %s54, %s55
      %p66 = scmp.eq.s32.totalorder %s20, 0
      %p67 = por %p65, %p66
      %p68 = scmp.ne.s32.totalorder %s54, %s55
      %p69 = scmp.eq.s32.totalorder %s21, 1
      %p70 = por %p68, %p69
      %p72 = scmp.ne.s32.totalorder %s55, %s71
      %p73 = scmp.eq.s32.totalorder %s21, 0
      %p74 = por %p72, %p73
      %s76 = sadd.s32 %s75, 1
      %p79 = scmp.eq.s32.totalorder %s15, 1
      %p80 = scmp.ne.s32.totalorder %s75, %s77
      %p81 = scmp.eq.s32.totalorder %s15, 0
      %p82 = por %p80, %p81
      %p83 = scmp.ne.s32.totalorder %s75, %s77
      %p84 = scmp.eq.s32.totalorder %s20, 1
      %p85 = por %p83, %p84
      %p86 = scmp.ne.s32.totalorder %s77, %s78
      %p87 = scmp.eq.s32.totalorder %s20, 0
      %p88 = por %p86, %p87
      %p89 = scmp.ne.s32.totalorder %s77, %s78
      %p90 = scmp.eq.s32.totalorder %s21, 1
      %p91 = por %p89, %p90
      %p93 = scmp.ne.s32.totalorder %s78, %s92
      %p94 = scmp.eq.s32.totalorder %s21, 0
      %p95 = por %p93, %p94
      %s97 = sadd.s32 %s96, 1
      %p100 = scmp.eq.s32.totalorder %s15, 1
      %p101 = scmp.ne.s32.totalorder %s96, %s98
      %p102 = scmp.eq.s32.totalorder %s15, 0
      %p103 = por %p101, %p102
      %p104 = scmp.ne.s32.totalorder %s96, %s98
      %p105 = scmp.eq.s32.totalorder %s20, 1
      %p106 = por %p104, %p105
      %p107 = scmp.ne.s32.totalorder %s98, %s99
      %p108 = scmp.eq.s32.totalorder %s20, 0
      %p109 = por %p107, %p108
      %p110 = scmp.ne.s32.totalorder %s98, %s99
      %p111 = scmp.eq.s32.totalorder %s21, 1
      %p112 = por %p110, %p111
      %p114 = scmp.ne.s32.totalorder %s99, %s113
      %p115 = scmp.eq.s32.totalorder %s21, 0
      %p116 = por %p114, %p115
      %s118 = sadd.s32 %s117, 1
      %p121 = scmp.eq.s32.totalorder %s15, 1
      %p122 = scmp.ne.s32.totalorder %s117, %s119
      %p123 = scmp.eq.s32.totalorder %s15, 0
      %p124 = por %p122, %p123
      %p125 = scmp.ne.s32.totalorder %s117, %s119
      %p126 = scmp.eq.s32.totalorder %s20, 1
      %p127 = por %p125, %p126
      %p128 = scmp.ne.s32.totalorder %s119, %s120
      %p129 = scmp.eq.s32.totalorder %s20, 0
      %p130 = por %p128, %p129
      %p131 = scmp.ne.s32.totalorder %s119, %s120
      %p132 = scmp.eq.s32.totalorder %s21, 1
      %p133 = por %p131, %p132
      %p135 = scmp.ne.s32.totalorder %s120, %s134
      %p136 = scmp.eq.s32.totalorder %s21, 0
      %p137 = por %p135, %p136
      %s139 = sadd.s32 %s138, 1
      %p142 = scmp.eq.s32.totalorder %s15, 1
      %p143 = scmp.ne.s32.totalorder %s138, %s140
      %p144 = scmp.eq.s32.totalorder %s15, 0
      %p145 = por %p143, %p144
      %p146 = scmp.ne.s32.totalorder %s138, %s140
      %p147 = scmp.eq.s32.totalorder %s20, 1
      %p148 = por %p146, %p147
      %p149 = scmp.ne.s32.totalorder %s140, %s141
      %p150 = scmp.eq.s32.totalorder %s20, 0
      %p151 = por %p149, %p150
      %p152 = scmp.ne.s32.totalorder %s140, %s141
      %p153 = scmp.eq.s32.totalorder %s21, 1
      %p154 = por %p152, %p153
      %p156 = scmp.ne.s32.totalorder %s141, %s155
      %p157 = scmp.eq.s32.totalorder %s21, 0
      %p158 = por %p156, %p157
      %s159 = ssub.s32 %s15, %s22
      %p160 = scmp.eq.s32.totalorder %s159, 0
      %s162 = sadd.s32 %s161, 1
      %s163 = scalar_select %p160, %s161, %s162
      %p166 = pneg %p160
      %p167 = scmp.eq.s32.totalorder %s15, 1
      %p168 = por %p166, %p167
      %p169 = scmp.ne.s32.totalorder %s161, %s164
      %p170 = scmp.eq.s32.totalorder %s15, 0
      %p171 = por %p169, %p170
      %p172 = scmp.ne.s32.totalorder %s161, %s164
      %p173 = scmp.eq.s32.totalorder %s20, 1
      %p174 = por %p172, %p173
      %p175 = scmp.ne.s32.totalorder %s164, %s165
      %p176 = scmp.eq.s32.totalorder %s20, 0
      %p177 = por %p175, %p176
      %p178 = scmp.ne.s32.totalorder %s164, %s165
      %p179 = scmp.eq.s32.totalorder %s21, 1
      %p180 = por %p178, %p179
      %p182 = scmp.ne.s32.totalorder %s165, %s181
      %p183 = scmp.eq.s32.totalorder %s21, 0
      %p184 = por %p182, %p183
      %p185 = scmp.le.s32.totalorder 1, %s15
      %p186 = scmp.lt.s32.totalorder %s15, 3
      %p187 = pnand %p185, %p186
      %p188 = pneg %p187
      // Predicated region
      $region9: #{audio_analysis.1} parent=5 // pred_check
        _
      $region10: #{audio_analysis.1} parent=5 // pred_check_branch
        %190 = sbr.rel (%p187) target = $region12
      $region11: #{audio_analysis.1} parent=5 // pred_region
        %s191 = ssub.s32 %s15, 1
        // Predicated region
        $region13: #{audio_analysis.1} parent=11 // pred_check
          %p192 = pneg %p88
        $region14: #{audio_analysis.1} parent=11 // pred_check_branch
          %194 = sbr.rel (%p192) target = $region16
        $region15: #{audio_analysis.1} parent=11 // pred_region
          _
        $region16: #{audio_analysis.1} parent=11 // pred_fallthru
          _
        // Predicated region
        $region17: #{audio_analysis.1} parent=11 // pred_check
          %p195 = pneg %p109
        $region18: #{audio_analysis.1} parent=11 // pred_check_branch
          %197 = sbr.rel (%p195) target = $region20
        $region19: #{audio_analysis.1} parent=11 // pred_region
          _
        $region20: #{audio_analysis.1} parent=11 // pred_fallthru
          _
        // Predicated region
        $region21: #{audio_analysis.1} parent=11 // pred_check
          %p198 = pneg %p130
        $region22: #{audio_analysis.1} parent=11 // pred_check_branch
          %200 = sbr.rel (%p198) target = $region24
        $region23: #{audio_analysis.1} parent=11 // pred_region
          _
        $region24: #{audio_analysis.1} parent=11 // pred_fallthru
          _
        // Predicated region
        $region25: #{audio_analysis.1} parent=11 // pred_check
          %p201 = pneg %p151
        $region26: #{audio_analysis.1} parent=11 // pred_check_branch
          %203 = sbr.rel (%p201) target = $region28
        $region27: #{audio_analysis.1} parent=11 // pred_region
          _
        $region28: #{audio_analysis.1} parent=11 // pred_fallthru
          _
      $region12: #{audio_analysis.1} parent=5 // pred_fallthru
        _
      %p204 = scmp.lt.s32.totalorder %s15, 2
      // Predicated region
      $region29: #{audio_analysis.1} parent=5 // pred_check
        %p205 = pneg %p204
      $region30: #{audio_analysis.1} parent=5 // pred_check_branch
        %207 = sbr.rel (%p205) target = $region32
      $region31: #{audio_analysis.1} parent=5 // pred_region
        // Predicated region
        $region33: #{audio_analysis.1} parent=31 // pred_check
          %p208 = pneg %p35
        $region34: #{audio_analysis.1} parent=31 // pred_check_branch
          %210 = sbr.rel (%p208) target = $region36
        $region35: #{audio_analysis.1} parent=31 // pred_region
          %p211 = scmp.lt.s32.totalorder %s15, 1
          %s212 = scalar_select %p211, %s15, 1
          %s213 = smul.addr %s212, 2
          %s214 = smul.addr %s213, 4
          %s215 = scalar_lea.vmem %s0, %s214
        $region36: #{audio_analysis.1} parent=31 // pred_fallthru
          _
        // Predicated region
        $region37: #{audio_analysis.1} parent=31 // pred_check
          %p216 = pneg %p61
        $region38: #{audio_analysis.1} parent=31 // pred_check_branch
          %218 = sbr.rel (%p216) target = $region40
        $region39: #{audio_analysis.1} parent=31 // pred_region
          %p219 = scmp.lt.s32.totalorder %s15, 1
          %s220 = scalar_select %p219, %s15, 1
          %s221 = smul.addr %s220, 2
          %s222 = smul.addr %s221, 4
          %s223 = scalar_lea.vmem %s1, %s222
        $region40: #{audio_analysis.1} parent=31 // pred_fallthru
          _
      $region32: #{audio_analysis.1} parent=5 // pred_fallthru
        _
      %p224 = scmp.le.s32.totalorder 1, %s15
      %p225 = scmp.lt.s32.totalorder %s15, 3
      %p226 = pnand %p224, %p225
      %p227 = pneg %p226
      // Predicated region
      $region41: #{audio_analysis.1} parent=5 // pred_check
        _
      $region42: #{audio_analysis.1} parent=5 // pred_check_branch
        %229 = sbr.rel (%p226) target = $region44
      $region43: #{audio_analysis.1} parent=5 // pred_region
        %s230 = ssub.s32 %s15, 1
        %p231 = scmp.lt.s32.totalorder %s20, 1
        %s232 = scalar_select %p231, %s20, 1
        %s233 = smul.addr %s232, 2
        %s234 = smul.addr %s233, 4
        %s235 = scalar_lea.vmem %s0, %s234
        %p236 = pneg %p41
        %p237 = pneg %p38
        %p238 = scmp.lt.s32.totalorder %s20, 1
        %s239 = scalar_select %p238, %s20, 1
        %s240 = smul.addr %s239, 2
        %s241 = smul.addr %s240, 4
        %s242 = scalar_lea.vmem %s1, %s241
        %p243 = pneg %p67
        %p244 = pneg %p64
        %p245 = pneg %p88
        %p246 = pneg %p85
        %p247 = pneg %p109
        %p248 = pneg %p106
        %p249 = pneg %p130
        %p250 = pneg %p127
        %p251 = pneg %p151
        %p252 = pneg %p148
        %p253 = pneg %p177
        %p254 = pneg %p174
        %s255 = sand.u32 %s164, 1
        %s256 = scalar_lea.sflag [#allocation3], %s255
        %s257 = sand.u32 %s164, 1
        %s258 = smul.addr %s257, 32
        %s259 = scalar_lea.vmem [#allocation2], %s258
        %p260 = scmp.lt.s32.totalorder %s20, 1
        %s261 = scalar_select %p260, %s20, 1
        %s262 = smul.addr %s261, 2
        %s263 = smul.addr %s262, 4
        %s264 = scalar_lea.vmem %s0, %s263
        %p265 = scmp.lt.s32.totalorder %s20, 1
        %s266 = scalar_select %p265, %s20, 1
        %s267 = smul.addr %s266, 2
        %s268 = smul.addr %s267, 4
        %s269 = scalar_lea.vmem %s1, %s268
        %v271 = vld [vmem:[%s264] sm:$0xf]
        %v272 = vld [vmem:[%s264 + $0x4] sm:$0xf]
        %v273 = vld [vmem:[%s2] sm:$0xff]
        %v274 = vld [vmem:[%s2 + $0x8] sm:$0xff]
        %v275 = vld [vmem:[%s2 + $0x10] sm:$0xff]
        %v276 = vld [vmem:[%s2 + $0x18] sm:$0xff]
        %v277 = vld [vmem:[%s2 + $0x20] sm:$0xff]
        %v278 = vld [vmem:[%s2 + $0x28] sm:$0xff]
        %v279 = vld [vmem:[%s2 + $0x30] sm:$0xff]
        %v280 = vld [vmem:[%s2 + $0x38] sm:$0xff]
        %v281 = vld [vmem:[%s2 + $0x40] sm:$0xff]
        %v282 = vld [vmem:[%s2 + $0x48] sm:$0xff]
        %v283 = vld [vmem:[%s2 + $0x50] sm:$0xff]
        %v284 = vld [vmem:[%s2 + $0x58] sm:$0xff]
        %v285 = vld [vmem:[%s2 + $0x60] sm:$0xff]
        %v286 = vld [vmem:[%s2 + $0x68] sm:$0xff]
        %v287 = vld [vmem:[%s2 + $0x70] sm:$0xff]
        %v288 = vld [vmem:[%s2 + $0x78] sm:$0xff]
        %v289 = vld [vmem:[%s2 + $0x80] sm:$0xff]
        %v290 = vld [vmem:[%s2 + $0x88] sm:$0xff]
        %v291 = vld [vmem:[%s2 + $0x90] sm:$0xff]
        %v292 = vld [vmem:[%s2 + $0x98] sm:$0xff]
        %v293 = vld [vmem:[%s2 + $0xa0] sm:$0xff]
        %v294 = vld [vmem:[%s2 + $0xa8] sm:$0xff]
        %v295 = vld [vmem:[%s2 + $0xb0] sm:$0xff]
        %v296 = vld [vmem:[%s2 + $0xb8] sm:$0xff]
        %v297 = vld [vmem:[%s2 + $0xc0] sm:$0xff]
        %v298 = vld [vmem:[%s2 + $0xc8] sm:$0xff]
        %v299 = vld [vmem:[%s2 + $0xd0] sm:$0xff]
        %v300 = vld [vmem:[%s2 + $0xd8] sm:$0xff]
        %v301 = vld [vmem:[%s2 + $0xe0] sm:$0xff]
        %v302 = vld [vmem:[%s2 + $0xe8] sm:$0xff]
        %v303 = vld [vmem:[%s2 + $0xf0] sm:$0xff]
        %v304 = vld [vmem:[%s2 + $0xf8] sm:$0xff]
        %v305 = vld [vmem:[%s2 + $0x100] sm:$0xff]
        %v306 = vld [vmem:[%s2 + $0x108] sm:$0xff]
        %v307 = vld [vmem:[%s2 + $0x110] sm:$0xff]
        %v308 = vld [vmem:[%s2 + $0x118] sm:$0xff]
        %v309 = vld [vmem:[%s2 + $0x120] sm:$0xff]
        %v310 = vld [vmem:[%s2 + $0x128] sm:$0xff]
        %v311 = vld [vmem:[%s2 + $0x130] sm:$0xff]
        %v312 = vld [vmem:[%s2 + $0x138] sm:$0xff]
        %v313 = vld [vmem:[%s2 + $0x140] sm:$0xff]
        %v314 = vld [vmem:[%s2 + $0x148] sm:$0xff]
        %v315 = vld [vmem:[%s2 + $0x150] sm:$0xff]
        %v316 = vld [vmem:[%s2 + $0x158] sm:$0xff]
        %v317 = vld [vmem:[%s2 + $0x160] sm:$0xff]
        %v318 = vld [vmem:[%s2 + $0x168] sm:$0xff]
        %v319 = vld [vmem:[%s2 + $0x170] sm:$0xff]
        %v320 = vld [vmem:[%s2 + $0x178] sm:$0xff]
        %v321 = vld [vmem:[%s2 + $0x180] sm:$0xff]
        %v322 = vld [vmem:[%s2 + $0x188] sm:$0xff]
        %v323 = vld [vmem:[%s2 + $0x190] sm:$0xff]
        %v324 = vld [vmem:[%s2 + $0x198] sm:$0xff]
        %v325 = vld [vmem:[%s2 + $0x1a0] sm:$0xff]
        %v326 = vld [vmem:[%s2 + $0x1a8] sm:$0xff]
        %v327 = vld [vmem:[%s2 + $0x1b0] sm:$0xff]
        %v328 = vld [vmem:[%s2 + $0x1b8] sm:$0xff]
        %v329 = vld [vmem:[%s2 + $0x1c0] sm:$0xff]
        %v330 = vld [vmem:[%s2 + $0x1c8] sm:$0xff]
        %v331 = vld [vmem:[%s2 + $0x1d0] sm:$0xff]
        %v332 = vld [vmem:[%s2 + $0x1d8] sm:$0xff]
        %v333 = vld [vmem:[%s2 + $0x1e0] sm:$0xff]
        %v334 = vld [vmem:[%s2 + $0x1e8] sm:$0xff]
        %v335 = vld [vmem:[%s2 + $0x1f0] sm:$0xff]
        %v336 = vld [vmem:[%s2 + $0x1f8] sm:$0xff]
        %v337 = vld [vmem:[%s2 + $0x200] sm:$0xff]
        %v338 = vld [vmem:[%s2 + $0x208] sm:$0xff]
        %v339 = vld [vmem:[%s2 + $0x210] sm:$0xff]
        %v340 = vld [vmem:[%s2 + $0x218] sm:$0xff]
        %v341 = vld [vmem:[%s2 + $0x220] sm:$0xff]
        %v342 = vld [vmem:[%s2 + $0x228] sm:$0xff]
        %v343 = vld [vmem:[%s2 + $0x230] sm:$0xff]
        %v344 = vld [vmem:[%s2 + $0x238] sm:$0xff]
        %v345 = vld [vmem:[%s2 + $0x240] sm:$0xff]
        %v346 = vld [vmem:[%s2 + $0x248] sm:$0xff]
        %v347 = vld [vmem:[%s2 + $0x250] sm:$0xff]
        %v348 = vld [vmem:[%s2 + $0x258] sm:$0xff]
        %v349 = vld [vmem:[%s2 + $0x260] sm:$0xff]
        %v350 = vld [vmem:[%s2 + $0x268] sm:$0xff]
        %v351 = vld [vmem:[%s2 + $0x270] sm:$0xff]
        %v352 = vld [vmem:[%s2 + $0x278] sm:$0xff]
        %v353 = vld [vmem:[%s2 + $0x280] sm:$0xff]
        %v354 = vld [vmem:[%s2 + $0x288] sm:$0xff]
        %v355 = vld [vmem:[%s2 + $0x290] sm:$0xff]
        %v356 = vld [vmem:[%s2 + $0x298] sm:$0xff]
        %v357 = vld [vmem:[%s2 + $0x2a0] sm:$0xff]
        %v358 = vld [vmem:[%s2 + $0x2a8] sm:$0xff]
        %v359 = vld [vmem:[%s2 + $0x2b0] sm:$0xff]
        %v360 = vld [vmem:[%s2 + $0x2b8] sm:$0xff]
        %v361 = vld [vmem:[%s2 + $0x2c0] sm:$0xff]
        %v362 = vld [vmem:[%s2 + $0x2c8] sm:$0xff]
        %v363 = vld [vmem:[%s2 + $0x2d0] sm:$0xff]
        %v364 = vld [vmem:[%s2 + $0x2d8] sm:$0xff]
        %v365 = vld [vmem:[%s2 + $0x2e0] sm:$0xff]
        %v366 = vld [vmem:[%s2 + $0x2e8] sm:$0xff]
        %v367 = vld [vmem:[%s2 + $0x2f0] sm:$0xff]
        %v368 = vld [vmem:[%s2 + $0x2f8] sm:$0xff]
        %v369 = vld [vmem:[%s2 + $0x300] sm:$0xff]
        %v370 = vld [vmem:[%s2 + $0x308] sm:$0xff]
        %v371 = vld [vmem:[%s2 + $0x310] sm:$0xff]
        %v372 = vld [vmem:[%s2 + $0x318] sm:$0xff]
        %v373 = vld [vmem:[%s2 + $0x320] sm:$0xff]
        %v374 = vld [vmem:[%s2 + $0x328] sm:$0xff]
        %v375 = vld [vmem:[%s2 + $0x330] sm:$0xff]
        %v376 = vld [vmem:[%s2 + $0x338] sm:$0xff]
        %v377 = vld [vmem:[%s2 + $0x340] sm:$0xff]
        %v378 = vld [vmem:[%s2 + $0x348] sm:$0xff]
        %v379 = vld [vmem:[%s2 + $0x350] sm:$0xff]
        %v380 = vld [vmem:[%s2 + $0x358] sm:$0xff]
        %v381 = vld [vmem:[%s2 + $0x360] sm:$0xff]
        %v382 = vld [vmem:[%s2 + $0x368] sm:$0xff]
        %v383 = vld [vmem:[%s2 + $0x370] sm:$0xff]
        %v384 = vld [vmem:[%s2 + $0x378] sm:$0xff]
        %v385 = vld [vmem:[%s2 + $0x380] sm:$0xff]
        %v386 = vld [vmem:[%s2 + $0x388] sm:$0xff]
        %v387 = vld [vmem:[%s2 + $0x390] sm:$0xff]
        %v388 = vld [vmem:[%s2 + $0x398] sm:$0xff]
        %v389 = vld [vmem:[%s2 + $0x3a0] sm:$0xff]
        %v390 = vld [vmem:[%s2 + $0x3a8] sm:$0xff]
        %v391 = vld [vmem:[%s2 + $0x3b0] sm:$0xff]
        %v392 = vld [vmem:[%s2 + $0x3b8] sm:$0xff]
        %v393 = vld [vmem:[%s2 + $0x3c0] sm:$0xff]
        %v394 = vld [vmem:[%s2 + $0x3c8] sm:$0xff]
        %v395 = vld [vmem:[%s2 + $0x3d0] sm:$0xff]
        %v396 = vld [vmem:[%s2 + $0x3d8] sm:$0xff]
        %v397 = vld [vmem:[%s2 + $0x3e0] sm:$0xff]
        %v398 = vld [vmem:[%s2 + $0x3e8] sm:$0xff]
        %v399 = vld [vmem:[%s2 + $0x3f0] sm:$0xff]
        %v400 = vld [vmem:[%s2 + $0x3f8] sm:$0xff]
        %v401 = vld [vmem:[%s2 + $0x400] sm:$0xff]
        %v402 = vld [vmem:[%s2 + $0x408] sm:$0xff]
        %v403 = vld [vmem:[%s2 + $0x410] sm:$0xff]
        %v404 = vld [vmem:[%s2 + $0x418] sm:$0xff]
        %v405 = vld [vmem:[%s2 + $0x420] sm:$0xff]
        %v406 = vld [vmem:[%s2 + $0x428] sm:$0xff]
        %v407 = vld [vmem:[%s2 + $0x430] sm:$0xff]
        %v408 = vld [vmem:[%s2 + $0x438] sm:$0xff]
        %v409 = vld [vmem:[%s2 + $0x440] sm:$0xff]
        %v410 = vld [vmem:[%s2 + $0x448] sm:$0xff]
        %v411 = vld [vmem:[%s2 + $0x450] sm:$0xff]
        %v412 = vld [vmem:[%s2 + $0x458] sm:$0xff]
        %v413 = vld [vmem:[%s2 + $0x460] sm:$0xff]
        %v414 = vld [vmem:[%s2 + $0x468] sm:$0xff]
        %v415 = vld [vmem:[%s2 + $0x470] sm:$0xff]
        %v416 = vld [vmem:[%s2 + $0x478] sm:$0xff]
        %v417 = vld [vmem:[%s2 + $0x480] sm:$0xff]
        %v418 = vld [vmem:[%s2 + $0x488] sm:$0xff]
        %v419 = vld [vmem:[%s2 + $0x490] sm:$0xff]
        %v420 = vld [vmem:[%s2 + $0x498] sm:$0xff]
        %v421 = vld [vmem:[%s2 + $0x4a0] sm:$0xff]
        %v422 = vld [vmem:[%s2 + $0x4a8] sm:$0xff]
        %v423 = vld [vmem:[%s2 + $0x4b0] sm:$0xff]
        %v424 = vld [vmem:[%s2 + $0x4b8] sm:$0xff]
        %v425 = vld [vmem:[%s2 + $0x4c0] sm:$0xff]
        %v426 = vld [vmem:[%s2 + $0x4c8] sm:$0xff]
        %v427 = vld [vmem:[%s2 + $0x4d0] sm:$0xff]
        %v428 = vld [vmem:[%s2 + $0x4d8] sm:$0xff]
        %v429 = vld [vmem:[%s2 + $0x4e0] sm:$0xff]
        %v430 = vld [vmem:[%s2 + $0x4e8] sm:$0xff]
        %v431 = vld [vmem:[%s2 + $0x4f0] sm:$0xff]
        %v432 = vld [vmem:[%s2 + $0x4f8] sm:$0xff]
        %v433 = vld [vmem:[%s2 + $0x500] sm:$0xff]
        %v434 = vld [vmem:[%s2 + $0x508] sm:$0xff]
        %v435 = vld [vmem:[%s2 + $0x510] sm:$0xff]
        %v436 = vld [vmem:[%s2 + $0x518] sm:$0xff]
        %v437 = vld [vmem:[%s2 + $0x520] sm:$0xff]
        %v438 = vld [vmem:[%s2 + $0x528] sm:$0xff]
        %v439 = vld [vmem:[%s2 + $0x530] sm:$0xff]
        %v440 = vld [vmem:[%s2 + $0x538] sm:$0xff]
        %v441 = vld [vmem:[%s2 + $0x540] sm:$0xff]
        %v442 = vld [vmem:[%s2 + $0x548] sm:$0xff]
        %v443 = vld [vmem:[%s2 + $0x550] sm:$0xff]
        %v444 = vld [vmem:[%s2 + $0x558] sm:$0xff]
        %v445 = vld [vmem:[%s2 + $0x560] sm:$0xff]
        %v446 = vld [vmem:[%s2 + $0x568] sm:$0xff]
        %v447 = vld [vmem:[%s2 + $0x570] sm:$0xff]
        %v448 = vld [vmem:[%s2 + $0x578] sm:$0xff]
        %v449 = vld [vmem:[%s2 + $0x580] sm:$0xff]
        %v450 = vld [vmem:[%s2 + $0x588] sm:$0xff]
        %v451 = vld [vmem:[%s2 + $0x590] sm:$0xff]
        %v452 = vld [vmem:[%s2 + $0x598] sm:$0xff]
        %v453 = vld [vmem:[%s2 + $0x5a0] sm:$0xff]
        %v454 = vld [vmem:[%s2 + $0x5a8] sm:$0xff]
        %v455 = vld [vmem:[%s2 + $0x5b0] sm:$0xff]
        %v456 = vld [vmem:[%s2 + $0x5b8] sm:$0xff]
        %v457 = vld [vmem:[%s2 + $0x5c0] sm:$0xff]
        %v458 = vld [vmem:[%s2 + $0x5c8] sm:$0xff]
        %v459 = vld [vmem:[%s2 + $0x5d0] sm:$0xff]
        %v460 = vld [vmem:[%s2 + $0x5d8] sm:$0xff]
        %v461 = vld [vmem:[%s2 + $0x5e0] sm:$0xff]
        %v462 = vld [vmem:[%s2 + $0x5e8] sm:$0xff]
        %v463 = vld [vmem:[%s2 + $0x5f0] sm:$0xff]
        %v464 = vld [vmem:[%s2 + $0x5f8] sm:$0xff]
        %v465 = vld [vmem:[%s2 + $0x600] sm:$0xff]
        %v466 = vld [vmem:[%s2 + $0x608] sm:$0xff]
        %v467 = vld [vmem:[%s2 + $0x610] sm:$0xff]
        %v468 = vld [vmem:[%s2 + $0x618] sm:$0xff]
        %v469 = vld [vmem:[%s2 + $0x620] sm:$0xff]
        %v470 = vld [vmem:[%s2 + $0x628] sm:$0xff]
        %v471 = vld [vmem:[%s2 + $0x630] sm:$0xff]
        %v472 = vld [vmem:[%s2 + $0x638] sm:$0xff]
        %v473 = vld [vmem:[%s2 + $0x640] sm:$0xff]
        %v474 = vld [vmem:[%s2 + $0x648] sm:$0xff]
        %v475 = vld [vmem:[%s2 + $0x650] sm:$0xff]
        %v476 = vld [vmem:[%s2 + $0x658] sm:$0xff]
        %v477 = vld [vmem:[%s2 + $0x660] sm:$0xff]
        %v478 = vld [vmem:[%s2 + $0x668] sm:$0xff]
        %v479 = vld [vmem:[%s2 + $0x670] sm:$0xff]
        %v480 = vld [vmem:[%s2 + $0x678] sm:$0xff]
        %v481 = vld [vmem:[%s2 + $0x680] sm:$0xff]
        %v482 = vld [vmem:[%s2 + $0x688] sm:$0xff]
        %v483 = vld [vmem:[%s2 + $0x690] sm:$0xff]
        %v484 = vld [vmem:[%s2 + $0x698] sm:$0xff]
        %v485 = vld [vmem:[%s2 + $0x6a0] sm:$0xff]
        %v486 = vld [vmem:[%s2 + $0x6a8] sm:$0xff]
        %v487 = vld [vmem:[%s2 + $0x6b0] sm:$0xff]
        %v488 = vld [vmem:[%s2 + $0x6b8] sm:$0xff]
        %v489 = vld [vmem:[%s2 + $0x6c0] sm:$0xff]
        %v490 = vld [vmem:[%s2 + $0x6c8] sm:$0xff]
        %v491 = vld [vmem:[%s2 + $0x6d0] sm:$0xff]
        %v492 = vld [vmem:[%s2 + $0x6d8] sm:$0xff]
        %v493 = vld [vmem:[%s2 + $0x6e0] sm:$0xff]
        %v494 = vld [vmem:[%s2 + $0x6e8] sm:$0xff]
        %v495 = vld [vmem:[%s2 + $0x6f0] sm:$0xff]
        %v496 = vld [vmem:[%s2 + $0x6f8] sm:$0xff]
        %v497 = vld [vmem:[%s2 + $0x700] sm:$0xff]
        %v498 = vld [vmem:[%s2 + $0x708] sm:$0xff]
        %v499 = vld [vmem:[%s2 + $0x710] sm:$0xff]
        %v500 = vld [vmem:[%s2 + $0x718] sm:$0xff]
        %v501 = vld [vmem:[%s2 + $0x720] sm:$0xff]
        %v502 = vld [vmem:[%s2 + $0x728] sm:$0xff]
        %v503 = vld [vmem:[%s2 + $0x730] sm:$0xff]
        %v504 = vld [vmem:[%s2 + $0x738] sm:$0xff]
        %v505 = vld [vmem:[%s2 + $0x740] sm:$0xff]
        %v506 = vld [vmem:[%s2 + $0x748] sm:$0xff]
        %v507 = vld [vmem:[%s2 + $0x750] sm:$0xff]
        %v508 = vld [vmem:[%s2 + $0x758] sm:$0xff]
        %v509 = vld [vmem:[%s2 + $0x760] sm:$0xff]
        %v510 = vld [vmem:[%s2 + $0x768] sm:$0xff]
        %v511 = vld [vmem:[%s2 + $0x770] sm:$0xff]
        %v512 = vld [vmem:[%s2 + $0x778] sm:$0xff]
        %v513 = vld [vmem:[%s2 + $0x780] sm:$0xff]
        %v514 = vld [vmem:[%s2 + $0x788] sm:$0xff]
        %v515 = vld [vmem:[%s2 + $0x790] sm:$0xff]
        %v516 = vld [vmem:[%s2 + $0x798] sm:$0xff]
        %v517 = vld [vmem:[%s2 + $0x7a0] sm:$0xff]
        %v518 = vld [vmem:[%s2 + $0x7a8] sm:$0xff]
        %v519 = vld [vmem:[%s2 + $0x7b0] sm:$0xff]
        %v520 = vld [vmem:[%s2 + $0x7b8] sm:$0xff]
        %v521 = vld [vmem:[%s2 + $0x7c0] sm:$0xff]
        %v522 = vld [vmem:[%s2 + $0x7c8] sm:$0xff]
        %v523 = vld [vmem:[%s2 + $0x7d0] sm:$0xff]
        %v524 = vld [vmem:[%s2 + $0x7d8] sm:$0xff]
        %v525 = vld [vmem:[%s2 + $0x7e0] sm:$0xff]
        %v526 = vld [vmem:[%s2 + $0x7e8] sm:$0xff]
        %v527 = vld [vmem:[%s2 + $0x7f0] sm:$0xff]
        %v528 = vld [vmem:[%s2 + $0x7f8] sm:$0xff]
        %v529 = vld [vmem:[%s269] sm:$0xf]
        %v530 = vld [vmem:[%s269 + $0x4] sm:$0xf]
        %v531 = vld [vmem:[%s3] sm:$0xff]
        %v532 = vld [vmem:[%s3 + $0x8] sm:$0xff]
        %v533 = vld [vmem:[%s3 + $0x10] sm:$0xff]
        %v534 = vld [vmem:[%s3 + $0x18] sm:$0xff]
        %v535 = vld [vmem:[%s3 + $0x20] sm:$0xff]
        %v536 = vld [vmem:[%s3 + $0x28] sm:$0xff]
        %v537 = vld [vmem:[%s3 + $0x30] sm:$0xff]
        %v538 = vld [vmem:[%s3 + $0x38] sm:$0xff]
        %v539 = vld [vmem:[%s3 + $0x40] sm:$0xff]
        %v540 = vld [vmem:[%s3 + $0x48] sm:$0xff]
        %v541 = vld [vmem:[%s3 + $0x50] sm:$0xff]
        %v542 = vld [vmem:[%s3 + $0x58] sm:$0xff]
        %v543 = vld [vmem:[%s3 + $0x60] sm:$0xff]
        %v544 = vld [vmem:[%s3 + $0x68] sm:$0xff]
        %v545 = vld [vmem:[%s3 + $0x70] sm:$0xff]
        %v546 = vld [vmem:[%s3 + $0x78] sm:$0xff]
        %v547 = vld [vmem:[%s3 + $0x80] sm:$0xff]
        %v548 = vld [vmem:[%s3 + $0x88] sm:$0xff]
        %v549 = vld [vmem:[%s3 + $0x90] sm:$0xff]
        %v550 = vld [vmem:[%s3 + $0x98] sm:$0xff]
        %v551 = vld [vmem:[%s3 + $0xa0] sm:$0xff]
        %v552 = vld [vmem:[%s3 + $0xa8] sm:$0xff]
        %v553 = vld [vmem:[%s3 + $0xb0] sm:$0xff]
        %v554 = vld [vmem:[%s3 + $0xb8] sm:$0xff]
        %v555 = vld [vmem:[%s3 + $0xc0] sm:$0xff]
        %v556 = vld [vmem:[%s3 + $0xc8] sm:$0xff]
        %v557 = vld [vmem:[%s3 + $0xd0] sm:$0xff]
        %v558 = vld [vmem:[%s3 + $0xd8] sm:$0xff]
        %v559 = vld [vmem:[%s3 + $0xe0] sm:$0xff]
        %v560 = vld [vmem:[%s3 + $0xe8] sm:$0xff]
        %v561 = vld [vmem:[%s3 + $0xf0] sm:$0xff]
        %v562 = vld [vmem:[%s3 + $0xf8] sm:$0xff]
        %v563 = vld [vmem:[%s3 + $0x100] sm:$0xff]
        %v564 = vld [vmem:[%s3 + $0x108] sm:$0xff]
        %v565 = vld [vmem:[%s3 + $0x110] sm:$0xff]
        %v566 = vld [vmem:[%s3 + $0x118] sm:$0xff]
        %v567 = vld [vmem:[%s3 + $0x120] sm:$0xff]
        %v568 = vld [vmem:[%s3 + $0x128] sm:$0xff]
        %v569 = vld [vmem:[%s3 + $0x130] sm:$0xff]
        %v570 = vld [vmem:[%s3 + $0x138] sm:$0xff]
        %v571 = vld [vmem:[%s3 + $0x140] sm:$0xff]
        %v572 = vld [vmem:[%s3 + $0x148] sm:$0xff]
        %v573 = vld [vmem:[%s3 + $0x150] sm:$0xff]
        %v574 = vld [vmem:[%s3 + $0x158] sm:$0xff]
        %v575 = vld [vmem:[%s3 + $0x160] sm:$0xff]
        %v576 = vld [vmem:[%s3 + $0x168] sm:$0xff]
        %v577 = vld [vmem:[%s3 + $0x170] sm:$0xff]
        %v578 = vld [vmem:[%s3 + $0x178] sm:$0xff]
        %v579 = vld [vmem:[%s3 + $0x180] sm:$0xff]
        %v580 = vld [vmem:[%s3 + $0x188] sm:$0xff]
        %v581 = vld [vmem:[%s3 + $0x190] sm:$0xff]
        %v582 = vld [vmem:[%s3 + $0x198] sm:$0xff]
        %v583 = vld [vmem:[%s3 + $0x1a0] sm:$0xff]
        %v584 = vld [vmem:[%s3 + $0x1a8] sm:$0xff]
        %v585 = vld [vmem:[%s3 + $0x1b0] sm:$0xff]
        %v586 = vld [vmem:[%s3 + $0x1b8] sm:$0xff]
        %v587 = vld [vmem:[%s3 + $0x1c0] sm:$0xff]
        %v588 = vld [vmem:[%s3 + $0x1c8] sm:$0xff]
        %v589 = vld [vmem:[%s3 + $0x1d0] sm:$0xff]
        %v590 = vld [vmem:[%s3 + $0x1d8] sm:$0xff]
        %v591 = vld [vmem:[%s3 + $0x1e0] sm:$0xff]
        %v592 = vld [vmem:[%s3 + $0x1e8] sm:$0xff]
        %v593 = vld [vmem:[%s3 + $0x1f0] sm:$0xff]
        %v594 = vld [vmem:[%s3 + $0x1f8] sm:$0xff]
        %v595 = vld [vmem:[%s3 + $0x200] sm:$0xff]
        %v596 = vld [vmem:[%s3 + $0x208] sm:$0xff]
        %v597 = vld [vmem:[%s3 + $0x210] sm:$0xff]
        %v598 = vld [vmem:[%s3 + $0x218] sm:$0xff]
        %v599 = vld [vmem:[%s3 + $0x220] sm:$0xff]
        %v600 = vld [vmem:[%s3 + $0x228] sm:$0xff]
        %v601 = vld [vmem:[%s3 + $0x230] sm:$0xff]
        %v602 = vld [vmem:[%s3 + $0x238] sm:$0xff]
        %v603 = vld [vmem:[%s3 + $0x240] sm:$0xff]
        %v604 = vld [vmem:[%s3 + $0x248] sm:$0xff]
        %v605 = vld [vmem:[%s3 + $0x250] sm:$0xff]
        %v606 = vld [vmem:[%s3 + $0x258] sm:$0xff]
        %v607 = vld [vmem:[%s3 + $0x260] sm:$0xff]
        %v608 = vld [vmem:[%s3 + $0x268] sm:$0xff]
        %v609 = vld [vmem:[%s3 + $0x270] sm:$0xff]
        %v610 = vld [vmem:[%s3 + $0x278] sm:$0xff]
        %v611 = vld [vmem:[%s3 + $0x280] sm:$0xff]
        %v612 = vld [vmem:[%s3 + $0x288] sm:$0xff]
        %v613 = vld [vmem:[%s3 + $0x290] sm:$0xff]
        %v614 = vld [vmem:[%s3 + $0x298] sm:$0xff]
        %v615 = vld [vmem:[%s3 + $0x2a0] sm:$0xff]
        %v616 = vld [vmem:[%s3 + $0x2a8] sm:$0xff]
        %v617 = vld [vmem:[%s3 + $0x2b0] sm:$0xff]
        %v618 = vld [vmem:[%s3 + $0x2b8] sm:$0xff]
        %v619 = vld [vmem:[%s3 + $0x2c0] sm:$0xff]
        %v620 = vld [vmem:[%s3 + $0x2c8] sm:$0xff]
        %v621 = vld [vmem:[%s3 + $0x2d0] sm:$0xff]
        %v622 = vld [vmem:[%s3 + $0x2d8] sm:$0xff]
        %v623 = vld [vmem:[%s3 + $0x2e0] sm:$0xff]
        %v624 = vld [vmem:[%s3 + $0x2e8] sm:$0xff]
        %v625 = vld [vmem:[%s3 + $0x2f0] sm:$0xff]
        %v626 = vld [vmem:[%s3 + $0x2f8] sm:$0xff]
        %v627 = vld [vmem:[%s3 + $0x300] sm:$0xff]
        %v628 = vld [vmem:[%s3 + $0x308] sm:$0xff]
        %v629 = vld [vmem:[%s3 + $0x310] sm:$0xff]
        %v630 = vld [vmem:[%s3 + $0x318] sm:$0xff]
        %v631 = vld [vmem:[%s3 + $0x320] sm:$0xff]
        %v632 = vld [vmem:[%s3 + $0x328] sm:$0xff]
        %v633 = vld [vmem:[%s3 + $0x330] sm:$0xff]
        %v634 = vld [vmem:[%s3 + $0x338] sm:$0xff]
        %v635 = vld [vmem:[%s3 + $0x340] sm:$0xff]
        %v636 = vld [vmem:[%s3 + $0x348] sm:$0xff]
        %v637 = vld [vmem:[%s3 + $0x350] sm:$0xff]
        %v638 = vld [vmem:[%s3 + $0x358] sm:$0xff]
        %v639 = vld [vmem:[%s3 + $0x360] sm:$0xff]
        %v640 = vld [vmem:[%s3 + $0x368] sm:$0xff]
        %v641 = vld [vmem:[%s3 + $0x370] sm:$0xff]
        %v642 = vld [vmem:[%s3 + $0x378] sm:$0xff]
        %v643 = vld [vmem:[%s3 + $0x380] sm:$0xff]
        %v644 = vld [vmem:[%s3 + $0x388] sm:$0xff]
        %v645 = vld [vmem:[%s3 + $0x390] sm:$0xff]
        %v646 = vld [vmem:[%s3 + $0x398] sm:$0xff]
        %v647 = vld [vmem:[%s3 + $0x3a0] sm:$0xff]
        %v648 = vld [vmem:[%s3 + $0x3a8] sm:$0xff]
        %v649 = vld [vmem:[%s3 + $0x3b0] sm:$0xff]
        %v650 = vld [vmem:[%s3 + $0x3b8] sm:$0xff]
        %v651 = vld [vmem:[%s3 + $0x3c0] sm:$0xff]
        %v652 = vld [vmem:[%s3 + $0x3c8] sm:$0xff]
        %v653 = vld [vmem:[%s3 + $0x3d0] sm:$0xff]
        %v654 = vld [vmem:[%s3 + $0x3d8] sm:$0xff]
        %v655 = vld [vmem:[%s3 + $0x3e0] sm:$0xff]
        %v656 = vld [vmem:[%s3 + $0x3e8] sm:$0xff]
        %v657 = vld [vmem:[%s3 + $0x3f0] sm:$0xff]
        %v658 = vld [vmem:[%s3 + $0x3f8] sm:$0xff]
        %v659 = vld [vmem:[%s3 + $0x400] sm:$0xff]
        %v660 = vld [vmem:[%s3 + $0x408] sm:$0xff]
        %v661 = vld [vmem:[%s3 + $0x410] sm:$0xff]
        %v662 = vld [vmem:[%s3 + $0x418] sm:$0xff]
        %v663 = vld [vmem:[%s3 + $0x420] sm:$0xff]
        %v664 = vld [vmem:[%s3 + $0x428] sm:$0xff]
        %v665 = vld [vmem:[%s3 + $0x430] sm:$0xff]
        %v666 = vld [vmem:[%s3 + $0x438] sm:$0xff]
        %v667 = vld [vmem:[%s3 + $0x440] sm:$0xff]
        %v668 = vld [vmem:[%s3 + $0x448] sm:$0xff]
        %v669 = vld [vmem:[%s3 + $0x450] sm:$0xff]
        %v670 = vld [vmem:[%s3 + $0x458] sm:$0xff]
        %v671 = vld [vmem:[%s3 + $0x460] sm:$0xff]
        %v672 = vld [vmem:[%s3 + $0x468] sm:$0xff]
        %v673 = vld [vmem:[%s3 + $0x470] sm:$0xff]
        %v674 = vld [vmem:[%s3 + $0x478] sm:$0xff]
        %v675 = vld [vmem:[%s3 + $0x480] sm:$0xff]
        %v676 = vld [vmem:[%s3 + $0x488] sm:$0xff]
        %v677 = vld [vmem:[%s3 + $0x490] sm:$0xff]
        %v678 = vld [vmem:[%s3 + $0x498] sm:$0xff]
        %v679 = vld [vmem:[%s3 + $0x4a0] sm:$0xff]
        %v680 = vld [vmem:[%s3 + $0x4a8] sm:$0xff]
        %v681 = vld [vmem:[%s3 + $0x4b0] sm:$0xff]
        %v682 = vld [vmem:[%s3 + $0x4b8] sm:$0xff]
        %v683 = vld [vmem:[%s3 + $0x4c0] sm:$0xff]
        %v684 = vld [vmem:[%s3 + $0x4c8] sm:$0xff]
        %v685 = vld [vmem:[%s3 + $0x4d0] sm:$0xff]
        %v686 = vld [vmem:[%s3 + $0x4d8] sm:$0xff]
        %v687 = vld [vmem:[%s3 + $0x4e0] sm:$0xff]
        %v688 = vld [vmem:[%s3 + $0x4e8] sm:$0xff]
        %v689 = vld [vmem:[%s3 + $0x4f0] sm:$0xff]
        %v690 = vld [vmem:[%s3 + $0x4f8] sm:$0xff]
        %v691 = vld [vmem:[%s3 + $0x500] sm:$0xff]
        %v692 = vld [vmem:[%s3 + $0x508] sm:$0xff]
        %v693 = vld [vmem:[%s3 + $0x510] sm:$0xff]
        %v694 = vld [vmem:[%s3 + $0x518] sm:$0xff]
        %v695 = vld [vmem:[%s3 + $0x520] sm:$0xff]
        %v696 = vld [vmem:[%s3 + $0x528] sm:$0xff]
        %v697 = vld [vmem:[%s3 + $0x530] sm:$0xff]
        %v698 = vld [vmem:[%s3 + $0x538] sm:$0xff]
        %v699 = vld [vmem:[%s3 + $0x540] sm:$0xff]
        %v700 = vld [vmem:[%s3 + $0x548] sm:$0xff]
        %v701 = vld [vmem:[%s3 + $0x550] sm:$0xff]
        %v702 = vld [vmem:[%s3 + $0x558] sm:$0xff]
        %v703 = vld [vmem:[%s3 + $0x560] sm:$0xff]
        %v704 = vld [vmem:[%s3 + $0x568] sm:$0xff]
        %v705 = vld [vmem:[%s3 + $0x570] sm:$0xff]
        %v706 = vld [vmem:[%s3 + $0x578] sm:$0xff]
        %v707 = vld [vmem:[%s3 + $0x580] sm:$0xff]
        %v708 = vld [vmem:[%s3 + $0x588] sm:$0xff]
        %v709 = vld [vmem:[%s3 + $0x590] sm:$0xff]
        %v710 = vld [vmem:[%s3 + $0x598] sm:$0xff]
        %v711 = vld [vmem:[%s3 + $0x5a0] sm:$0xff]
        %v712 = vld [vmem:[%s3 + $0x5a8] sm:$0xff]
        %v713 = vld [vmem:[%s3 + $0x5b0] sm:$0xff]
        %v714 = vld [vmem:[%s3 + $0x5b8] sm:$0xff]
        %v715 = vld [vmem:[%s3 + $0x5c0] sm:$0xff]
        %v716 = vld [vmem:[%s3 + $0x5c8] sm:$0xff]
        %v717 = vld [vmem:[%s3 + $0x5d0] sm:$0xff]
        %v718 = vld [vmem:[%s3 + $0x5d8] sm:$0xff]
        %v719 = vld [vmem:[%s3 + $0x5e0] sm:$0xff]
        %v720 = vld [vmem:[%s3 + $0x5e8] sm:$0xff]
        %v721 = vld [vmem:[%s3 + $0x5f0] sm:$0xff]
        %v722 = vld [vmem:[%s3 + $0x5f8] sm:$0xff]
        %v723 = vld [vmem:[%s3 + $0x600] sm:$0xff]
        %v724 = vld [vmem:[%s3 + $0x608] sm:$0xff]
        %v725 = vld [vmem:[%s3 + $0x610] sm:$0xff]
        %v726 = vld [vmem:[%s3 + $0x618] sm:$0xff]
        %v727 = vld [vmem:[%s3 + $0x620] sm:$0xff]
        %v728 = vld [vmem:[%s3 + $0x628] sm:$0xff]
        %v729 = vld [vmem:[%s3 + $0x630] sm:$0xff]
        %v730 = vld [vmem:[%s3 + $0x638] sm:$0xff]
        %v731 = vld [vmem:[%s3 + $0x640] sm:$0xff]
        %v732 = vld [vmem:[%s3 + $0x648] sm:$0xff]
        %v733 = vld [vmem:[%s3 + $0x650] sm:$0xff]
        %v734 = vld [vmem:[%s3 + $0x658] sm:$0xff]
        %v735 = vld [vmem:[%s3 + $0x660] sm:$0xff]
        %v736 = vld [vmem:[%s3 + $0x668] sm:$0xff]
        %v737 = vld [vmem:[%s3 + $0x670] sm:$0xff]
        %v738 = vld [vmem:[%s3 + $0x678] sm:$0xff]
        %v739 = vld [vmem:[%s3 + $0x680] sm:$0xff]
        %v740 = vld [vmem:[%s3 + $0x688] sm:$0xff]
        %v741 = vld [vmem:[%s3 + $0x690] sm:$0xff]
        %v742 = vld [vmem:[%s3 + $0x698] sm:$0xff]
        %v743 = vld [vmem:[%s3 + $0x6a0] sm:$0xff]
        %v744 = vld [vmem:[%s3 + $0x6a8] sm:$0xff]
        %v745 = vld [vmem:[%s3 + $0x6b0] sm:$0xff]
        %v746 = vld [vmem:[%s3 + $0x6b8] sm:$0xff]
        %v747 = vld [vmem:[%s3 + $0x6c0] sm:$0xff]
        %v748 = vld [vmem:[%s3 + $0x6c8] sm:$0xff]
        %v749 = vld [vmem:[%s3 + $0x6d0] sm:$0xff]
        %v750 = vld [vmem:[%s3 + $0x6d8] sm:$0xff]
        %v751 = vld [vmem:[%s3 + $0x6e0] sm:$0xff]
        %v752 = vld [vmem:[%s3 + $0x6e8] sm:$0xff]
        %v753 = vld [vmem:[%s3 + $0x6f0] sm:$0xff]
        %v754 = vld [vmem:[%s3 + $0x6f8] sm:$0xff]
        %v755 = vld [vmem:[%s3 + $0x700] sm:$0xff]
        %v756 = vld [vmem:[%s3 + $0x708] sm:$0xff]
        %v757 = vld [vmem:[%s3 + $0x710] sm:$0xff]
        %v758 = vld [vmem:[%s3 + $0x718] sm:$0xff]
        %v759 = vld [vmem:[%s3 + $0x720] sm:$0xff]
        %v760 = vld [vmem:[%s3 + $0x728] sm:$0xff]
        %v761 = vld [vmem:[%s3 + $0x730] sm:$0xff]
        %v762 = vld [vmem:[%s3 + $0x738] sm:$0xff]
        %v763 = vld [vmem:[%s3 + $0x740] sm:$0xff]
        %v764 = vld [vmem:[%s3 + $0x748] sm:$0xff]
        %v765 = vld [vmem:[%s3 + $0x750] sm:$0xff]
        %v766 = vld [vmem:[%s3 + $0x758] sm:$0xff]
        %v767 = vld [vmem:[%s3 + $0x760] sm:$0xff]
        %v768 = vld [vmem:[%s3 + $0x768] sm:$0xff]
        %v769 = vld [vmem:[%s3 + $0x770] sm:$0xff]
        %v770 = vld [vmem:[%s3 + $0x778] sm:$0xff]
        %v771 = vld [vmem:[%s3 + $0x780] sm:$0xff]
        %v772 = vld [vmem:[%s3 + $0x788] sm:$0xff]
        %v773 = vld [vmem:[%s3 + $0x790] sm:$0xff]
        %v774 = vld [vmem:[%s3 + $0x798] sm:$0xff]
        %v775 = vld [vmem:[%s3 + $0x7a0] sm:$0xff]
        %v776 = vld [vmem:[%s3 + $0x7a8] sm:$0xff]
        %v777 = vld [vmem:[%s3 + $0x7b0] sm:$0xff]
        %v778 = vld [vmem:[%s3 + $0x7b8] sm:$0xff]
        %v779 = vld [vmem:[%s3 + $0x7c0] sm:$0xff]
        %v780 = vld [vmem:[%s3 + $0x7c8] sm:$0xff]
        %v781 = vld [vmem:[%s3 + $0x7d0] sm:$0xff]
        %v782 = vld [vmem:[%s3 + $0x7d8] sm:$0xff]
        %v783 = vld [vmem:[%s3 + $0x7e0] sm:$0xff]
        %v784 = vld [vmem:[%s3 + $0x7e8] sm:$0xff]
        %v785 = vld [vmem:[%s3 + $0x7f0] sm:$0xff]
        %v786 = vld [vmem:[%s3 + $0x7f8] sm:$0xff]
        %v789 = vunpack.c.l.b16 %v529
        %v790 = vunpack.c.l.b16 %v530
        %v791 = vpack.c.b16 %v790, %v789
        %v1049 = vunpack.c.l.b16 %v531
        %v1050 = vunpack.c.h.b16 %v531
        %v1051 = vunpack.c.l.b16 %v532
        %v1052 = vunpack.c.h.b16 %v532
        %v1053 = vunpack.c.l.b16 %v533
        %v1054 = vunpack.c.h.b16 %v533
        %v1055 = vunpack.c.l.b16 %v534
        %v1056 = vunpack.c.h.b16 %v534
        %v1057 = vunpack.c.l.b16 %v535
        %v1058 = vunpack.c.h.b16 %v535
        %v1059 = vunpack.c.l.b16 %v536
        %v1060 = vunpack.c.h.b16 %v536
        %v1061 = vunpack.c.l.b16 %v537
        %v1062 = vunpack.c.h.b16 %v537
        %v1063 = vunpack.c.l.b16 %v538
        %v1064 = vunpack.c.h.b16 %v538
        %v1065 = vunpack.c.l.b16 %v539
        %v1066 = vunpack.c.h.b16 %v539
        %v1067 = vunpack.c.l.b16 %v540
        %v1068 = vunpack.c.h.b16 %v540
        %v1069 = vunpack.c.l.b16 %v541
        %v1070 = vunpack.c.h.b16 %v541
        %v1071 = vunpack.c.l.b16 %v542
        %v1072 = vunpack.c.h.b16 %v542
        %v1073 = vunpack.c.l.b16 %v543
        %v1074 = vunpack.c.h.b16 %v543
        %v1075 = vunpack.c.l.b16 %v544
        %v1076 = vunpack.c.h.b16 %v544
        %v1077 = vunpack.c.l.b16 %v545
        %v1078 = vunpack.c.h.b16 %v545
        %v1079 = vunpack.c.l.b16 %v546
        %v1080 = vunpack.c.h.b16 %v546
        %v1081 = vunpack.c.l.b16 %v547
        %v1082 = vunpack.c.h.b16 %v547
        %v1083 = vunpack.c.l.b16 %v548
        %v1084 = vunpack.c.h.b16 %v548
        %v1085 = vunpack.c.l.b16 %v549
        %v1086 = vunpack.c.h.b16 %v549
        %v1087 = vunpack.c.l.b16 %v550
        %v1088 = vunpack.c.h.b16 %v550
        %v1089 = vunpack.c.l.b16 %v551
        %v1090 = vunpack.c.h.b16 %v551
        %v1091 = vunpack.c.l.b16 %v552
        %v1092 = vunpack.c.h.b16 %v552
        %v1093 = vunpack.c.l.b16 %v553
        %v1094 = vunpack.c.h.b16 %v553
        %v1095 = vunpack.c.l.b16 %v554
        %v1096 = vunpack.c.h.b16 %v554
        %v1097 = vunpack.c.l.b16 %v555
        %v1098 = vunpack.c.h.b16 %v555
        %v1099 = vunpack.c.l.b16 %v556
        %v1100 = vunpack.c.h.b16 %v556
        %v1101 = vunpack.c.l.b16 %v557
        %v1102 = vunpack.c.h.b16 %v557
        %v1103 = vunpack.c.l.b16 %v558
        %v1104 = vunpack.c.h.b16 %v558
        %v1105 = vunpack.c.l.b16 %v559
        %v1106 = vunpack.c.h.b16 %v559
        %v1107 = vunpack.c.l.b16 %v560
        %v1108 = vunpack.c.h.b16 %v560
        %v1109 = vunpack.c.l.b16 %v561
        %v1110 = vunpack.c.h.b16 %v561
        %v1111 = vunpack.c.l.b16 %v562
        %v1112 = vunpack.c.h.b16 %v562
        %v1113 = vunpack.c.l.b16 %v563
        %v1114 = vunpack.c.h.b16 %v563
        %v1115 = vunpack.c.l.b16 %v564
        %v1116 = vunpack.c.h.b16 %v564
        %v1117 = vunpack.c.l.b16 %v565
        %v1118 = vunpack.c.h.b16 %v565
        %v1119 = vunpack.c.l.b16 %v566
        %v1120 = vunpack.c.h.b16 %v566
        %v1121 = vunpack.c.l.b16 %v567
        %v1122 = vunpack.c.h.b16 %v567
        %v1123 = vunpack.c.l.b16 %v568
        %v1124 = vunpack.c.h.b16 %v568
        %v1125 = vunpack.c.l.b16 %v569
        %v1126 = vunpack.c.h.b16 %v569
        %v1127 = vunpack.c.l.b16 %v570
        %v1128 = vunpack.c.h.b16 %v570
        %v1129 = vunpack.c.l.b16 %v571
        %v1130 = vunpack.c.h.b16 %v571
        %v1131 = vunpack.c.l.b16 %v572
        %v1132 = vunpack.c.h.b16 %v572
        %v1133 = vunpack.c.l.b16 %v573
        %v1134 = vunpack.c.h.b16 %v573
        %v1135 = vunpack.c.l.b16 %v574
        %v1136 = vunpack.c.h.b16 %v574
        %v1137 = vunpack.c.l.b16 %v575
        %v1138 = vunpack.c.h.b16 %v575
        %v1139 = vunpack.c.l.b16 %v576
        %v1140 = vunpack.c.h.b16 %v576
        %v1141 = vunpack.c.l.b16 %v577
        %v1142 = vunpack.c.h.b16 %v577
        %v1143 = vunpack.c.l.b16 %v578
        %v1144 = vunpack.c.h.b16 %v578
        %v1145 = vunpack.c.l.b16 %v579
        %v1146 = vunpack.c.h.b16 %v579
        %v1147 = vunpack.c.l.b16 %v580
        %v1148 = vunpack.c.h.b16 %v580
        %v1149 = vunpack.c.l.b16 %v581
        %v1150 = vunpack.c.h.b16 %v581
        %v1151 = vunpack.c.l.b16 %v582
        %v1152 = vunpack.c.h.b16 %v582
        %v1153 = vunpack.c.l.b16 %v583
        %v1154 = vunpack.c.h.b16 %v583
        %v1155 = vunpack.c.l.b16 %v584
        %v1156 = vunpack.c.h.b16 %v584
        %v1157 = vunpack.c.l.b16 %v585
        %v1158 = vunpack.c.h.b16 %v585
        %v1159 = vunpack.c.l.b16 %v586
        %v1160 = vunpack.c.h.b16 %v586
        %v1161 = vunpack.c.l.b16 %v587
        %v1162 = vunpack.c.h.b16 %v587
        %v1163 = vunpack.c.l.b16 %v588
        %v1164 = vunpack.c.h.b16 %v588
        %v1165 = vunpack.c.l.b16 %v589
        %v1166 = vunpack.c.h.b16 %v589
        %v1167 = vunpack.c.l.b16 %v590
        %v1168 = vunpack.c.h.b16 %v590
        %v1169 = vunpack.c.l.b16 %v591
        %v1170 = vunpack.c.h.b16 %v591
        %v1171 = vunpack.c.l.b16 %v592
        %v1172 = vunpack.c.h.b16 %v592
        %v1173 = vunpack.c.l.b16 %v593
        %v1174 = vunpack.c.h.b16 %v593
        %v1175 = vunpack.c.l.b16 %v594
        %v1176 = vunpack.c.h.b16 %v594
        %v1177 = vunpack.c.l.b16 %v595
        %v1178 = vunpack.c.h.b16 %v595
        %v1179 = vunpack.c.l.b16 %v596
        %v1180 = vunpack.c.h.b16 %v596
        %v1181 = vunpack.c.l.b16 %v597
        %v1182 = vunpack.c.h.b16 %v597
        %v1183 = vunpack.c.l.b16 %v598
        %v1184 = vunpack.c.h.b16 %v598
        %v1185 = vunpack.c.l.b16 %v599
        %v1186 = vunpack.c.h.b16 %v599
        %v1187 = vunpack.c.l.b16 %v600
        %v1188 = vunpack.c.h.b16 %v600
        %v1189 = vunpack.c.l.b16 %v601
        %v1190 = vunpack.c.h.b16 %v601
        %v1191 = vunpack.c.l.b16 %v602
        %v1192 = vunpack.c.h.b16 %v602
        %v1193 = vunpack.c.l.b16 %v603
        %v1194 = vunpack.c.h.b16 %v603
        %v1195 = vunpack.c.l.b16 %v604
        %v1196 = vunpack.c.h.b16 %v604
        %v1197 = vunpack.c.l.b16 %v605
        %v1198 = vunpack.c.h.b16 %v605
        %v1199 = vunpack.c.l.b16 %v606
        %v1200 = vunpack.c.h.b16 %v606
        %v1201 = vunpack.c.l.b16 %v607
        %v1202 = vunpack.c.h.b16 %v607
        %v1203 = vunpack.c.l.b16 %v608
        %v1204 = vunpack.c.h.b16 %v608
        %v1205 = vunpack.c.l.b16 %v609
        %v1206 = vunpack.c.h.b16 %v609
        %v1207 = vunpack.c.l.b16 %v610
        %v1208 = vunpack.c.h.b16 %v610
        %v1209 = vunpack.c.l.b16 %v611
        %v1210 = vunpack.c.h.b16 %v611
        %v1211 = vunpack.c.l.b16 %v612
        %v1212 = vunpack.c.h.b16 %v612
        %v1213 = vunpack.c.l.b16 %v613
        %v1214 = vunpack.c.h.b16 %v613
        %v1215 = vunpack.c.l.b16 %v614
        %v1216 = vunpack.c.h.b16 %v614
        %v1217 = vunpack.c.l.b16 %v615
        %v1218 = vunpack.c.h.b16 %v615
        %v1219 = vunpack.c.l.b16 %v616
        %v1220 = vunpack.c.h.b16 %v616
        %v1221 = vunpack.c.l.b16 %v617
        %v1222 = vunpack.c.h.b16 %v617
        %v1223 = vunpack.c.l.b16 %v618
        %v1224 = vunpack.c.h.b16 %v618
        %v1225 = vunpack.c.l.b16 %v619
        %v1226 = vunpack.c.h.b16 %v619
        %v1227 = vunpack.c.l.b16 %v620
        %v1228 = vunpack.c.h.b16 %v620
        %v1229 = vunpack.c.l.b16 %v621
        %v1230 = vunpack.c.h.b16 %v621
        %v1231 = vunpack.c.l.b16 %v622
        %v1232 = vunpack.c.h.b16 %v622
        %v1233 = vunpack.c.l.b16 %v623
        %v1234 = vunpack.c.h.b16 %v623
        %v1235 = vunpack.c.l.b16 %v624
        %v1236 = vunpack.c.h.b16 %v624
        %v1237 = vunpack.c.l.b16 %v625
        %v1238 = vunpack.c.h.b16 %v625
        %v1239 = vunpack.c.l.b16 %v626
        %v1240 = vunpack.c.h.b16 %v626
        %v1241 = vunpack.c.l.b16 %v627
        %v1242 = vunpack.c.h.b16 %v627
        %v1243 = vunpack.c.l.b16 %v628
        %v1244 = vunpack.c.h.b16 %v628
        %v1245 = vunpack.c.l.b16 %v629
        %v1246 = vunpack.c.h.b16 %v629
        %v1247 = vunpack.c.l.b16 %v630
        %v1248 = vunpack.c.h.b16 %v630
        %v1249 = vunpack.c.l.b16 %v631
        %v1250 = vunpack.c.h.b16 %v631
        %v1251 = vunpack.c.l.b16 %v632
        %v1252 = vunpack.c.h.b16 %v632
        %v1253 = vunpack.c.l.b16 %v633
        %v1254 = vunpack.c.h.b16 %v633
        %v1255 = vunpack.c.l.b16 %v634
        %v1256 = vunpack.c.h.b16 %v634
        %v1257 = vunpack.c.l.b16 %v635
        %v1258 = vunpack.c.h.b16 %v635
        %v1259 = vunpack.c.l.b16 %v636
        %v1260 = vunpack.c.h.b16 %v636
        %v1261 = vunpack.c.l.b16 %v637
        %v1262 = vunpack.c.h.b16 %v637
        %v1263 = vunpack.c.l.b16 %v638
        %v1264 = vunpack.c.h.b16 %v638
        %v1265 = vunpack.c.l.b16 %v639
        %v1266 = vunpack.c.h.b16 %v639
        %v1267 = vunpack.c.l.b16 %v640
        %v1268 = vunpack.c.h.b16 %v640
        %v1269 = vunpack.c.l.b16 %v641
        %v1270 = vunpack.c.h.b16 %v641
        %v1271 = vunpack.c.l.b16 %v642
        %v1272 = vunpack.c.h.b16 %v642
        %v1273 = vunpack.c.l.b16 %v643
        %v1274 = vunpack.c.h.b16 %v643
        %v1275 = vunpack.c.l.b16 %v644
        %v1276 = vunpack.c.h.b16 %v644
        %v1277 = vunpack.c.l.b16 %v645
        %v1278 = vunpack.c.h.b16 %v645
        %v1279 = vunpack.c.l.b16 %v646
        %v1280 = vunpack.c.h.b16 %v646
        %v1281 = vunpack.c.l.b16 %v647
        %v1282 = vunpack.c.h.b16 %v647
        %v1283 = vunpack.c.l.b16 %v648
        %v1284 = vunpack.c.h.b16 %v648
        %v1285 = vunpack.c.l.b16 %v649
        %v1286 = vunpack.c.h.b16 %v649
        %v1287 = vunpack.c.l.b16 %v650
        %v1288 = vunpack.c.h.b16 %v650
        %v1289 = vunpack.c.l.b16 %v651
        %v1290 = vunpack.c.h.b16 %v651
        %v1291 = vunpack.c.l.b16 %v652
        %v1292 = vunpack.c.h.b16 %v652
        %v1293 = vunpack.c.l.b16 %v653
        %v1294 = vunpack.c.h.b16 %v653
        %v1295 = vunpack.c.l.b16 %v654
        %v1296 = vunpack.c.h.b16 %v654
        %v1297 = vunpack.c.l.b16 %v655
        %v1298 = vunpack.c.h.b16 %v655
        %v1299 = vunpack.c.l.b16 %v656
        %v1300 = vunpack.c.h.b16 %v656
        %v1301 = vunpack.c.l.b16 %v657
        %v1302 = vunpack.c.h.b16 %v657
        %v1303 = vunpack.c.l.b16 %v658
        %v1304 = vunpack.c.h.b16 %v658
        %v1305 = vunpack.c.l.b16 %v659
        %v1306 = vunpack.c.h.b16 %v659
        %v1307 = vunpack.c.l.b16 %v660
        %v1308 = vunpack.c.h.b16 %v660
        %v1309 = vunpack.c.l.b16 %v661
        %v1310 = vunpack.c.h.b16 %v661
        %v1311 = vunpack.c.l.b16 %v662
        %v1312 = vunpack.c.h.b16 %v662
        %v1313 = vunpack.c.l.b16 %v663
        %v1314 = vunpack.c.h.b16 %v663
        %v1315 = vunpack.c.l.b16 %v664
        %v1316 = vunpack.c.h.b16 %v664
        %v1317 = vunpack.c.l.b16 %v665
        %v1318 = vunpack.c.h.b16 %v665
        %v1319 = vunpack.c.l.b16 %v666
        %v1320 = vunpack.c.h.b16 %v666
        %v1321 = vunpack.c.l.b16 %v667
        %v1322 = vunpack.c.h.b16 %v667
        %v1323 = vunpack.c.l.b16 %v668
        %v1324 = vunpack.c.h.b16 %v668
        %v1325 = vunpack.c.l.b16 %v669
        %v1326 = vunpack.c.h.b16 %v669
        %v1327 = vunpack.c.l.b16 %v670
        %v1328 = vunpack.c.h.b16 %v670
        %v1329 = vunpack.c.l.b16 %v671
        %v1330 = vunpack.c.h.b16 %v671
        %v1331 = vunpack.c.l.b16 %v672
        %v1332 = vunpack.c.h.b16 %v672
        %v1333 = vunpack.c.l.b16 %v673
        %v1334 = vunpack.c.h.b16 %v673
        %v1335 = vunpack.c.l.b16 %v674
        %v1336 = vunpack.c.h.b16 %v674
        %v1337 = vunpack.c.l.b16 %v675
        %v1338 = vunpack.c.h.b16 %v675
        %v1339 = vunpack.c.l.b16 %v676
        %v1340 = vunpack.c.h.b16 %v676
        %v1341 = vunpack.c.l.b16 %v677
        %v1342 = vunpack.c.h.b16 %v677
        %v1343 = vunpack.c.l.b16 %v678
        %v1344 = vunpack.c.h.b16 %v678
        %v1345 = vunpack.c.l.b16 %v679
        %v1346 = vunpack.c.h.b16 %v679
        %v1347 = vunpack.c.l.b16 %v680
        %v1348 = vunpack.c.h.b16 %v680
        %v1349 = vunpack.c.l.b16 %v681
        %v1350 = vunpack.c.h.b16 %v681
        %v1351 = vunpack.c.l.b16 %v682
        %v1352 = vunpack.c.h.b16 %v682
        %v1353 = vunpack.c.l.b16 %v683
        %v1354 = vunpack.c.h.b16 %v683
        %v1355 = vunpack.c.l.b16 %v684
        %v1356 = vunpack.c.h.b16 %v684
        %v1357 = vunpack.c.l.b16 %v685
        %v1358 = vunpack.c.h.b16 %v685
        %v1359 = vunpack.c.l.b16 %v686
        %v1360 = vunpack.c.h.b16 %v686
        %v1361 = vunpack.c.l.b16 %v687
        %v1362 = vunpack.c.h.b16 %v687
        %v1363 = vunpack.c.l.b16 %v688
        %v1364 = vunpack.c.h.b16 %v688
        %v1365 = vunpack.c.l.b16 %v689
        %v1366 = vunpack.c.h.b16 %v689
        %v1367 = vunpack.c.l.b16 %v690
        %v1368 = vunpack.c.h.b16 %v690
        %v1369 = vunpack.c.l.b16 %v691
        %v1370 = vunpack.c.h.b16 %v691
        %v1371 = vunpack.c.l.b16 %v692
        %v1372 = vunpack.c.h.b16 %v692
        %v1373 = vunpack.c.l.b16 %v693
        %v1374 = vunpack.c.h.b16 %v693
        %v1375 = vunpack.c.l.b16 %v694
        %v1376 = vunpack.c.h.b16 %v694
        %v1377 = vunpack.c.l.b16 %v695
        %v1378 = vunpack.c.h.b16 %v695
        %v1379 = vunpack.c.l.b16 %v696
        %v1380 = vunpack.c.h.b16 %v696
        %v1381 = vunpack.c.l.b16 %v697
        %v1382 = vunpack.c.h.b16 %v697
        %v1383 = vunpack.c.l.b16 %v698
        %v1384 = vunpack.c.h.b16 %v698
        %v1385 = vunpack.c.l.b16 %v699
        %v1386 = vunpack.c.h.b16 %v699
        %v1387 = vunpack.c.l.b16 %v700
        %v1388 = vunpack.c.h.b16 %v700
        %v1389 = vunpack.c.l.b16 %v701
        %v1390 = vunpack.c.h.b16 %v701
        %v1391 = vunpack.c.l.b16 %v702
        %v1392 = vunpack.c.h.b16 %v702
        %v1393 = vunpack.c.l.b16 %v703
        %v1394 = vunpack.c.h.b16 %v703
        %v1395 = vunpack.c.l.b16 %v704
        %v1396 = vunpack.c.h.b16 %v704
        %v1397 = vunpack.c.l.b16 %v705
        %v1398 = vunpack.c.h.b16 %v705
        %v1399 = vunpack.c.l.b16 %v706
        %v1400 = vunpack.c.h.b16 %v706
        %v1401 = vunpack.c.l.b16 %v707
        %v1402 = vunpack.c.h.b16 %v707
        %v1403 = vunpack.c.l.b16 %v708
        %v1404 = vunpack.c.h.b16 %v708
        %v1405 = vunpack.c.l.b16 %v709
        %v1406 = vunpack.c.h.b16 %v709
        %v1407 = vunpack.c.l.b16 %v710
        %v1408 = vunpack.c.h.b16 %v710
        %v1409 = vunpack.c.l.b16 %v711
        %v1410 = vunpack.c.h.b16 %v711
        %v1411 = vunpack.c.l.b16 %v712
        %v1412 = vunpack.c.h.b16 %v712
        %v1413 = vunpack.c.l.b16 %v713
        %v1414 = vunpack.c.h.b16 %v713
        %v1415 = vunpack.c.l.b16 %v714
        %v1416 = vunpack.c.h.b16 %v714
        %v1417 = vunpack.c.l.b16 %v715
        %v1418 = vunpack.c.h.b16 %v715
        %v1419 = vunpack.c.l.b16 %v716
        %v1420 = vunpack.c.h.b16 %v716
        %v1421 = vunpack.c.l.b16 %v717
        %v1422 = vunpack.c.h.b16 %v717
        %v1423 = vunpack.c.l.b16 %v718
        %v1424 = vunpack.c.h.b16 %v718
        %v1425 = vunpack.c.l.b16 %v719
        %v1426 = vunpack.c.h.b16 %v719
        %v1427 = vunpack.c.l.b16 %v720
        %v1428 = vunpack.c.h.b16 %v720
        %v1429 = vunpack.c.l.b16 %v721
        %v1430 = vunpack.c.h.b16 %v721
        %v1431 = vunpack.c.l.b16 %v722
        %v1432 = vunpack.c.h.b16 %v722
        %v1433 = vunpack.c.l.b16 %v723
        %v1434 = vunpack.c.h.b16 %v723
        %v1435 = vunpack.c.l.b16 %v724
        %v1436 = vunpack.c.h.b16 %v724
        %v1437 = vunpack.c.l.b16 %v725
        %v1438 = vunpack.c.h.b16 %v725
        %v1439 = vunpack.c.l.b16 %v726
        %v1440 = vunpack.c.h.b16 %v726
        %v1441 = vunpack.c.l.b16 %v727
        %v1442 = vunpack.c.h.b16 %v727
        %v1443 = vunpack.c.l.b16 %v728
        %v1444 = vunpack.c.h.b16 %v728
        %v1445 = vunpack.c.l.b16 %v729
        %v1446 = vunpack.c.h.b16 %v729
        %v1447 = vunpack.c.l.b16 %v730
        %v1448 = vunpack.c.h.b16 %v730
        %v1449 = vunpack.c.l.b16 %v731
        %v1450 = vunpack.c.h.b16 %v731
        %v1451 = vunpack.c.l.b16 %v732
        %v1452 = vunpack.c.h.b16 %v732
        %v1453 = vunpack.c.l.b16 %v733
        %v1454 = vunpack.c.h.b16 %v733
        %v1455 = vunpack.c.l.b16 %v734
        %v1456 = vunpack.c.h.b16 %v734
        %v1457 = vunpack.c.l.b16 %v735
        %v1458 = vunpack.c.h.b16 %v735
        %v1459 = vunpack.c.l.b16 %v736
        %v1460 = vunpack.c.h.b16 %v736
        %v1461 = vunpack.c.l.b16 %v737
        %v1462 = vunpack.c.h.b16 %v737
        %v1463 = vunpack.c.l.b16 %v738
        %v1464 = vunpack.c.h.b16 %v738
        %v1465 = vunpack.c.l.b16 %v739
        %v1466 = vunpack.c.h.b16 %v739
        %v1467 = vunpack.c.l.b16 %v740
        %v1468 = vunpack.c.h.b16 %v740
        %v1469 = vunpack.c.l.b16 %v741
        %v1470 = vunpack.c.h.b16 %v741
        %v1471 = vunpack.c.l.b16 %v742
        %v1472 = vunpack.c.h.b16 %v742
        %v1473 = vunpack.c.l.b16 %v743
        %v1474 = vunpack.c.h.b16 %v743
        %v1475 = vunpack.c.l.b16 %v744
        %v1476 = vunpack.c.h.b16 %v744
        %v1477 = vunpack.c.l.b16 %v745
        %v1478 = vunpack.c.h.b16 %v745
        %v1479 = vunpack.c.l.b16 %v746
        %v1480 = vunpack.c.h.b16 %v746
        %v1481 = vunpack.c.l.b16 %v747
        %v1482 = vunpack.c.h.b16 %v747
        %v1483 = vunpack.c.l.b16 %v748
        %v1484 = vunpack.c.h.b16 %v748
        %v1485 = vunpack.c.l.b16 %v749
        %v1486 = vunpack.c.h.b16 %v749
        %v1487 = vunpack.c.l.b16 %v750
        %v1488 = vunpack.c.h.b16 %v750
        %v1489 = vunpack.c.l.b16 %v751
        %v1490 = vunpack.c.h.b16 %v751
        %v1491 = vunpack.c.l.b16 %v752
        %v1492 = vunpack.c.h.b16 %v752
        %v1493 = vunpack.c.l.b16 %v753
        %v1494 = vunpack.c.h.b16 %v753
        %v1495 = vunpack.c.l.b16 %v754
        %v1496 = vunpack.c.h.b16 %v754
        %v1497 = vunpack.c.l.b16 %v755
        %v1498 = vunpack.c.h.b16 %v755
        %v1499 = vunpack.c.l.b16 %v756
        %v1500 = vunpack.c.h.b16 %v756
        %v1501 = vunpack.c.l.b16 %v757
        %v1502 = vunpack.c.h.b16 %v757
        %v1503 = vunpack.c.l.b16 %v758
        %v1504 = vunpack.c.h.b16 %v758
        %v1505 = vunpack.c.l.b16 %v759
        %v1506 = vunpack.c.h.b16 %v759
        %v1507 = vunpack.c.l.b16 %v760
        %v1508 = vunpack.c.h.b16 %v760
        %v1509 = vunpack.c.l.b16 %v761
        %v1510 = vunpack.c.h.b16 %v761
        %v1511 = vunpack.c.l.b16 %v762
        %v1512 = vunpack.c.h.b16 %v762
        %v1513 = vunpack.c.l.b16 %v763
        %v1514 = vunpack.c.h.b16 %v763
        %v1515 = vunpack.c.l.b16 %v764
        %v1516 = vunpack.c.h.b16 %v764
        %v1517 = vunpack.c.l.b16 %v765
        %v1518 = vunpack.c.h.b16 %v765
        %v1519 = vunpack.c.l.b16 %v766
        %v1520 = vunpack.c.h.b16 %v766
        %v1521 = vunpack.c.l.b16 %v767
        %v1522 = vunpack.c.h.b16 %v767
        %v1523 = vunpack.c.l.b16 %v768
        %v1524 = vunpack.c.h.b16 %v768
        %v1525 = vunpack.c.l.b16 %v769
        %v1526 = vunpack.c.h.b16 %v769
        %v1527 = vunpack.c.l.b16 %v770
        %v1528 = vunpack.c.h.b16 %v770
        %v1529 = vunpack.c.l.b16 %v771
        %v1530 = vunpack.c.h.b16 %v771
        %v1531 = vunpack.c.l.b16 %v772
        %v1532 = vunpack.c.h.b16 %v772
        %v1533 = vunpack.c.l.b16 %v773
        %v1534 = vunpack.c.h.b16 %v773
        %v1535 = vunpack.c.l.b16 %v774
        %v1536 = vunpack.c.h.b16 %v774
        %v1537 = vunpack.c.l.b16 %v775
        %v1538 = vunpack.c.h.b16 %v775
        %v1539 = vunpack.c.l.b16 %v776
        %v1540 = vunpack.c.h.b16 %v776
        %v1541 = vunpack.c.l.b16 %v777
        %v1542 = vunpack.c.h.b16 %v777
        %v1543 = vunpack.c.l.b16 %v778
        %v1544 = vunpack.c.h.b16 %v778
        %v1545 = vunpack.c.l.b16 %v779
        %v1546 = vunpack.c.h.b16 %v779
        %v1547 = vunpack.c.l.b16 %v780
        %v1548 = vunpack.c.h.b16 %v780
        %v1549 = vunpack.c.l.b16 %v781
        %v1550 = vunpack.c.h.b16 %v781
        %v1551 = vunpack.c.l.b16 %v782
        %v1552 = vunpack.c.h.b16 %v782
        %v1553 = vunpack.c.l.b16 %v783
        %v1554 = vunpack.c.h.b16 %v783
        %v1555 = vunpack.c.l.b16 %v784
        %v1556 = vunpack.c.h.b16 %v784
        %v1557 = vunpack.c.l.b16 %v785
        %v1558 = vunpack.c.h.b16 %v785
        %v1559 = vunpack.c.l.b16 %v786
        %v1560 = vunpack.c.h.b16 %v786
        %v1561 = vpack.c.b16 %v1081, %v1049
        %v1562 = vpack.c.b16 %v1082, %v1050
        %v1563 = vpack.c.b16 %v1083, %v1051
        %v1564 = vpack.c.b16 %v1084, %v1052
        %v1565 = vpack.c.b16 %v1085, %v1053
        %v1566 = vpack.c.b16 %v1086, %v1054
        %v1567 = vpack.c.b16 %v1087, %v1055
        %v1568 = vpack.c.b16 %v1088, %v1056
        %v1569 = vpack.c.b16 %v1089, %v1057
        %v1570 = vpack.c.b16 %v1090, %v1058
        %v1571 = vpack.c.b16 %v1091, %v1059
        %v1572 = vpack.c.b16 %v1092, %v1060
        %v1573 = vpack.c.b16 %v1093, %v1061
        %v1574 = vpack.c.b16 %v1094, %v1062
        %v1575 = vpack.c.b16 %v1095, %v1063
        %v1576 = vpack.c.b16 %v1096, %v1064
        %v1577 = vpack.c.b16 %v1097, %v1065
        %v1578 = vpack.c.b16 %v1098, %v1066
        %v1579 = vpack.c.b16 %v1099, %v1067
        %v1580 = vpack.c.b16 %v1100, %v1068
        %v1581 = vpack.c.b16 %v1101, %v1069
        %v1582 = vpack.c.b16 %v1102, %v1070
        %v1583 = vpack.c.b16 %v1103, %v1071
        %v1584 = vpack.c.b16 %v1104, %v1072
        %v1585 = vpack.c.b16 %v1105, %v1073
        %v1586 = vpack.c.b16 %v1106, %v1074
        %v1587 = vpack.c.b16 %v1107, %v1075
        %v1588 = vpack.c.b16 %v1108, %v1076
        %v1589 = vpack.c.b16 %v1109, %v1077
        %v1590 = vpack.c.b16 %v1110, %v1078
        %v1591 = vpack.c.b16 %v1111, %v1079
        %v1592 = vpack.c.b16 %v1112, %v1080
        %v1593 = vpack.c.b16 %v1145, %v1113
        %v1594 = vpack.c.b16 %v1146, %v1114
        %v1595 = vpack.c.b16 %v1147, %v1115
        %v1596 = vpack.c.b16 %v1148, %v1116
        %v1597 = vpack.c.b16 %v1149, %v1117
        %v1598 = vpack.c.b16 %v1150, %v1118
        %v1599 = vpack.c.b16 %v1151, %v1119
        %v1600 = vpack.c.b16 %v1152, %v1120
        %v1601 = vpack.c.b16 %v1153, %v1121
        %v1602 = vpack.c.b16 %v1154, %v1122
        %v1603 = vpack.c.b16 %v1155, %v1123
        %v1604 = vpack.c.b16 %v1156, %v1124
        %v1605 = vpack.c.b16 %v1157, %v1125
        %v1606 = vpack.c.b16 %v1158, %v1126
        %v1607 = vpack.c.b16 %v1159, %v1127
        %v1608 = vpack.c.b16 %v1160, %v1128
        %v1609 = vpack.c.b16 %v1161, %v1129
        %v1610 = vpack.c.b16 %v1162, %v1130
        %v1611 = vpack.c.b16 %v1163, %v1131
        %v1612 = vpack.c.b16 %v1164, %v1132
        %v1613 = vpack.c.b16 %v1165, %v1133
        %v1614 = vpack.c.b16 %v1166, %v1134
        %v1615 = vpack.c.b16 %v1167, %v1135
        %v1616 = vpack.c.b16 %v1168, %v1136
        %v1617 = vpack.c.b16 %v1169, %v1137
        %v1618 = vpack.c.b16 %v1170, %v1138
        %v1619 = vpack.c.b16 %v1171, %v1139
        %v1620 = vpack.c.b16 %v1172, %v1140
        %v1621 = vpack.c.b16 %v1173, %v1141
        %v1622 = vpack.c.b16 %v1174, %v1142
        %v1623 = vpack.c.b16 %v1175, %v1143
        %v1624 = vpack.c.b16 %v1176, %v1144
        %v1625 = vpack.c.b16 %v1209, %v1177
        %v1626 = vpack.c.b16 %v1210, %v1178
        %v1627 = vpack.c.b16 %v1211, %v1179
        %v1628 = vpack.c.b16 %v1212, %v1180
        %v1629 = vpack.c.b16 %v1213, %v1181
        %v1630 = vpack.c.b16 %v1214, %v1182
        %v1631 = vpack.c.b16 %v1215, %v1183
        %v1632 = vpack.c.b16 %v1216, %v1184
        %v1633 = vpack.c.b16 %v1217, %v1185
        %v1634 = vpack.c.b16 %v1218, %v1186
        %v1635 = vpack.c.b16 %v1219, %v1187
        %v1636 = vpack.c.b16 %v1220, %v1188
        %v1637 = vpack.c.b16 %v1221, %v1189
        %v1638 = vpack.c.b16 %v1222, %v1190
        %v1639 = vpack.c.b16 %v1223, %v1191
        %v1640 = vpack.c.b16 %v1224, %v1192
        %v1641 = vpack.c.b16 %v1225, %v1193
        %v1642 = vpack.c.b16 %v1226, %v1194
        %v1643 = vpack.c.b16 %v1227, %v1195
        %v1644 = vpack.c.b16 %v1228, %v1196
        %v1645 = vpack.c.b16 %v1229, %v1197
        %v1646 = vpack.c.b16 %v1230, %v1198
        %v1647 = vpack.c.b16 %v1231, %v1199
        %v1648 = vpack.c.b16 %v1232, %v1200
        %v1649 = vpack.c.b16 %v1233, %v1201
        %v1650 = vpack.c.b16 %v1234, %v1202
        %v1651 = vpack.c.b16 %v1235, %v1203
        %v1652 = vpack.c.b16 %v1236, %v1204
        %v1653 = vpack.c.b16 %v1237, %v1205
        %v1654 = vpack.c.b16 %v1238, %v1206
        %v1655 = vpack.c.b16 %v1239, %v1207
        %v1656 = vpack.c.b16 %v1240, %v1208
        %v1657 = vpack.c.b16 %v1273, %v1241
        %v1658 = vpack.c.b16 %v1274, %v1242
        %v1659 = vpack.c.b16 %v1275, %v1243
        %v1660 = vpack.c.b16 %v1276, %v1244
        %v1661 = vpack.c.b16 %v1277, %v1245
        %v1662 = vpack.c.b16 %v1278, %v1246
        %v1663 = vpack.c.b16 %v1279, %v1247
        %v1664 = vpack.c.b16 %v1280, %v1248
        %v1665 = vpack.c.b16 %v1281, %v1249
        %v1666 = vpack.c.b16 %v1282, %v1250
        %v1667 = vpack.c.b16 %v1283, %v1251
        %v1668 = vpack.c.b16 %v1284, %v1252
        %v1669 = vpack.c.b16 %v1285, %v1253
        %v1670 = vpack.c.b16 %v1286, %v1254
        %v1671 = vpack.c.b16 %v1287, %v1255
        %v1672 = vpack.c.b16 %v1288, %v1256
        %v1673 = vpack.c.b16 %v1289, %v1257
        %v1674 = vpack.c.b16 %v1290, %v1258
        %v1675 = vpack.c.b16 %v1291, %v1259
        %v1676 = vpack.c.b16 %v1292, %v1260
        %v1677 = vpack.c.b16 %v1293, %v1261
        %v1678 = vpack.c.b16 %v1294, %v1262
        %v1679 = vpack.c.b16 %v1295, %v1263
        %v1680 = vpack.c.b16 %v1296, %v1264
        %v1681 = vpack.c.b16 %v1297, %v1265
        %v1682 = vpack.c.b16 %v1298, %v1266
        %v1683 = vpack.c.b16 %v1299, %v1267
        %v1684 = vpack.c.b16 %v1300, %v1268
        %v1685 = vpack.c.b16 %v1301, %v1269
        %v1686 = vpack.c.b16 %v1302, %v1270
        %v1687 = vpack.c.b16 %v1303, %v1271
        %v1688 = vpack.c.b16 %v1304, %v1272
        %v1689 = vpack.c.b16 %v1337, %v1305
        %v1690 = vpack.c.b16 %v1338, %v1306
        %v1691 = vpack.c.b16 %v1339, %v1307
        %v1692 = vpack.c.b16 %v1340, %v1308
        %v1693 = vpack.c.b16 %v1341, %v1309
        %v1694 = vpack.c.b16 %v1342, %v1310
        %v1695 = vpack.c.b16 %v1343, %v1311
        %v1696 = vpack.c.b16 %v1344, %v1312
        %v1697 = vpack.c.b16 %v1345, %v1313
        %v1698 = vpack.c.b16 %v1346, %v1314
        %v1699 = vpack.c.b16 %v1347, %v1315
        %v1700 = vpack.c.b16 %v1348, %v1316
        %v1701 = vpack.c.b16 %v1349, %v1317
        %v1702 = vpack.c.b16 %v1350, %v1318
        %v1703 = vpack.c.b16 %v1351, %v1319
        %v1704 = vpack.c.b16 %v1352, %v1320
        %v1705 = vpack.c.b16 %v1353, %v1321
        %v1706 = vpack.c.b16 %v1354, %v1322
        %v1707 = vpack.c.b16 %v1355, %v1323
        %v1708 = vpack.c.b16 %v1356, %v1324
        %v1709 = vpack.c.b16 %v1357, %v1325
        %v1710 = vpack.c.b16 %v1358, %v1326
        %v1711 = vpack.c.b16 %v1359, %v1327
        %v1712 = vpack.c.b16 %v1360, %v1328
        %v1713 = vpack.c.b16 %v1361, %v1329
        %v1714 = vpack.c.b16 %v1362, %v1330
        %v1715 = vpack.c.b16 %v1363, %v1331
        %v1716 = vpack.c.b16 %v1364, %v1332
        %v1717 = vpack.c.b16 %v1365, %v1333
        %v1718 = vpack.c.b16 %v1366, %v1334
        %v1719 = vpack.c.b16 %v1367, %v1335
        %v1720 = vpack.c.b16 %v1368, %v1336
        %v1721 = vpack.c.b16 %v1401, %v1369
        %v1722 = vpack.c.b16 %v1402, %v1370
        %v1723 = vpack.c.b16 %v1403, %v1371
        %v1724 = vpack.c.b16 %v1404, %v1372
        %v1725 = vpack.c.b16 %v1405, %v1373
        %v1726 = vpack.c.b16 %v1406, %v1374
        %v1727 = vpack.c.b16 %v1407, %v1375
        %v1728 = vpack.c.b16 %v1408, %v1376
        %v1729 = vpack.c.b16 %v1409, %v1377
        %v1730 = vpack.c.b16 %v1410, %v1378
        %v1731 = vpack.c.b16 %v1411, %v1379
        %v1732 = vpack.c.b16 %v1412, %v1380
        %v1733 = vpack.c.b16 %v1413, %v1381
        %v1734 = vpack.c.b16 %v1414, %v1382
        %v1735 = vpack.c.b16 %v1415, %v1383
        %v1736 = vpack.c.b16 %v1416, %v1384
        %v1737 = vpack.c.b16 %v1417, %v1385
        %v1738 = vpack.c.b16 %v1418, %v1386
        %v1739 = vpack.c.b16 %v1419, %v1387
        %v1740 = vpack.c.b16 %v1420, %v1388
        %v1741 = vpack.c.b16 %v1421, %v1389
        %v1742 = vpack.c.b16 %v1422, %v1390
        %v1743 = vpack.c.b16 %v1423, %v1391
        %v1744 = vpack.c.b16 %v1424, %v1392
        %v1745 = vpack.c.b16 %v1425, %v1393
        %v1746 = vpack.c.b16 %v1426, %v1394
        %v1747 = vpack.c.b16 %v1427, %v1395
        %v1748 = vpack.c.b16 %v1428, %v1396
        %v1749 = vpack.c.b16 %v1429, %v1397
        %v1750 = vpack.c.b16 %v1430, %v1398
        %v1751 = vpack.c.b16 %v1431, %v1399
        %v1752 = vpack.c.b16 %v1432, %v1400
        %v1753 = vpack.c.b16 %v1465, %v1433
        %v1754 = vpack.c.b16 %v1466, %v1434
        %v1755 = vpack.c.b16 %v1467, %v1435
        %v1756 = vpack.c.b16 %v1468, %v1436
        %v1757 = vpack.c.b16 %v1469, %v1437
        %v1758 = vpack.c.b16 %v1470, %v1438
        %v1759 = vpack.c.b16 %v1471, %v1439
        %v1760 = vpack.c.b16 %v1472, %v1440
        %v1761 = vpack.c.b16 %v1473, %v1441
        %v1762 = vpack.c.b16 %v1474, %v1442
        %v1763 = vpack.c.b16 %v1475, %v1443
        %v1764 = vpack.c.b16 %v1476, %v1444
        %v1765 = vpack.c.b16 %v1477, %v1445
        %v1766 = vpack.c.b16 %v1478, %v1446
        %v1767 = vpack.c.b16 %v1479, %v1447
        %v1768 = vpack.c.b16 %v1480, %v1448
        %v1769 = vpack.c.b16 %v1481, %v1449
        %v1770 = vpack.c.b16 %v1482, %v1450
        %v1771 = vpack.c.b16 %v1483, %v1451
        %v1772 = vpack.c.b16 %v1484, %v1452
        %v1773 = vpack.c.b16 %v1485, %v1453
        %v1774 = vpack.c.b16 %v1486, %v1454
        %v1775 = vpack.c.b16 %v1487, %v1455
        %v1776 = vpack.c.b16 %v1488, %v1456
        %v1777 = vpack.c.b16 %v1489, %v1457
        %v1778 = vpack.c.b16 %v1490, %v1458
        %v1779 = vpack.c.b16 %v1491, %v1459
        %v1780 = vpack.c.b16 %v1492, %v1460
        %v1781 = vpack.c.b16 %v1493, %v1461
        %v1782 = vpack.c.b16 %v1494, %v1462
        %v1783 = vpack.c.b16 %v1495, %v1463
        %v1784 = vpack.c.b16 %v1496, %v1464
        %v1785 = vpack.c.b16 %v1529, %v1497
        %v1786 = vpack.c.b16 %v1530, %v1498
        %v1787 = vpack.c.b16 %v1531, %v1499
        %v1788 = vpack.c.b16 %v1532, %v1500
        %v1789 = vpack.c.b16 %v1533, %v1501
        %v1790 = vpack.c.b16 %v1534, %v1502
        %v1791 = vpack.c.b16 %v1535, %v1503
        %v1792 = vpack.c.b16 %v1536, %v1504
        %v1793 = vpack.c.b16 %v1537, %v1505
        %v1794 = vpack.c.b16 %v1538, %v1506
        %v1795 = vpack.c.b16 %v1539, %v1507
        %v1796 = vpack.c.b16 %v1540, %v1508
        %v1797 = vpack.c.b16 %v1541, %v1509
        %v1798 = vpack.c.b16 %v1542, %v1510
        %v1799 = vpack.c.b16 %v1543, %v1511
        %v1800 = vpack.c.b16 %v1544, %v1512
        %v1801 = vpack.c.b16 %v1545, %v1513
        %v1802 = vpack.c.b16 %v1546, %v1514
        %v1803 = vpack.c.b16 %v1547, %v1515
        %v1804 = vpack.c.b16 %v1548, %v1516
        %v1805 = vpack.c.b16 %v1549, %v1517
        %v1806 = vpack.c.b16 %v1550, %v1518
        %v1807 = vpack.c.b16 %v1551, %v1519
        %v1808 = vpack.c.b16 %v1552, %v1520
        %v1809 = vpack.c.b16 %v1553, %v1521
        %v1810 = vpack.c.b16 %v1554, %v1522
        %v1811 = vpack.c.b16 %v1555, %v1523
        %v1812 = vpack.c.b16 %v1556, %v1524
        %v1813 = vpack.c.b16 %v1557, %v1525
        %v1814 = vpack.c.b16 %v1558, %v1526
        %v1815 = vpack.c.b16 %v1559, %v1527
        %v1816 = vpack.c.b16 %v1560, %v1528
        %2073 = vmatprep.subr.bf16.mxu0 %v1562
        %2074 = vmatpush1.bf16.msra.mxu0 %v1561
        %2075 = vmatprep.subr.bf16.mxu0 %v1594
        %2076 = vmatpush1.bf16.msra.mxu0 %v1593
        %2077 = vmatprep.subr.bf16.mxu0 %v1626
        %2078 = vmatpush1.bf16.msra.mxu0 %v1625
        %2079 = vmatprep.subr.bf16.mxu0 %v1658
        %2080 = vmatpush1.bf16.msra.mxu0 %v1657
        %2081 = vmatprep.subr.bf16.mxu0 %v1690
        %2082 = vmatpush1.bf16.msra.mxu0 %v1689
        %2083 = vmatprep.subr.bf16.mxu0 %v1722
        %2084 = vmatpush1.bf16.msra.mxu0 %v1721
        %2085 = vmatprep.subr.bf16.mxu0 %v1754
        %2086 = vmatpush1.bf16.msra.mxu0 %v1753
        %2087 = vmatprep.subr.bf16.mxu0 %v1786
        %2088 = vmatpush1.bf16.msra.mxu0 %v1785
        %2089 = vmatprep.subr.bf16.mxu0 0
        %2090 = vmatpush1.bf16.msra.mxu0 0
        %2091 = vmatprep.subr.bf16.mxu0 0
        %2092 = vmatpush1.bf16.msra.mxu0 0
        %2093 = vmatprep.subr.bf16.mxu0 0
        %2094 = vmatpush1.bf16.msra.mxu0 0
        %2095 = vmatprep.subr.bf16.mxu0 0
        %2096 = vmatpush1.bf16.msra.mxu0 0
        %2097 = vmatprep.subr.bf16.mxu0 0
        %2098 = vmatpush1.bf16.msra.mxu0 0
        %2099 = vmatprep.subr.bf16.mxu0 0
        %2100 = vmatpush1.bf16.msra.mxu0 0
        %2101 = vmatprep.subr.bf16.mxu0 0
        %2102 = vmatpush1.bf16.msra.mxu0 0
        %2103 = vmatprep.subr.bf16.mxu0 0
        %2104 = vmatpush1.bf16.msra.mxu0 0
        %2105 = vmatprep.mubr.bf16.mxu0 0
        %2106 = vmatmul.mubr.bf16.gmra.mrb[0].mxu0 %v791
        %v2107 = vpop.f32.mrb[0].mxu0
        %v2108 = vadd.f32 0.0, %v2107
        %v2109 = vpop.f32.mrb[0].mxu0
        %v2110 = vadd.f32 0.0, %v2109
        %v2111 = vpop.f32.mrb[0].mxu0
        %v2112 = vadd.f32 0.0, %v2111
        %v2113 = vpop.f32.mrb[0].mxu0
        %v2114 = vadd.f32 0.0, %v2113
        %2115 = vdwg.mxu0
        %2116 = vmatprep.subr.bf16.mxu0 %v1564
        %2117 = vmatpush1.bf16.msra.mxu0 %v1563
        %2118 = vmatprep.subr.bf16.mxu0 %v1596
        %2119 = vmatpush1.bf16.msra.mxu0 %v1595
        %2120 = vmatprep.subr.bf16.mxu0 %v1628
        %2121 = vmatpush1.bf16.msra.mxu0 %v1627
        %2122 = vmatprep.subr.bf16.mxu0 %v1660
        %2123 = vmatpush1.bf16.msra.mxu0 %v1659
        %2124 = vmatprep.subr.bf16.mxu0 %v1692
        %2125 = vmatpush1.bf16.msra.mxu0 %v1691
        %2126 = vmatprep.subr.bf16.mxu0 %v1724
        %2127 = vmatpush1.bf16.msra.mxu0 %v1723
        %2128 = vmatprep.subr.bf16.mxu0 %v1756
        %2129 = vmatpush1.bf16.msra.mxu0 %v1755
        %2130 = vmatprep.subr.bf16.mxu0 %v1788
        %2131 = vmatpush1.bf16.msra.mxu0 %v1787
        %2132 = vmatprep.subr.bf16.mxu0 0
        %2133 = vmatpush1.bf16.msra.mxu0 0
        %2134 = vmatprep.subr.bf16.mxu0 0
        %2135 = vmatpush1.bf16.msra.mxu0 0
        %2136 = vmatprep.subr.bf16.mxu0 0
        %2137 = vmatpush1.bf16.msra.mxu0 0
        %2138 = vmatprep.subr.bf16.mxu0 0
        %2139 = vmatpush1.bf16.msra.mxu0 0
        %2140 = vmatprep.subr.bf16.mxu0 0
        %2141 = vmatpush1.bf16.msra.mxu0 0
        %2142 = vmatprep.subr.bf16.mxu0 0
        %2143 = vmatpush1.bf16.msra.mxu0 0
        %2144 = vmatprep.subr.bf16.mxu0 0
        %2145 = vmatpush1.bf16.msra.mxu0 0
        %2146 = vmatprep.subr.bf16.mxu0 0
        %2147 = vmatpush1.bf16.msra.mxu0 0
        %2148 = vmatprep.mubr.bf16.mxu0 0
        %2149 = vmatmul.mubr.bf16.gmra.mrb[0].mxu0 %v791
        %v2150 = vpop.f32.mrb[0].mxu0
        %v2151 = vadd.f32 0.0, %v2150
        %v2152 = vpop.f32.mrb[0].mxu0
        %v2153 = vadd.f32 0.0, %v2152
        %v2154 = vpop.f32.mrb[0].mxu0
        %v2155 = vadd.f32 0.0, %v2154
        %v2156 = vpop.f32.mrb[0].mxu0
        %v2157 = vadd.f32 0.0, %v2156
        %2158 = vdwg.mxu0
        %2159 = vmatprep.subr.bf16.mxu0 %v1566
        %2160 = vmatpush1.bf16.msra.mxu0 %v1565
        %2161 = vmatprep.subr.bf16.mxu0 %v1598
        %2162 = vmatpush1.bf16.msra.mxu0 %v1597
        %2163 = vmatprep.subr.bf16.mxu0 %v1630
        %2164 = vmatpush1.bf16.msra.mxu0 %v1629
        %2165 = vmatprep.subr.bf16.mxu0 %v1662
        %2166 = vmatpush1.bf16.msra.mxu0 %v1661
        %2167 = vmatprep.subr.bf16.mxu0 %v1694
        %2168 = vmatpush1.bf16.msra.mxu0 %v1693
        %2169 = vmatprep.subr.bf16.mxu0 %v1726
        %2170 = vmatpush1.bf16.msra.mxu0 %v1725
        %2171 = vmatprep.subr.bf16.mxu0 %v1758
        %2172 = vmatpush1.bf16.msra.mxu0 %v1757
        %2173 = vmatprep.subr.bf16.mxu0 %v1790
        %2174 = vmatpush1.bf16.msra.mxu0 %v1789
        %2175 = vmatprep.subr.bf16.mxu0 0
        %2176 = vmatpush1.bf16.msra.mxu0 0
        %2177 = vmatprep.subr.bf16.mxu0 0
        %2178 = vmatpush1.bf16.msra.mxu0 0
        %2179 = vmatprep.subr.bf16.mxu0 0
        %2180 = vmatpush1.bf16.msra.mxu0 0
        %2181 = vmatprep.subr.bf16.mxu0 0
        %2182 = vmatpush1.bf16.msra.mxu0 0
        %2183 = vmatprep.subr.bf16.mxu0 0
        %2184 = vmatpush1.bf16.msra.mxu0 0
        %2185 = vmatprep.subr.bf16.mxu0 0
        %2186 = vmatpush1.bf16.msra.mxu0 0
        %2187 = vmatprep.subr.bf16.mxu0 0
        %2188 = vmatpush1.bf16.msra.mxu0 0
        %2189 = vmatprep.subr.bf16.mxu0 0
        %2190 = vmatpush1.bf16.msra.mxu0 0
        %2191 = vmatprep.mubr.bf16.mxu0 0
        %2192 = vmatmul.mubr.bf16.gmra.mrb[0].mxu0 %v791
        %v2193 = vpop.f32.mrb[0].mxu0
        %v2194 = vadd.f32 0.0, %v2193
        %v2195 = vpop.f32.mrb[0].mxu0
        %v2196 = vadd.f32 0.0, %v2195
        %v2197 = vpop.f32.mrb[0].mxu0
        %v2198 = vadd.f32 0.0, %v2197
        %v2199 = vpop.f32.mrb[0].mxu0
        %v2200 = vadd.f32 0.0, %v2199
        %2201 = vdwg.mxu0
        %2202 = vmatprep.subr.bf16.mxu0 %v1568
        %2203 = vmatpush1.bf16.msra.mxu0 %v1567
        %2204 = vmatprep.subr.bf16.mxu0 %v1600
        %2205 = vmatpush1.bf16.msra.mxu0 %v1599
        %2206 = vmatprep.subr.bf16.mxu0 %v1632
        %2207 = vmatpush1.bf16.msra.mxu0 %v1631
        %2208 = vmatprep.subr.bf16.mxu0 %v1664
        %2209 = vmatpush1.bf16.msra.mxu0 %v1663
        %2210 = vmatprep.subr.bf16.mxu0 %v1696
        %2211 = vmatpush1.bf16.msra.mxu0 %v1695
        %2212 = vmatprep.subr.bf16.mxu0 %v1728
        %2213 = vmatpush1.bf16.msra.mxu0 %v1727
        %2214 = vmatprep.subr.bf16.mxu0 %v1760
        %2215 = vmatpush1.bf16.msra.mxu0 %v1759
        %2216 = vmatprep.subr.bf16.mxu0 %v1792
        %2217 = vmatpush1.bf16.msra.mxu0 %v1791
        %2218 = vmatprep.subr.bf16.mxu0 0
        %2219 = vmatpush1.bf16.msra.mxu0 0
        %2220 = vmatprep.subr.bf16.mxu0 0
        %2221 = vmatpush1.bf16.msra.mxu0 0
        %2222 = vmatprep.subr.bf16.mxu0 0
        %2223 = vmatpush1.bf16.msra.mxu0 0
        %2224 = vmatprep.subr.bf16.mxu0 0
        %2225 = vmatpush1.bf16.msra.mxu0 0
        %2226 = vmatprep.subr.bf16.mxu0 0
        %2227 = vmatpush1.bf16.msra.mxu0 0
        %2228 = vmatprep.subr.bf16.mxu0 0
        %2229 = vmatpush1.bf16.msra.mxu0 0
        %2230 = vmatprep.subr.bf16.mxu0 0
        %2231 = vmatpush1.bf16.msra.mxu0 0
        %2232 = vmatprep.subr.bf16.mxu0 0
        %2233 = vmatpush1.bf16.msra.mxu0 0
        %2234 = vmatprep.mubr.bf16.mxu0 0
        %2235 = vmatmul.mubr.bf16.gmra.mrb[0].mxu0 %v791
        %v2236 = vpop.f32.mrb[0].mxu0
        %v2237 = vadd.f32 0.0, %v2236
        %v2238 = vpop.f32.mrb[0].mxu0
        %v2239 = vadd.f32 0.0, %v2238
        %v2240 = vpop.f32.mrb[0].mxu0
        %v2241 = vadd.f32 0.0, %v2240
        %v2242 = vpop.f32.mrb[0].mxu0
        %v2243 = vadd.f32 0.0, %v2242
        %2244 = vdwg.mxu0
        %2245 = vmatprep.subr.bf16.mxu0 %v1570
        %2246 = vmatpush1.bf16.msra.mxu0 %v1569
        %2247 = vmatprep.subr.bf16.mxu0 %v1602
        %2248 = vmatpush1.bf16.msra.mxu0 %v1601
        %2249 = vmatprep.subr.bf16.mxu0 %v1634
        %2250 = vmatpush1.bf16.msra.mxu0 %v1633
        %2251 = vmatprep.subr.bf16.mxu0 %v1666
        %2252 = vmatpush1.bf16.msra.mxu0 %v1665
        %2253 = vmatprep.subr.bf16.mxu0 %v1698
        %2254 = vmatpush1.bf16.msra.mxu0 %v1697
        %2255 = vmatprep.subr.bf16.mxu0 %v1730
        %2256 = vmatpush1.bf16.msra.mxu0 %v1729
        %2257 = vmatprep.subr.bf16.mxu0 %v1762
        %2258 = vmatpush1.bf16.msra.mxu0 %v1761
        %2259 = vmatprep.subr.bf16.mxu0 %v1794
        %2260 = vmatpush1.bf16.msra.mxu0 %v1793
        %2261 = vmatprep.subr.bf16.mxu0 0
        %2262 = vmatpush1.bf16.msra.mxu0 0
        %2263 = vmatprep.subr.bf16.mxu0 0
        %2264 = vmatpush1.bf16.msra.mxu0 0
        %2265 = vmatprep.subr.bf16.mxu0 0
        %2266 = vmatpush1.bf16.msra.mxu0 0
        %2267 = vmatprep.subr.bf16.mxu0 0
        %2268 = vmatpush1.bf16.msra.mxu0 0
        %2269 = vmatprep.subr.bf16.mxu0 0
        %2270 = vmatpush1.bf16.msra.mxu0 0
        %2271 = vmatprep.subr.bf16.mxu0 0
        %2272 = vmatpush1.bf16.msra.mxu0 0
        %2273 = vmatprep.subr.bf16.mxu0 0
        %2274 = vmatpush1.bf16.msra.mxu0 0
        %2275 = vmatprep.subr.bf16.mxu0 0
        %2276 = vmatpush1.bf16.msra.mxu0 0
        %2277 = vmatprep.mubr.bf16.mxu0 0
        %2278 = vmatmul.mubr.bf16.gmra.mrb[0].mxu0 %v791
        %v2279 = vpop.f32.mrb[0].mxu0
        %v2280 = vadd.f32 0.0, %v2279
        %v2281 = vpop.f32.mrb[0].mxu0
        %v2282 = vadd.f32 0.0, %v2281
        %v2283 = vpop.f32.mrb[0].mxu0
        %v2284 = vadd.f32 0.0, %v2283
        %v2285 = vpop.f32.mrb[0].mxu0
        %v2286 = vadd.f32 0.0, %v2285
        %2287 = vdwg.mxu0
        %2288 = vmatprep.subr.bf16.mxu0 %v1572
        %2289 = vmatpush1.bf16.msra.mxu0 %v1571
        %2290 = vmatprep.subr.bf16.mxu0 %v1604
        %2291 = vmatpush1.bf16.msra.mxu0 %v1603
        %2292 = vmatprep.subr.bf16.mxu0 %v1636
        %2293 = vmatpush1.bf16.msra.mxu0 %v1635
        %2294 = vmatprep.subr.bf16.mxu0 %v1668
        %2295 = vmatpush1.bf16.msra.mxu0 %v1667
        %2296 = vmatprep.subr.bf16.mxu0 %v1700
        %2297 = vmatpush1.bf16.msra.mxu0 %v1699
        %2298 = vmatprep.subr.bf16.mxu0 %v1732
        %2299 = vmatpush1.bf16.msra.mxu0 %v1731
        %2300 = vmatprep.subr.bf16.mxu0 %v1764
        %2301 = vmatpush1.bf16.msra.mxu0 %v1763
        %2302 = vmatprep.subr.bf16.mxu0 %v1796
        %2303 = vmatpush1.bf16.msra.mxu0 %v1795
        %2304 = vmatprep.subr.bf16.mxu0 0
        %2305 = vmatpush1.bf16.msra.mxu0 0
        %2306 = vmatprep.subr.bf16.mxu0 0
        %2307 = vmatpush1.bf16.msra.mxu0 0
        %2308 = vmatprep.subr.bf16.mxu0 0
        %2309 = vmatpush1.bf16.msra.mxu0 0
        %2310 = vmatprep.subr.bf16.mxu0 0
        %2311 = vmatpush1.bf16.msra.mxu0 0
        %2312 = vmatprep.subr.bf16.mxu0 0
        %2313 = vmatpush1.bf16.msra.mxu0 0
        %2314 = vmatprep.subr.bf16.mxu0 0
        %2315 = vmatpush1.bf16.msra.mxu0 0
        %2316 = vmatprep.subr.bf16.mxu0 0
        %2317 = vmatpush1.bf16.msra.mxu0 0
        %2318 = vmatprep.subr.bf16.mxu0 0
        %2319 = vmatpush1.bf16.msra.mxu0 0
        %2320 = vmatprep.mubr.bf16.mxu0 0
        %2321 = vmatmul.mubr.bf16.gmra.mrb[0].mxu0 %v791
        %v2322 = vpop.f32.mrb[0].mxu0
        %v2323 = vadd.f32 0.0, %v2322
        %v2324 = vpop.f32.mrb[0].mxu0
        %v2325 = vadd.f32 0.0, %v2324
        %v2326 = vpop.f32.mrb[0].mxu0
        %v2327 = vadd.f32 0.0, %v2326
        %v2328 = vpop.f32.mrb[0].mxu0
        %v2329 = vadd.f32 0.0, %v2328
        %2330 = vdwg.mxu0
        %2331 = vmatprep.subr.bf16.mxu0 %v1574
        %2332 = vmatpush1.bf16.msra.mxu0 %v1573
        %2333 = vmatprep.subr.bf16.mxu0 %v1606
        %2334 = vmatpush1.bf16.msra.mxu0 %v1605
        %2335 = vmatprep.subr.bf16.mxu0 %v1638
        %2336 = vmatpush1.bf16.msra.mxu0 %v1637
        %2337 = vmatprep.subr.bf16.mxu0 %v1670
        %2338 = vmatpush1.bf16.msra.mxu0 %v1669
        %2339 = vmatprep.subr.bf16.mxu0 %v1702
        %2340 = vmatpush1.bf16.msra.mxu0 %v1701
        %2341 = vmatprep.subr.bf16.mxu0 %v1734
        %2342 = vmatpush1.bf16.msra.mxu0 %v1733
        %2343 = vmatprep.subr.bf16.mxu0 %v1766
        %2344 = vmatpush1.bf16.msra.mxu0 %v1765
        %2345 = vmatprep.subr.bf16.mxu0 %v1798
        %2346 = vmatpush1.bf16.msra.mxu0 %v1797
        %2347 = vmatprep.subr.bf16.mxu0 0
        %2348 = vmatpush1.bf16.msra.mxu0 0
        %2349 = vmatprep.subr.bf16.mxu0 0
        %2350 = vmatpush1.bf16.msra.mxu0 0
        %2351 = vmatprep.subr.bf16.mxu0 0
        %2352 = vmatpush1.bf16.msra.mxu0 0
        %2353 = vmatprep.subr.bf16.mxu0 0
        %2354 = vmatpush1.bf16.msra.mxu0 0
        %2355 = vmatprep.subr.bf16.mxu0 0
        %2356 = vmatpush1.bf16.msra.mxu0 0
        %2357 = vmatprep.subr.bf16.mxu0 0
        %2358 = vmatpush1.bf16.msra.mxu0 0
        %2359 = vmatprep.subr.bf16.mxu0 0
        %2360 = vmatpush1.bf16.msra.mxu0 0
        %2361 = vmatprep.subr.bf16.mxu0 0
        %2362 = vmatpush1.bf16.msra.mxu0 0
        %2363 = vmatprep.mubr.bf16.mxu0 0
        %2364 = vmatmul.mubr.bf16.gmra.mrb[0].mxu0 %v791
        %v2365 = vpop.f32.mrb[0].mxu0
        %v2366 = vadd.f32 0.0, %v2365
        %v2367 = vpop.f32.mrb[0].mxu0
        %v2368 = vadd.f32 0.0, %v2367
        %v2369 = vpop.f32.mrb[0].mxu0
        %v2370 = vadd.f32 0.0, %v2369
        %v2371 = vpop.f32.mrb[0].mxu0
        %v2372 = vadd.f32 0.0, %v2371
        %2373 = vdwg.mxu0
        %2374 = vmatprep.subr.bf16.mxu0 %v1576
        %2375 = vmatpush1.bf16.msra.mxu0 %v1575
        %2376 = vmatprep.subr.bf16.mxu0 %v1608
        %2377 = vmatpush1.bf16.msra.mxu0 %v1607
        %2378 = vmatprep.subr.bf16.mxu0 %v1640
        %2379 = vmatpush1.bf16.msra.mxu0 %v1639
        %2380 = vmatprep.subr.bf16.mxu0 %v1672
        %2381 = vmatpush1.bf16.msra.mxu0 %v1671
        %2382 = vmatprep.subr.bf16.mxu0 %v1704
        %2383 = vmatpush1.bf16.msra.mxu0 %v1703
        %2384 = vmatprep.subr.bf16.mxu0 %v1736
        %2385 = vmatpush1.bf16.msra.mxu0 %v1735
        %2386 = vmatprep.subr.bf16.mxu0 %v1768
        %2387 = vmatpush1.bf16.msra.mxu0 %v1767
        %2388 = vmatprep.subr.bf16.mxu0 %v1800
        %2389 = vmatpush1.bf16.msra.mxu0 %v1799
        %2390 = vmatprep.subr.bf16.mxu0 0
        %2391 = vmatpush1.bf16.msra.mxu0 0
        %2392 = vmatprep.subr.bf16.mxu0 0
        %2393 = vmatpush1.bf16.msra.mxu0 0
        %2394 = vmatprep.subr.bf16.mxu0 0
        %2395 = vmatpush1.bf16.msra.mxu0 0
        %2396 = vmatprep.subr.bf16.mxu0 0
        %2397 = vmatpush1.bf16.msra.mxu0 0
        %2398 = vmatprep.subr.bf16.mxu0 0
        %2399 = vmatpush1.bf16.msra.mxu0 0
        %2400 = vmatprep.subr.bf16.mxu0 0
        %2401 = vmatpush1.bf16.msra.mxu0 0
        %2402 = vmatprep.subr.bf16.mxu0 0
        %2403 = vmatpush1.bf16.msra.mxu0 0
        %2404 = vmatprep.subr.bf16.mxu0 0
        %2405 = vmatpush1.bf16.msra.mxu0 0
        %2406 = vmatprep.mubr.bf16.mxu0 0
        %2407 = vmatmul.mubr.bf16.gmra.mrb[0].mxu0 %v791
        %v2408 = vpop.f32.mrb[0].mxu0
        %v2409 = vadd.f32 0.0, %v2408
        %v2410 = vpop.f32.mrb[0].mxu0
        %v2411 = vadd.f32 0.0, %v2410
        %v2412 = vpop.f32.mrb[0].mxu0
        %v2413 = vadd.f32 0.0, %v2412
        %v2414 = vpop.f32.mrb[0].mxu0
        %v2415 = vadd.f32 0.0, %v2414
        %2416 = vdwg.mxu0
        %2417 = vmatprep.subr.bf16.mxu0 %v1578
        %2418 = vmatpush1.bf16.msra.mxu0 %v1577
        %2419 = vmatprep.subr.bf16.mxu0 %v1610
        %2420 = vmatpush1.bf16.msra.mxu0 %v1609
        %2421 = vmatprep.subr.bf16.mxu0 %v1642
        %2422 = vmatpush1.bf16.msra.mxu0 %v1641
        %2423 = vmatprep.subr.bf16.mxu0 %v1674
        %2424 = vmatpush1.bf16.msra.mxu0 %v1673
        %2425 = vmatprep.subr.bf16.mxu0 %v1706
        %2426 = vmatpush1.bf16.msra.mxu0 %v1705
        %2427 = vmatprep.subr.bf16.mxu0 %v1738
        %2428 = vmatpush1.bf16.msra.mxu0 %v1737
        %2429 = vmatprep.subr.bf16.mxu0 %v1770
        %2430 = vmatpush1.bf16.msra.mxu0 %v1769
        %2431 = vmatprep.subr.bf16.mxu0 %v1802
        %2432 = vmatpush1.bf16.msra.mxu0 %v1801
        %2433 = vmatprep.subr.bf16.mxu0 0
        %2434 = vmatpush1.bf16.msra.mxu0 0
        %2435 = vmatprep.subr.bf16.mxu0 0
        %2436 = vmatpush1.bf16.msra.mxu0 0
        %2437 = vmatprep.subr.bf16.mxu0 0
        %2438 = vmatpush1.bf16.msra.mxu0 0
        %2439 = vmatprep.subr.bf16.mxu0 0
        %2440 = vmatpush1.bf16.msra.mxu0 0
        %2441 = vmatprep.subr.bf16.mxu0 0
        %2442 = vmatpush1.bf16.msra.mxu0 0
        %2443 = vmatprep.subr.bf16.mxu0 0
        %2444 = vmatpush1.bf16.msra.mxu0 0
        %2445 = vmatprep.subr.bf16.mxu0 0
        %2446 = vmatpush1.bf16.msra.mxu0 0
        %2447 = vmatprep.subr.bf16.mxu0 0
        %2448 = vmatpush1.bf16.msra.mxu0 0
        %2449 = vmatprep.mubr.bf16.mxu0 0
        %2450 = vmatmul.mubr.bf16.gmra.mrb[0].mxu0 %v791
        %v2451 = vpop.f32.mrb[0].mxu0
        %v2452 = vadd.f32 0.0, %v2451
        %v2453 = vpop.f32.mrb[0].mxu0
        %v2454 = vadd.f32 0.0, %v2453
        %v2455 = vpop.f32.mrb[0].mxu0
        %v2456 = vadd.f32 0.0, %v2455
        %v2457 = vpop.f32.mrb[0].mxu0
        %v2458 = vadd.f32 0.0, %v2457
        %2459 = vdwg.mxu0
        %2460 = vmatprep.subr.bf16.mxu0 %v1580
        %2461 = vmatpush1.bf16.msra.mxu0 %v1579
        %2462 = vmatprep.subr.bf16.mxu0 %v1612
        %2463 = vmatpush1.bf16.msra.mxu0 %v1611
        %2464 = vmatprep.subr.bf16.mxu0 %v1644
        %2465 = vmatpush1.bf16.msra.mxu0 %v1643
        %2466 = vmatprep.subr.bf16.mxu0 %v1676
        %2467 = vmatpush1.bf16.msra.mxu0 %v1675
        %2468 = vmatprep.subr.bf16.mxu0 %v1708
        %2469 = vmatpush1.bf16.msra.mxu0 %v1707
        %2470 = vmatprep.subr.bf16.mxu0 %v1740
        %2471 = vmatpush1.bf16.msra.mxu0 %v1739
        %2472 = vmatprep.subr.bf16.mxu0 %v1772
        %2473 = vmatpush1.bf16.msra.mxu0 %v1771
        %2474 = vmatprep.subr.bf16.mxu0 %v1804
        %2475 = vmatpush1.bf16.msra.mxu0 %v1803
        %2476 = vmatprep.subr.bf16.mxu0 0
        %2477 = vmatpush1.bf16.msra.mxu0 0
        %2478 = vmatprep.subr.bf16.mxu0 0
        %2479 = vmatpush1.bf16.msra.mxu0 0
        %2480 = vmatprep.subr.bf16.mxu0 0
        %2481 = vmatpush1.bf16.msra.mxu0 0
        %2482 = vmatprep.subr.bf16.mxu0 0
        %2483 = vmatpush1.bf16.msra.mxu0 0
        %2484 = vmatprep.subr.bf16.mxu0 0
        %2485 = vmatpush1.bf16.msra.mxu0 0
        %2486 = vmatprep.subr.bf16.mxu0 0
        %2487 = vmatpush1.bf16.msra.mxu0 0
        %2488 = vmatprep.subr.bf16.mxu0 0
        %2489 = vmatpush1.bf16.msra.mxu0 0
        %2490 = vmatprep.subr.bf16.mxu0 0
        %2491 = vmatpush1.bf16.msra.mxu0 0
        %2492 = vmatprep.mubr.bf16.mxu0 0
        %2493 = vmatmul.mubr.bf16.gmra.mrb[0].mxu0 %v791
        %v2494 = vpop.f32.mrb[0].mxu0
        %v2495 = vadd.f32 0.0, %v2494
        %v2496 = vpop.f32.mrb[0].mxu0
        %v2497 = vadd.f32 0.0, %v2496
        %v2498 = vpop.f32.mrb[0].mxu0
        %v2499 = vadd.f32 0.0, %v2498
        %v2500 = vpop.f32.mrb[0].mxu0
        %v2501 = vadd.f32 0.0, %v2500
        %2502 = vdwg.mxu0
        %2503 = vmatprep.subr.bf16.mxu0 %v1582
        %2504 = vmatpush1.bf16.msra.mxu0 %v1581
        %2505 = vmatprep.subr.bf16.mxu0 %v1614
        %2506 = vmatpush1.bf16.msra.mxu0 %v1613
        %2507 = vmatprep.subr.bf16.mxu0 %v1646
        %2508 = vmatpush1.bf16.msra.mxu0 %v1645
        %2509 = vmatprep.subr.bf16.mxu0 %v1678
        %2510 = vmatpush1.bf16.msra.mxu0 %v1677
        %2511 = vmatprep.subr.bf16.mxu0 %v1710
        %2512 = vmatpush1.bf16.msra.mxu0 %v1709
        %2513 = vmatprep.subr.bf16.mxu0 %v1742
        %2514 = vmatpush1.bf16.msra.mxu0 %v1741
        %2515 = vmatprep.subr.bf16.mxu0 %v1774
        %2516 = vmatpush1.bf16.msra.mxu0 %v1773
        %2517 = vmatprep.subr.bf16.mxu0 %v1806
        %2518 = vmatpush1.bf16.msra.mxu0 %v1805
        %2519 = vmatprep.subr.bf16.mxu0 0
        %2520 = vmatpush1.bf16.msra.mxu0 0
        %2521 = vmatprep.subr.bf16.mxu0 0
        %2522 = vmatpush1.bf16.msra.mxu0 0
        %2523 = vmatprep.subr.bf16.mxu0 0
        %2524 = vmatpush1.bf16.msra.mxu0 0
        %2525 = vmatprep.subr.bf16.mxu0 0
        %2526 = vmatpush1.bf16.msra.mxu0 0
        %2527 = vmatprep.subr.bf16.mxu0 0
        %2528 = vmatpush1.bf16.msra.mxu0 0
        %2529 = vmatprep.subr.bf16.mxu0 0
        %2530 = vmatpush1.bf16.msra.mxu0 0
        %2531 = vmatprep.subr.bf16.mxu0 0
        %2532 = vmatpush1.bf16.msra.mxu0 0
        %2533 = vmatprep.subr.bf16.mxu0 0
        %2534 = vmatpush1.bf16.msra.mxu0 0
        %2535 = vmatprep.mubr.bf16.mxu0 0
        %2536 = vmatmul.mubr.bf16.gmra.mrb[0].mxu0 %v791
        %v2537 = vpop.f32.mrb[0].mxu0
        %v2538 = vadd.f32 0.0, %v2537
        %v2539 = vpop.f32.mrb[0].mxu0
        %v2540 = vadd.f32 0.0, %v2539
        %v2541 = vpop.f32.mrb[0].mxu0
        %v2542 = vadd.f32 0.0, %v2541
        %v2543 = vpop.f32.mrb[0].mxu0
        %v2544 = vadd.f32 0.0, %v2543
        %2545 = vdwg.mxu0
        %2546 = vmatprep.subr.bf16.mxu0 %v1584
        %2547 = vmatpush1.bf16.msra.mxu0 %v1583
        %2548 = vmatprep.subr.bf16.mxu0 %v1616
        %2549 = vmatpush1.bf16.msra.mxu0 %v1615
        %2550 = vmatprep.subr.bf16.mxu0 %v1648
        %2551 = vmatpush1.bf16.msra.mxu0 %v1647
        %2552 = vmatprep.subr.bf16.mxu0 %v1680
        %2553 = vmatpush1.bf16.msra.mxu0 %v1679
        %2554 = vmatprep.subr.bf16.mxu0 %v1712
        %2555 = vmatpush1.bf16.msra.mxu0 %v1711
        %2556 = vmatprep.subr.bf16.mxu0 %v1744
        %2557 = vmatpush1.bf16.msra.mxu0 %v1743
        %2558 = vmatprep.subr.bf16.mxu0 %v1776
        %2559 = vmatpush1.bf16.msra.mxu0 %v1775
        %2560 = vmatprep.subr.bf16.mxu0 %v1808
        %2561 = vmatpush1.bf16.msra.mxu0 %v1807
        %2562 = vmatprep.subr.bf16.mxu0 0
        %2563 = vmatpush1.bf16.msra.mxu0 0
        %2564 = vmatprep.subr.bf16.mxu0 0
        %2565 = vmatpush1.bf16.msra.mxu0 0
        %2566 = vmatprep.subr.bf16.mxu0 0
        %2567 = vmatpush1.bf16.msra.mxu0 0
        %2568 = vmatprep.subr.bf16.mxu0 0
        %2569 = vmatpush1.bf16.msra.mxu0 0
        %2570 = vmatprep.subr.bf16.mxu0 0
        %2571 = vmatpush1.bf16.msra.mxu0 0
        %2572 = vmatprep.subr.bf16.mxu0 0
        %2573 = vmatpush1.bf16.msra.mxu0 0
        %2574 = vmatprep.subr.bf16.mxu0 0
        %2575 = vmatpush1.bf16.msra.mxu0 0
        %2576 = vmatprep.subr.bf16.mxu0 0
        %2577 = vmatpush1.bf16.msra.mxu0 0
        %2578 = vmatprep.mubr.bf16.mxu0 0
        %2579 = vmatmul.mubr.bf16.gmra.mrb[0].mxu0 %v791
        %v2580 = vpop.f32.mrb[0].mxu0
        %v2581 = vadd.f32 0.0, %v2580
        %v2582 = vpop.f32.mrb[0].mxu0
        %v2583 = vadd.f32 0.0, %v2582
        %v2584 = vpop.f32.mrb[0].mxu0
        %v2585 = vadd.f32 0.0, %v2584
        %v2586 = vpop.f32.mrb[0].mxu0
        %v2587 = vadd.f32 0.0, %v2586
        %2588 = vdwg.mxu0
        %2589 = vmatprep.subr.bf16.mxu0 %v1586
        %2590 = vmatpush1.bf16.msra.mxu0 %v1585
        %2591 = vmatprep.subr.bf16.mxu0 %v1618
        %2592 = vmatpush1.bf16.msra.mxu0 %v1617
        %2593 = vmatprep.subr.bf16.mxu0 %v1650
        %2594 = vmatpush1.bf16.msra.mxu0 %v1649
        %2595 = vmatprep.subr.bf16.mxu0 %v1682
        %2596 = vmatpush1.bf16.msra.mxu0 %v1681
        %2597 = vmatprep.subr.bf16.mxu0 %v1714
        %2598 = vmatpush1.bf16.msra.mxu0 %v1713
        %2599 = vmatprep.subr.bf16.mxu0 %v1746
        %2600 = vmatpush1.bf16.msra.mxu0 %v1745
        %2601 = vmatprep.subr.bf16.mxu0 %v1778
        %2602 = vmatpush1.bf16.msra.mxu0 %v1777
        %2603 = vmatprep.subr.bf16.mxu0 %v1810
        %2604 = vmatpush1.bf16.msra.mxu0 %v1809
        %2605 = vmatprep.subr.bf16.mxu0 0
        %2606 = vmatpush1.bf16.msra.mxu0 0
        %2607 = vmatprep.subr.bf16.mxu0 0
        %2608 = vmatpush1.bf16.msra.mxu0 0
        %2609 = vmatprep.subr.bf16.mxu0 0
        %2610 = vmatpush1.bf16.msra.mxu0 0
        %2611 = vmatprep.subr.bf16.mxu0 0
        %2612 = vmatpush1.bf16.msra.mxu0 0
        %2613 = vmatprep.subr.bf16.mxu0 0
        %2614 = vmatpush1.bf16.msra.mxu0 0
        %2615 = vmatprep.subr.bf16.mxu0 0
        %2616 = vmatpush1.bf16.msra.mxu0 0
        %2617 = vmatprep.subr.bf16.mxu0 0
        %2618 = vmatpush1.bf16.msra.mxu0 0
        %2619 = vmatprep.subr.bf16.mxu0 0
        %2620 = vmatpush1.bf16.msra.mxu0 0
        %2621 = vmatprep.mubr.bf16.mxu0 0
        %2622 = vmatmul.mubr.bf16.gmra.mrb[0].mxu0 %v791
        %v2623 = vpop.f32.mrb[0].mxu0
        %v2624 = vadd.f32 0.0, %v2623
        %v2625 = vpop.f32.mrb[0].mxu0
        %v2626 = vadd.f32 0.0, %v2625
        %v2627 = vpop.f32.mrb[0].mxu0
        %v2628 = vadd.f32 0.0, %v2627
        %v2629 = vpop.f32.mrb[0].mxu0
        %v2630 = vadd.f32 0.0, %v2629
        %2631 = vdwg.mxu0
        %2632 = vmatprep.subr.bf16.mxu0 %v1588
        %2633 = vmatpush1.bf16.msra.mxu0 %v1587
        %2634 = vmatprep.subr.bf16.mxu0 %v1620
        %2635 = vmatpush1.bf16.msra.mxu0 %v1619
        %2636 = vmatprep.subr.bf16.mxu0 %v1652
        %2637 = vmatpush1.bf16.msra.mxu0 %v1651
        %2638 = vmatprep.subr.bf16.mxu0 %v1684
        %2639 = vmatpush1.bf16.msra.mxu0 %v1683
        %2640 = vmatprep.subr.bf16.mxu0 %v1716
        %2641 = vmatpush1.bf16.msra.mxu0 %v1715
        %2642 = vmatprep.subr.bf16.mxu0 %v1748
        %2643 = vmatpush1.bf16.msra.mxu0 %v1747
        %2644 = vmatprep.subr.bf16.mxu0 %v1780
        %2645 = vmatpush1.bf16.msra.mxu0 %v1779
        %2646 = vmatprep.subr.bf16.mxu0 %v1812
        %2647 = vmatpush1.bf16.msra.mxu0 %v1811
        %2648 = vmatprep.subr.bf16.mxu0 0
        %2649 = vmatpush1.bf16.msra.mxu0 0
        %2650 = vmatprep.subr.bf16.mxu0 0
        %2651 = vmatpush1.bf16.msra.mxu0 0
        %2652 = vmatprep.subr.bf16.mxu0 0
        %2653 = vmatpush1.bf16.msra.mxu0 0
        %2654 = vmatprep.subr.bf16.mxu0 0
        %2655 = vmatpush1.bf16.msra.mxu0 0
        %2656 = vmatprep.subr.bf16.mxu0 0
        %2657 = vmatpush1.bf16.msra.mxu0 0
        %2658 = vmatprep.subr.bf16.mxu0 0
        %2659 = vmatpush1.bf16.msra.mxu0 0
        %2660 = vmatprep.subr.bf16.mxu0 0
        %2661 = vmatpush1.bf16.msra.mxu0 0
        %2662 = vmatprep.subr.bf16.mxu0 0
        %2663 = vmatpush1.bf16.msra.mxu0 0
        %2664 = vmatprep.mubr.bf16.mxu0 0
        %2665 = vmatmul.mubr.bf16.gmra.mrb[0].mxu0 %v791
        %v2666 = vpop.f32.mrb[0].mxu0
        %v2667 = vadd.f32 0.0, %v2666
        %v2668 = vpop.f32.mrb[0].mxu0
        %v2669 = vadd.f32 0.0, %v2668
        %v2670 = vpop.f32.mrb[0].mxu0
        %v2671 = vadd.f32 0.0, %v2670
        %v2672 = vpop.f32.mrb[0].mxu0
        %v2673 = vadd.f32 0.0, %v2672
        %2674 = vdwg.mxu0
        %2675 = vmatprep.subr.bf16.mxu0 %v1590
        %2676 = vmatpush1.bf16.msra.mxu0 %v1589
        %2677 = vmatprep.subr.bf16.mxu0 %v1622
        %2678 = vmatpush1.bf16.msra.mxu0 %v1621
        %2679 = vmatprep.subr.bf16.mxu0 %v1654
        %2680 = vmatpush1.bf16.msra.mxu0 %v1653
        %2681 = vmatprep.subr.bf16.mxu0 %v1686
        %2682 = vmatpush1.bf16.msra.mxu0 %v1685
        %2683 = vmatprep.subr.bf16.mxu0 %v1718
        %2684 = vmatpush1.bf16.msra.mxu0 %v1717
        %2685 = vmatprep.subr.bf16.mxu0 %v1750
        %2686 = vmatpush1.bf16.msra.mxu0 %v1749
        %2687 = vmatprep.subr.bf16.mxu0 %v1782
        %2688 = vmatpush1.bf16.msra.mxu0 %v1781
        %2689 = vmatprep.subr.bf16.mxu0 %v1814
        %2690 = vmatpush1.bf16.msra.mxu0 %v1813
        %2691 = vmatprep.subr.bf16.mxu0 0
        %2692 = vmatpush1.bf16.msra.mxu0 0
        %2693 = vmatprep.subr.bf16.mxu0 0
        %2694 = vmatpush1.bf16.msra.mxu0 0
        %2695 = vmatprep.subr.bf16.mxu0 0
        %2696 = vmatpush1.bf16.msra.mxu0 0
        %2697 = vmatprep.subr.bf16.mxu0 0
        %2698 = vmatpush1.bf16.msra.mxu0 0
        %2699 = vmatprep.subr.bf16.mxu0 0
        %2700 = vmatpush1.bf16.msra.mxu0 0
        %2701 = vmatprep.subr.bf16.mxu0 0
        %2702 = vmatpush1.bf16.msra.mxu0 0
        %2703 = vmatprep.subr.bf16.mxu0 0
        %2704 = vmatpush1.bf16.msra.mxu0 0
        %2705 = vmatprep.subr.bf16.mxu0 0
        %2706 = vmatpush1.bf16.msra.mxu0 0
        %2707 = vmatprep.mubr.bf16.mxu0 0
        %2708 = vmatmul.mubr.bf16.gmra.mrb[0].mxu0 %v791
        %v2709 = vpop.f32.mrb[0].mxu0
        %v2710 = vadd.f32 0.0, %v2709
        %v2711 = vpop.f32.mrb[0].mxu0
        %v2712 = vadd.f32 0.0, %v2711
        %v2713 = vpop.f32.mrb[0].mxu0
        %v2714 = vadd.f32 0.0, %v2713
        %v2715 = vpop.f32.mrb[0].mxu0
        %v2716 = vadd.f32 0.0, %v2715
        %2717 = vdwg.mxu0
        %2718 = vmatprep.subr.bf16.mxu0 %v1592
        %2719 = vmatpush1.bf16.msra.mxu0 %v1591
        %2720 = vmatprep.subr.bf16.mxu0 %v1624
        %2721 = vmatpush1.bf16.msra.mxu0 %v1623
        %2722 = vmatprep.subr.bf16.mxu0 %v1656
        %2723 = vmatpush1.bf16.msra.mxu0 %v1655
        %2724 = vmatprep.subr.bf16.mxu0 %v1688
        %2725 = vmatpush1.bf16.msra.mxu0 %v1687
        %2726 = vmatprep.subr.bf16.mxu0 %v1720
        %2727 = vmatpush1.bf16.msra.mxu0 %v1719
        %2728 = vmatprep.subr.bf16.mxu0 %v1752
        %2729 = vmatpush1.bf16.msra.mxu0 %v1751
        %2730 = vmatprep.subr.bf16.mxu0 %v1784
        %2731 = vmatpush1.bf16.msra.mxu0 %v1783
        %2732 = vmatprep.subr.bf16.mxu0 %v1816
        %2733 = vmatpush1.bf16.msra.mxu0 %v1815
        %2734 = vmatprep.subr.bf16.mxu0 0
        %2735 = vmatpush1.bf16.msra.mxu0 0
        %2736 = vmatprep.subr.bf16.mxu0 0
        %2737 = vmatpush1.bf16.msra.mxu0 0
        %2738 = vmatprep.subr.bf16.mxu0 0
        %2739 = vmatpush1.bf16.msra.mxu0 0
        %2740 = vmatprep.subr.bf16.mxu0 0
        %2741 = vmatpush1.bf16.msra.mxu0 0
        %2742 = vmatprep.subr.bf16.mxu0 0
        %2743 = vmatpush1.bf16.msra.mxu0 0
        %2744 = vmatprep.subr.bf16.mxu0 0
        %2745 = vmatpush1.bf16.msra.mxu0 0
        %2746 = vmatprep.subr.bf16.mxu0 0
        %2747 = vmatpush1.bf16.msra.mxu0 0
        %2748 = vmatprep.subr.bf16.mxu0 0
        %2749 = vmatpush1.bf16.msra.mxu0 0
        %2750 = vmatprep.mubr.bf16.mxu0 0
        %2751 = vmatmul.mubr.bf16.gmra.mrb[0].mxu0 %v791
        %v2752 = vpop.f32.mrb[0].mxu0
        %v2753 = vadd.f32 0.0, %v2752
        %v2754 = vpop.f32.mrb[0].mxu0
        %v2755 = vadd.f32 0.0, %v2754
        %v2756 = vpop.f32.mrb[0].mxu0
        %v2757 = vadd.f32 0.0, %v2756
        %v2758 = vpop.f32.mrb[0].mxu0
        %v2759 = vadd.f32 0.0, %v2758
        %2760 = vdwg.mxu0
        %v2763 = vunpack.c.l.b16 %v271
        %v2764 = vunpack.c.l.b16 %v272
        %v2765 = vpack.c.b16 %v2764, %v2763
        %v3023 = vunpack.c.l.b16 %v273
        %v3024 = vunpack.c.h.b16 %v273
        %v3025 = vunpack.c.l.b16 %v274
        %v3026 = vunpack.c.h.b16 %v274
        %v3027 = vunpack.c.l.b16 %v275
        %v3028 = vunpack.c.h.b16 %v275
        %v3029 = vunpack.c.l.b16 %v276
        %v3030 = vunpack.c.h.b16 %v276
        %v3031 = vunpack.c.l.b16 %v277
        %v3032 = vunpack.c.h.b16 %v277
        %v3033 = vunpack.c.l.b16 %v278
        %v3034 = vunpack.c.h.b16 %v278
        %v3035 = vunpack.c.l.b16 %v279
        %v3036 = vunpack.c.h.b16 %v279
        %v3037 = vunpack.c.l.b16 %v280
        %v3038 = vunpack.c.h.b16 %v280
        %v3039 = vunpack.c.l.b16 %v281
        %v3040 = vunpack.c.h.b16 %v281
        %v3041 = vunpack.c.l.b16 %v282
        %v3042 = vunpack.c.h.b16 %v282
        %v3043 = vunpack.c.l.b16 %v283
        %v3044 = vunpack.c.h.b16 %v283
        %v3045 = vunpack.c.l.b16 %v284
        %v3046 = vunpack.c.h.b16 %v284
        %v3047 = vunpack.c.l.b16 %v285
        %v3048 = vunpack.c.h.b16 %v285
        %v3049 = vunpack.c.l.b16 %v286
        %v3050 = vunpack.c.h.b16 %v286
        %v3051 = vunpack.c.l.b16 %v287
        %v3052 = vunpack.c.h.b16 %v287
        %v3053 = vunpack.c.l.b16 %v288
        %v3054 = vunpack.c.h.b16 %v288
        %v3055 = vunpack.c.l.b16 %v289
        %v3056 = vunpack.c.h.b16 %v289
        %v3057 = vunpack.c.l.b16 %v290
        %v3058 = vunpack.c.h.b16 %v290
        %v3059 = vunpack.c.l.b16 %v291
        %v3060 = vunpack.c.h.b16 %v291
        %v3061 = vunpack.c.l.b16 %v292
        %v3062 = vunpack.c.h.b16 %v292
        %v3063 = vunpack.c.l.b16 %v293
        %v3064 = vunpack.c.h.b16 %v293
        %v3065 = vunpack.c.l.b16 %v294
        %v3066 = vunpack.c.h.b16 %v294
        %v3067 = vunpack.c.l.b16 %v295
        %v3068 = vunpack.c.h.b16 %v295
        %v3069 = vunpack.c.l.b16 %v296
        %v3070 = vunpack.c.h.b16 %v296
        %v3071 = vunpack.c.l.b16 %v297
        %v3072 = vunpack.c.h.b16 %v297
        %v3073 = vunpack.c.l.b16 %v298
        %v3074 = vunpack.c.h.b16 %v298
        %v3075 = vunpack.c.l.b16 %v299
        %v3076 = vunpack.c.h.b16 %v299
        %v3077 = vunpack.c.l.b16 %v300
        %v3078 = vunpack.c.h.b16 %v300
        %v3079 = vunpack.c.l.b16 %v301
        %v3080 = vunpack.c.h.b16 %v301
        %v3081 = vunpack.c.l.b16 %v302
        %v3082 = vunpack.c.h.b16 %v302
        %v3083 = vunpack.c.l.b16 %v303
        %v3084 = vunpack.c.h.b16 %v303
        %v3085 = vunpack.c.l.b16 %v304
        %v3086 = vunpack.c.h.b16 %v304
        %v3087 = vunpack.c.l.b16 %v305
        %v3088 = vunpack.c.h.b16 %v305
        %v3089 = vunpack.c.l.b16 %v306
        %v3090 = vunpack.c.h.b16 %v306
        %v3091 = vunpack.c.l.b16 %v307
        %v3092 = vunpack.c.h.b16 %v307
        %v3093 = vunpack.c.l.b16 %v308
        %v3094 = vunpack.c.h.b16 %v308
        %v3095 = vunpack.c.l.b16 %v309
        %v3096 = vunpack.c.h.b16 %v309
        %v3097 = vunpack.c.l.b16 %v310
        %v3098 = vunpack.c.h.b16 %v310
        %v3099 = vunpack.c.l.b16 %v311
        %v3100 = vunpack.c.h.b16 %v311
        %v3101 = vunpack.c.l.b16 %v312
        %v3102 = vunpack.c.h.b16 %v312
        %v3103 = vunpack.c.l.b16 %v313
        %v3104 = vunpack.c.h.b16 %v313
        %v3105 = vunpack.c.l.b16 %v314
        %v3106 = vunpack.c.h.b16 %v314
        %v3107 = vunpack.c.l.b16 %v315
        %v3108 = vunpack.c.h.b16 %v315
        %v3109 = vunpack.c.l.b16 %v316
        %v3110 = vunpack.c.h.b16 %v316
        %v3111 = vunpack.c.l.b16 %v317
        %v3112 = vunpack.c.h.b16 %v317
        %v3113 = vunpack.c.l.b16 %v318
        %v3114 = vunpack.c.h.b16 %v318
        %v3115 = vunpack.c.l.b16 %v319
        %v3116 = vunpack.c.h.b16 %v319
        %v3117 = vunpack.c.l.b16 %v320
        %v3118 = vunpack.c.h.b16 %v320
        %v3119 = vunpack.c.l.b16 %v321
        %v3120 = vunpack.c.h.b16 %v321
        %v3121 = vunpack.c.l.b16 %v322
        %v3122 = vunpack.c.h.b16 %v322
        %v3123 = vunpack.c.l.b16 %v323
        %v3124 = vunpack.c.h.b16 %v323
        %v3125 = vunpack.c.l.b16 %v324
        %v3126 = vunpack.c.h.b16 %v324
        %v3127 = vunpack.c.l.b16 %v325
        %v3128 = vunpack.c.h.b16 %v325
        %v3129 = vunpack.c.l.b16 %v326
        %v3130 = vunpack.c.h.b16 %v326
        %v3131 = vunpack.c.l.b16 %v327
        %v3132 = vunpack.c.h.b16 %v327
        %v3133 = vunpack.c.l.b16 %v328
        %v3134 = vunpack.c.h.b16 %v328
        %v3135 = vunpack.c.l.b16 %v329
        %v3136 = vunpack.c.h.b16 %v329
        %v3137 = vunpack.c.l.b16 %v330
        %v3138 = vunpack.c.h.b16 %v330
        %v3139 = vunpack.c.l.b16 %v331
        %v3140 = vunpack.c.h.b16 %v331
        %v3141 = vunpack.c.l.b16 %v332
        %v3142 = vunpack.c.h.b16 %v332
        %v3143 = vunpack.c.l.b16 %v333
        %v3144 = vunpack.c.h.b16 %v333
        %v3145 = vunpack.c.l.b16 %v334
        %v3146 = vunpack.c.h.b16 %v334
        %v3147 = vunpack.c.l.b16 %v335
        %v3148 = vunpack.c.h.b16 %v335
        %v3149 = vunpack.c.l.b16 %v336
        %v3150 = vunpack.c.h.b16 %v336
        %v3151 = vunpack.c.l.b16 %v337
        %v3152 = vunpack.c.h.b16 %v337
        %v3153 = vunpack.c.l.b16 %v338
        %v3154 = vunpack.c.h.b16 %v338
        %v3155 = vunpack.c.l.b16 %v339
        %v3156 = vunpack.c.h.b16 %v339
        %v3157 = vunpack.c.l.b16 %v340
        %v3158 = vunpack.c.h.b16 %v340
        %v3159 = vunpack.c.l.b16 %v341
        %v3160 = vunpack.c.h.b16 %v341
        %v3161 = vunpack.c.l.b16 %v342
        %v3162 = vunpack.c.h.b16 %v342
        %v3163 = vunpack.c.l.b16 %v343
        %v3164 = vunpack.c.h.b16 %v343
        %v3165 = vunpack.c.l.b16 %v344
        %v3166 = vunpack.c.h.b16 %v344
        %v3167 = vunpack.c.l.b16 %v345
        %v3168 = vunpack.c.h.b16 %v345
        %v3169 = vunpack.c.l.b16 %v346
        %v3170 = vunpack.c.h.b16 %v346
        %v3171 = vunpack.c.l.b16 %v347
        %v3172 = vunpack.c.h.b16 %v347
        %v3173 = vunpack.c.l.b16 %v348
        %v3174 = vunpack.c.h.b16 %v348
        %v3175 = vunpack.c.l.b16 %v349
        %v3176 = vunpack.c.h.b16 %v349
        %v3177 = vunpack.c.l.b16 %v350
        %v3178 = vunpack.c.h.b16 %v350
        %v3179 = vunpack.c.l.b16 %v351
        %v3180 = vunpack.c.h.b16 %v351
        %v3181 = vunpack.c.l.b16 %v352
        %v3182 = vunpack.c.h.b16 %v352
        %v3183 = vunpack.c.l.b16 %v353
        %v3184 = vunpack.c.h.b16 %v353
        %v3185 = vunpack.c.l.b16 %v354
        %v3186 = vunpack.c.h.b16 %v354
        %v3187 = vunpack.c.l.b16 %v355
        %v3188 = vunpack.c.h.b16 %v355
        %v3189 = vunpack.c.l.b16 %v356
        %v3190 = vunpack.c.h.b16 %v356
        %v3191 = vunpack.c.l.b16 %v357
        %v3192 = vunpack.c.h.b16 %v357
        %v3193 = vunpack.c.l.b16 %v358
        %v3194 = vunpack.c.h.b16 %v358
        %v3195 = vunpack.c.l.b16 %v359
        %v3196 = vunpack.c.h.b16 %v359
        %v3197 = vunpack.c.l.b16 %v360
        %v3198 = vunpack.c.h.b16 %v360
        %v3199 = vunpack.c.l.b16 %v361
        %v3200 = vunpack.c.h.b16 %v361
        %v3201 = vunpack.c.l.b16 %v362
        %v3202 = vunpack.c.h.b16 %v362
        %v3203 = vunpack.c.l.b16 %v363
        %v3204 = vunpack.c.h.b16 %v363
        %v3205 = vunpack.c.l.b16 %v364
        %v3206 = vunpack.c.h.b16 %v364
        %v3207 = vunpack.c.l.b16 %v365
        %v3208 = vunpack.c.h.b16 %v365
        %v3209 = vunpack.c.l.b16 %v366
        %v3210 = vunpack.c.h.b16 %v366
        %v3211 = vunpack.c.l.b16 %v367
        %v3212 = vunpack.c.h.b16 %v367
        %v3213 = vunpack.c.l.b16 %v368
        %v3214 = vunpack.c.h.b16 %v368
        %v3215 = vunpack.c.l.b16 %v369
        %v3216 = vunpack.c.h.b16 %v369
        %v3217 = vunpack.c.l.b16 %v370
        %v3218 = vunpack.c.h.b16 %v370
        %v3219 = vunpack.c.l.b16 %v371
        %v3220 = vunpack.c.h.b16 %v371
        %v3221 = vunpack.c.l.b16 %v372
        %v3222 = vunpack.c.h.b16 %v372
        %v3223 = vunpack.c.l.b16 %v373
        %v3224 = vunpack.c.h.b16 %v373
        %v3225 = vunpack.c.l.b16 %v374
        %v3226 = vunpack.c.h.b16 %v374
        %v3227 = vunpack.c.l.b16 %v375
        %v3228 = vunpack.c.h.b16 %v375
        %v3229 = vunpack.c.l.b16 %v376
        %v3230 = vunpack.c.h.b16 %v376
        %v3231 = vunpack.c.l.b16 %v377
        %v3232 = vunpack.c.h.b16 %v377
        %v3233 = vunpack.c.l.b16 %v378
        %v3234 = vunpack.c.h.b16 %v378
        %v3235 = vunpack.c.l.b16 %v379
        %v3236 = vunpack.c.h.b16 %v379
        %v3237 = vunpack.c.l.b16 %v380
        %v3238 = vunpack.c.h.b16 %v380
        %v3239 = vunpack.c.l.b16 %v381
        %v3240 = vunpack.c.h.b16 %v381
        %v3241 = vunpack.c.l.b16 %v382
        %v3242 = vunpack.c.h.b16 %v382
        %v3243 = vunpack.c.l.b16 %v383
        %v3244 = vunpack.c.h.b16 %v383
        %v3245 = vunpack.c.l.b16 %v384
        %v3246 = vunpack.c.h.b16 %v384
        %v3247 = vunpack.c.l.b16 %v385
        %v3248 = vunpack.c.h.b16 %v385
        %v3249 = vunpack.c.l.b16 %v386
        %v3250 = vunpack.c.h.b16 %v386
        %v3251 = vunpack.c.l.b16 %v387
        %v3252 = vunpack.c.h.b16 %v387
        %v3253 = vunpack.c.l.b16 %v388
        %v3254 = vunpack.c.h.b16 %v388
        %v3255 = vunpack.c.l.b16 %v389
        %v3256 = vunpack.c.h.b16 %v389
        %v3257 = vunpack.c.l.b16 %v390
        %v3258 = vunpack.c.h.b16 %v390
        %v3259 = vunpack.c.l.b16 %v391
        %v3260 = vunpack.c.h.b16 %v391
        %v3261 = vunpack.c.l.b16 %v392
        %v3262 = vunpack.c.h.b16 %v392
        %v3263 = vunpack.c.l.b16 %v393
        %v3264 = vunpack.c.h.b16 %v393
        %v3265 = vunpack.c.l.b16 %v394
        %v3266 = vunpack.c.h.b16 %v394
        %v3267 = vunpack.c.l.b16 %v395
        %v3268 = vunpack.c.h.b16 %v395
        %v3269 = vunpack.c.l.b16 %v396
        %v3270 = vunpack.c.h.b16 %v396
        %v3271 = vunpack.c.l.b16 %v397
        %v3272 = vunpack.c.h.b16 %v397
        %v3273 = vunpack.c.l.b16 %v398
        %v3274 = vunpack.c.h.b16 %v398
        %v3275 = vunpack.c.l.b16 %v399
        %v3276 = vunpack.c.h.b16 %v399
        %v3277 = vunpack.c.l.b16 %v400
        %v3278 = vunpack.c.h.b16 %v400
        %v3279 = vunpack.c.l.b16 %v401
        %v3280 = vunpack.c.h.b16 %v401
        %v3281 = vunpack.c.l.b16 %v402
        %v3282 = vunpack.c.h.b16 %v402
        %v3283 = vunpack.c.l.b16 %v403
        %v3284 = vunpack.c.h.b16 %v403
        %v3285 = vunpack.c.l.b16 %v404
        %v3286 = vunpack.c.h.b16 %v404
        %v3287 = vunpack.c.l.b16 %v405
        %v3288 = vunpack.c.h.b16 %v405
        %v3289 = vunpack.c.l.b16 %v406
        %v3290 = vunpack.c.h.b16 %v406
        %v3291 = vunpack.c.l.b16 %v407
        %v3292 = vunpack.c.h.b16 %v407
        %v3293 = vunpack.c.l.b16 %v408
        %v3294 = vunpack.c.h.b16 %v408
        %v3295 = vunpack.c.l.b16 %v409
        %v3296 = vunpack.c.h.b16 %v409
        %v3297 = vunpack.c.l.b16 %v410
        %v3298 = vunpack.c.h.b16 %v410
        %v3299 = vunpack.c.l.b16 %v411
        %v3300 = vunpack.c.h.b16 %v411
        %v3301 = vunpack.c.l.b16 %v412
        %v3302 = vunpack.c.h.b16 %v412
        %v3303 = vunpack.c.l.b16 %v413
        %v3304 = vunpack.c.h.b16 %v413
        %v3305 = vunpack.c.l.b16 %v414
        %v3306 = vunpack.c.h.b16 %v414
        %v3307 = vunpack.c.l.b16 %v415
        %v3308 = vunpack.c.h.b16 %v415
        %v3309 = vunpack.c.l.b16 %v416
        %v3310 = vunpack.c.h.b16 %v416
        %v3311 = vunpack.c.l.b16 %v417
        %v3312 = vunpack.c.h.b16 %v417
        %v3313 = vunpack.c.l.b16 %v418
        %v3314 = vunpack.c.h.b16 %v418
        %v3315 = vunpack.c.l.b16 %v419
        %v3316 = vunpack.c.h.b16 %v419
        %v3317 = vunpack.c.l.b16 %v420
        %v3318 = vunpack.c.h.b16 %v420
        %v3319 = vunpack.c.l.b16 %v421
        %v3320 = vunpack.c.h.b16 %v421
        %v3321 = vunpack.c.l.b16 %v422
        %v3322 = vunpack.c.h.b16 %v422
        %v3323 = vunpack.c.l.b16 %v423
        %v3324 = vunpack.c.h.b16 %v423
        %v3325 = vunpack.c.l.b16 %v424
        %v3326 = vunpack.c.h.b16 %v424
        %v3327 = vunpack.c.l.b16 %v425
        %v3328 = vunpack.c.h.b16 %v425
        %v3329 = vunpack.c.l.b16 %v426
        %v3330 = vunpack.c.h.b16 %v426
        %v3331 = vunpack.c.l.b16 %v427
        %v3332 = vunpack.c.h.b16 %v427
        %v3333 = vunpack.c.l.b16 %v428
        %v3334 = vunpack.c.h.b16 %v428
        %v3335 = vunpack.c.l.b16 %v429
        %v3336 = vunpack.c.h.b16 %v429
        %v3337 = vunpack.c.l.b16 %v430
        %v3338 = vunpack.c.h.b16 %v430
        %v3339 = vunpack.c.l.b16 %v431
        %v3340 = vunpack.c.h.b16 %v431
        %v3341 = vunpack.c.l.b16 %v432
        %v3342 = vunpack.c.h.b16 %v432
        %v3343 = vunpack.c.l.b16 %v433
        %v3344 = vunpack.c.h.b16 %v433
        %v3345 = vunpack.c.l.b16 %v434
        %v3346 = vunpack.c.h.b16 %v434
        %v3347 = vunpack.c.l.b16 %v435
        %v3348 = vunpack.c.h.b16 %v435
        %v3349 = vunpack.c.l.b16 %v436
        %v3350 = vunpack.c.h.b16 %v436
        %v3351 = vunpack.c.l.b16 %v437
        %v3352 = vunpack.c.h.b16 %v437
        %v3353 = vunpack.c.l.b16 %v438
        %v3354 = vunpack.c.h.b16 %v438
        %v3355 = vunpack.c.l.b16 %v439
        %v3356 = vunpack.c.h.b16 %v439
        %v3357 = vunpack.c.l.b16 %v440
        %v3358 = vunpack.c.h.b16 %v440
        %v3359 = vunpack.c.l.b16 %v441
        %v3360 = vunpack.c.h.b16 %v441
        %v3361 = vunpack.c.l.b16 %v442
        %v3362 = vunpack.c.h.b16 %v442
        %v3363 = vunpack.c.l.b16 %v443
        %v3364 = vunpack.c.h.b16 %v443
        %v3365 = vunpack.c.l.b16 %v444
        %v3366 = vunpack.c.h.b16 %v444
        %v3367 = vunpack.c.l.b16 %v445
        %v3368 = vunpack.c.h.b16 %v445
        %v3369 = vunpack.c.l.b16 %v446
        %v3370 = vunpack.c.h.b16 %v446
        %v3371 = vunpack.c.l.b16 %v447
        %v3372 = vunpack.c.h.b16 %v447
        %v3373 = vunpack.c.l.b16 %v448
        %v3374 = vunpack.c.h.b16 %v448
        %v3375 = vunpack.c.l.b16 %v449
        %v3376 = vunpack.c.h.b16 %v449
        %v3377 = vunpack.c.l.b16 %v450
        %v3378 = vunpack.c.h.b16 %v450
        %v3379 = vunpack.c.l.b16 %v451
        %v3380 = vunpack.c.h.b16 %v451
        %v3381 = vunpack.c.l.b16 %v452
        %v3382 = vunpack.c.h.b16 %v452
        %v3383 = vunpack.c.l.b16 %v453
        %v3384 = vunpack.c.h.b16 %v453
        %v3385 = vunpack.c.l.b16 %v454
        %v3386 = vunpack.c.h.b16 %v454
        %v3387 = vunpack.c.l.b16 %v455
        %v3388 = vunpack.c.h.b16 %v455
        %v3389 = vunpack.c.l.b16 %v456
        %v3390 = vunpack.c.h.b16 %v456
        %v3391 = vunpack.c.l.b16 %v457
        %v3392 = vunpack.c.h.b16 %v457
        %v3393 = vunpack.c.l.b16 %v458
        %v3394 = vunpack.c.h.b16 %v458
        %v3395 = vunpack.c.l.b16 %v459
        %v3396 = vunpack.c.h.b16 %v459
        %v3397 = vunpack.c.l.b16 %v460
        %v3398 = vunpack.c.h.b16 %v460
        %v3399 = vunpack.c.l.b16 %v461
        %v3400 = vunpack.c.h.b16 %v461
        %v3401 = vunpack.c.l.b16 %v462
        %v3402 = vunpack.c.h.b16 %v462
        %v3403 = vunpack.c.l.b16 %v463
        %v3404 = vunpack.c.h.b16 %v463
        %v3405 = vunpack.c.l.b16 %v464
        %v3406 = vunpack.c.h.b16 %v464
        %v3407 = vunpack.c.l.b16 %v465
        %v3408 = vunpack.c.h.b16 %v465
        %v3409 = vunpack.c.l.b16 %v466
        %v3410 = vunpack.c.h.b16 %v466
        %v3411 = vunpack.c.l.b16 %v467
        %v3412 = vunpack.c.h.b16 %v467
        %v3413 = vunpack.c.l.b16 %v468
        %v3414 = vunpack.c.h.b16 %v468
        %v3415 = vunpack.c.l.b16 %v469
        %v3416 = vunpack.c.h.b16 %v469
        %v3417 = vunpack.c.l.b16 %v470
        %v3418 = vunpack.c.h.b16 %v470
        %v3419 = vunpack.c.l.b16 %v471
        %v3420 = vunpack.c.h.b16 %v471
        %v3421 = vunpack.c.l.b16 %v472
        %v3422 = vunpack.c.h.b16 %v472
        %v3423 = vunpack.c.l.b16 %v473
        %v3424 = vunpack.c.h.b16 %v473
        %v3425 = vunpack.c.l.b16 %v474
        %v3426 = vunpack.c.h.b16 %v474
        %v3427 = vunpack.c.l.b16 %v475
        %v3428 = vunpack.c.h.b16 %v475
        %v3429 = vunpack.c.l.b16 %v476
        %v3430 = vunpack.c.h.b16 %v476
        %v3431 = vunpack.c.l.b16 %v477
        %v3432 = vunpack.c.h.b16 %v477
        %v3433 = vunpack.c.l.b16 %v478
        %v3434 = vunpack.c.h.b16 %v478
        %v3435 = vunpack.c.l.b16 %v479
        %v3436 = vunpack.c.h.b16 %v479
        %v3437 = vunpack.c.l.b16 %v480
        %v3438 = vunpack.c.h.b16 %v480
        %v3439 = vunpack.c.l.b16 %v481
        %v3440 = vunpack.c.h.b16 %v481
        %v3441 = vunpack.c.l.b16 %v482
        %v3442 = vunpack.c.h.b16 %v482
        %v3443 = vunpack.c.l.b16 %v483
        %v3444 = vunpack.c.h.b16 %v483
        %v3445 = vunpack.c.l.b16 %v484
        %v3446 = vunpack.c.h.b16 %v484
        %v3447 = vunpack.c.l.b16 %v485
        %v3448 = vunpack.c.h.b16 %v485
        %v3449 = vunpack.c.l.b16 %v486
        %v3450 = vunpack.c.h.b16 %v486
        %v3451 = vunpack.c.l.b16 %v487
        %v3452 = vunpack.c.h.b16 %v487
        %v3453 = vunpack.c.l.b16 %v488
        %v3454 = vunpack.c.h.b16 %v488
        %v3455 = vunpack.c.l.b16 %v489
        %v3456 = vunpack.c.h.b16 %v489
        %v3457 = vunpack.c.l.b16 %v490
        %v3458 = vunpack.c.h.b16 %v490
        %v3459 = vunpack.c.l.b16 %v491
        %v3460 = vunpack.c.h.b16 %v491
        %v3461 = vunpack.c.l.b16 %v492
        %v3462 = vunpack.c.h.b16 %v492
        %v3463 = vunpack.c.l.b16 %v493
        %v3464 = vunpack.c.h.b16 %v493
        %v3465 = vunpack.c.l.b16 %v494
        %v3466 = vunpack.c.h.b16 %v494
        %v3467 = vunpack.c.l.b16 %v495
        %v3468 = vunpack.c.h.b16 %v495
        %v3469 = vunpack.c.l.b16 %v496
        %v3470 = vunpack.c.h.b16 %v496
        %v3471 = vunpack.c.l.b16 %v497
        %v3472 = vunpack.c.h.b16 %v497
        %v3473 = vunpack.c.l.b16 %v498
        %v3474 = vunpack.c.h.b16 %v498
        %v3475 = vunpack.c.l.b16 %v499
        %v3476 = vunpack.c.h.b16 %v499
        %v3477 = vunpack.c.l.b16 %v500
        %v3478 = vunpack.c.h.b16 %v500
        %v3479 = vunpack.c.l.b16 %v501
        %v3480 = vunpack.c.h.b16 %v501
        %v3481 = vunpack.c.l.b16 %v502
        %v3482 = vunpack.c.h.b16 %v502
        %v3483 = vunpack.c.l.b16 %v503
        %v3484 = vunpack.c.h.b16 %v503
        %v3485 = vunpack.c.l.b16 %v504
        %v3486 = vunpack.c.h.b16 %v504
        %v3487 = vunpack.c.l.b16 %v505
        %v3488 = vunpack.c.h.b16 %v505
        %v3489 = vunpack.c.l.b16 %v506
        %v3490 = vunpack.c.h.b16 %v506
        %v3491 = vunpack.c.l.b16 %v507
        %v3492 = vunpack.c.h.b16 %v507
        %v3493 = vunpack.c.l.b16 %v508
        %v3494 = vunpack.c.h.b16 %v508
        %v3495 = vunpack.c.l.b16 %v509
        %v3496 = vunpack.c.h.b16 %v509
        %v3497 = vunpack.c.l.b16 %v510
        %v3498 = vunpack.c.h.b16 %v510
        %v3499 = vunpack.c.l.b16 %v511
        %v3500 = vunpack.c.h.b16 %v511
        %v3501 = vunpack.c.l.b16 %v512
        %v3502 = vunpack.c.h.b16 %v512
        %v3503 = vunpack.c.l.b16 %v513
        %v3504 = vunpack.c.h.b16 %v513
        %v3505 = vunpack.c.l.b16 %v514
        %v3506 = vunpack.c.h.b16 %v514
        %v3507 = vunpack.c.l.b16 %v515
        %v3508 = vunpack.c.h.b16 %v515
        %v3509 = vunpack.c.l.b16 %v516
        %v3510 = vunpack.c.h.b16 %v516
        %v3511 = vunpack.c.l.b16 %v517
        %v3512 = vunpack.c.h.b16 %v517
        %v3513 = vunpack.c.l.b16 %v518
        %v3514 = vunpack.c.h.b16 %v518
        %v3515 = vunpack.c.l.b16 %v519
        %v3516 = vunpack.c.h.b16 %v519
        %v3517 = vunpack.c.l.b16 %v520
        %v3518 = vunpack.c.h.b16 %v520
        %v3519 = vunpack.c.l.b16 %v521
        %v3520 = vunpack.c.h.b16 %v521
        %v3521 = vunpack.c.l.b16 %v522
        %v3522 = vunpack.c.h.b16 %v522
        %v3523 = vunpack.c.l.b16 %v523
        %v3524 = vunpack.c.h.b16 %v523
        %v3525 = vunpack.c.l.b16 %v524
        %v3526 = vunpack.c.h.b16 %v524
        %v3527 = vunpack.c.l.b16 %v525
        %v3528 = vunpack.c.h.b16 %v525
        %v3529 = vunpack.c.l.b16 %v526
        %v3530 = vunpack.c.h.b16 %v526
        %v3531 = vunpack.c.l.b16 %v527
        %v3532 = vunpack.c.h.b16 %v527
        %v3533 = vunpack.c.l.b16 %v528
        %v3534 = vunpack.c.h.b16 %v528
        %v3535 = vpack.c.b16 %v3055, %v3023
        %v3536 = vpack.c.b16 %v3056, %v3024
        %v3537 = vpack.c.b16 %v3057, %v3025
        %v3538 = vpack.c.b16 %v3058, %v3026
        %v3539 = vpack.c.b16 %v3059, %v3027
        %v3540 = vpack.c.b16 %v3060, %v3028
        %v3541 = vpack.c.b16 %v3061, %v3029
        %v3542 = vpack.c.b16 %v3062, %v3030
        %v3543 = vpack.c.b16 %v3063, %v3031
        %v3544 = vpack.c.b16 %v3064, %v3032
        %v3545 = vpack.c.b16 %v3065, %v3033
        %v3546 = vpack.c.b16 %v3066, %v3034
        %v3547 = vpack.c.b16 %v3067, %v3035
        %v3548 = vpack.c.b16 %v3068, %v3036
        %v3549 = vpack.c.b16 %v3069, %v3037
        %v3550 = vpack.c.b16 %v3070, %v3038
        %v3551 = vpack.c.b16 %v3071, %v3039
        %v3552 = vpack.c.b16 %v3072, %v3040
        %v3553 = vpack.c.b16 %v3073, %v3041
        %v3554 = vpack.c.b16 %v3074, %v3042
        %v3555 = vpack.c.b16 %v3075, %v3043
        %v3556 = vpack.c.b16 %v3076, %v3044
        %v3557 = vpack.c.b16 %v3077, %v3045
        %v3558 = vpack.c.b16 %v3078, %v3046
        %v3559 = vpack.c.b16 %v3079, %v3047
        %v3560 = vpack.c.b16 %v3080, %v3048
        %v3561 = vpack.c.b16 %v3081, %v3049
        %v3562 = vpack.c.b16 %v3082, %v3050
        %v3563 = vpack.c.b16 %v3083, %v3051
        %v3564 = vpack.c.b16 %v3084, %v3052
        %v3565 = vpack.c.b16 %v3085, %v3053
        %v3566 = vpack.c.b16 %v3086, %v3054
        %v3567 = vpack.c.b16 %v3119, %v3087
        %v3568 = vpack.c.b16 %v3120, %v3088
        %v3569 = vpack.c.b16 %v3121, %v3089
        %v3570 = vpack.c.b16 %v3122, %v3090
        %v3571 = vpack.c.b16 %v3123, %v3091
        %v3572 = vpack.c.b16 %v3124, %v3092
        %v3573 = vpack.c.b16 %v3125, %v3093
        %v3574 = vpack.c.b16 %v3126, %v3094
        %v3575 = vpack.c.b16 %v3127, %v3095
        %v3576 = vpack.c.b16 %v3128, %v3096
        %v3577 = vpack.c.b16 %v3129, %v3097
        %v3578 = vpack.c.b16 %v3130, %v3098
        %v3579 = vpack.c.b16 %v3131, %v3099
        %v3580 = vpack.c.b16 %v3132, %v3100
        %v3581 = vpack.c.b16 %v3133, %v3101
        %v3582 = vpack.c.b16 %v3134, %v3102
        %v3583 = vpack.c.b16 %v3135, %v3103
        %v3584 = vpack.c.b16 %v3136, %v3104
        %v3585 = vpack.c.b16 %v3137, %v3105
        %v3586 = vpack.c.b16 %v3138, %v3106
        %v3587 = vpack.c.b16 %v3139, %v3107
        %v3588 = vpack.c.b16 %v3140, %v3108
        %v3589 = vpack.c.b16 %v3141, %v3109
        %v3590 = vpack.c.b16 %v3142, %v3110
        %v3591 = vpack.c.b16 %v3143, %v3111
        %v3592 = vpack.c.b16 %v3144, %v3112
        %v3593 = vpack.c.b16 %v3145, %v3113
        %v3594 = vpack.c.b16 %v3146, %v3114
        %v3595 = vpack.c.b16 %v3147, %v3115
        %v3596 = vpack.c.b16 %v3148, %v3116
        %v3597 = vpack.c.b16 %v3149, %v3117
        %v3598 = vpack.c.b16 %v3150, %v3118
        %v3599 = vpack.c.b16 %v3183, %v3151
        %v3600 = vpack.c.b16 %v3184, %v3152
        %v3601 = vpack.c.b16 %v3185, %v3153
        %v3602 = vpack.c.b16 %v3186, %v3154
        %v3603 = vpack.c.b16 %v3187, %v3155
        %v3604 = vpack.c.b16 %v3188, %v3156
        %v3605 = vpack.c.b16 %v3189, %v3157
        %v3606 = vpack.c.b16 %v3190, %v3158
        %v3607 = vpack.c.b16 %v3191, %v3159
        %v3608 = vpack.c.b16 %v3192, %v3160
        %v3609 = vpack.c.b16 %v3193, %v3161
        %v3610 = vpack.c.b16 %v3194, %v3162
        %v3611 = vpack.c.b16 %v3195, %v3163
        %v3612 = vpack.c.b16 %v3196, %v3164
        %v3613 = vpack.c.b16 %v3197, %v3165
        %v3614 = vpack.c.b16 %v3198, %v3166
        %v3615 = vpack.c.b16 %v3199, %v3167
        %v3616 = vpack.c.b16 %v3200, %v3168
        %v3617 = vpack.c.b16 %v3201, %v3169
        %v3618 = vpack.c.b16 %v3202, %v3170
        %v3619 = vpack.c.b16 %v3203, %v3171
        %v3620 = vpack.c.b16 %v3204, %v3172
        %v3621 = vpack.c.b16 %v3205, %v3173
        %v3622 = vpack.c.b16 %v3206, %v3174
        %v3623 = vpack.c.b16 %v3207, %v3175
        %v3624 = vpack.c.b16 %v3208, %v3176
        %v3625 = vpack.c.b16 %v3209, %v3177
        %v3626 = vpack.c.b16 %v3210, %v3178
        %v3627 = vpack.c.b16 %v3211, %v3179
        %v3628 = vpack.c.b16 %v3212, %v3180
        %v3629 = vpack.c.b16 %v3213, %v3181
        %v3630 = vpack.c.b16 %v3214, %v3182
        %v3631 = vpack.c.b16 %v3247, %v3215
        %v3632 = vpack.c.b16 %v3248, %v3216
        %v3633 = vpack.c.b16 %v3249, %v3217
        %v3634 = vpack.c.b16 %v3250, %v3218
        %v3635 = vpack.c.b16 %v3251, %v3219
        %v3636 = vpack.c.b16 %v3252, %v3220
        %v3637 = vpack.c.b16 %v3253, %v3221
        %v3638 = vpack.c.b16 %v3254, %v3222
        %v3639 = vpack.c.b16 %v3255, %v3223
        %v3640 = vpack.c.b16 %v3256, %v3224
        %v3641 = vpack.c.b16 %v3257, %v3225
        %v3642 = vpack.c.b16 %v3258, %v3226
        %v3643 = vpack.c.b16 %v3259, %v3227
        %v3644 = vpack.c.b16 %v3260, %v3228
        %v3645 = vpack.c.b16 %v3261, %v3229
        %v3646 = vpack.c.b16 %v3262, %v3230
        %v3647 = vpack.c.b16 %v3263, %v3231
        %v3648 = vpack.c.b16 %v3264, %v3232
        %v3649 = vpack.c.b16 %v3265, %v3233
        %v3650 = vpack.c.b16 %v3266, %v3234
        %v3651 = vpack.c.b16 %v3267, %v3235
        %v3652 = vpack.c.b16 %v3268, %v3236
        %v3653 = vpack.c.b16 %v3269, %v3237
        %v3654 = vpack.c.b16 %v3270, %v3238
        %v3655 = vpack.c.b16 %v3271, %v3239
        %v3656 = vpack.c.b16 %v3272, %v3240
        %v3657 = vpack.c.b16 %v3273, %v3241
        %v3658 = vpack.c.b16 %v3274, %v3242
        %v3659 = vpack.c.b16 %v3275, %v3243
        %v3660 = vpack.c.b16 %v3276, %v3244
        %v3661 = vpack.c.b16 %v3277, %v3245
        %v3662 = vpack.c.b16 %v3278, %v3246
        %v3663 = vpack.c.b16 %v3311, %v3279
        %v3664 = vpack.c.b16 %v3312, %v3280
        %v3665 = vpack.c.b16 %v3313, %v3281
        %v3666 = vpack.c.b16 %v3314, %v3282
        %v3667 = vpack.c.b16 %v3315, %v3283
        %v3668 = vpack.c.b16 %v3316, %v3284
        %v3669 = vpack.c.b16 %v3317, %v3285
        %v3670 = vpack.c.b16 %v3318, %v3286
        %v3671 = vpack.c.b16 %v3319, %v3287
        %v3672 = vpack.c.b16 %v3320, %v3288
        %v3673 = vpack.c.b16 %v3321, %v3289
        %v3674 = vpack.c.b16 %v3322, %v3290
        %v3675 = vpack.c.b16 %v3323, %v3291
        %v3676 = vpack.c.b16 %v3324, %v3292
        %v3677 = vpack.c.b16 %v3325, %v3293
        %v3678 = vpack.c.b16 %v3326, %v3294
        %v3679 = vpack.c.b16 %v3327, %v3295
        %v3680 = vpack.c.b16 %v3328, %v3296
        %v3681 = vpack.c.b16 %v3329, %v3297
        %v3682 = vpack.c.b16 %v3330, %v3298
        %v3683 = vpack.c.b16 %v3331, %v3299
        %v3684 = vpack.c.b16 %v3332, %v3300
        %v3685 = vpack.c.b16 %v3333, %v3301
        %v3686 = vpack.c.b16 %v3334, %v3302
        %v3687 = vpack.c.b16 %v3335, %v3303
        %v3688 = vpack.c.b16 %v3336, %v3304
        %v3689 = vpack.c.b16 %v3337, %v3305
        %v3690 = vpack.c.b16 %v3338, %v3306
        %v3691 = vpack.c.b16 %v3339, %v3307
        %v3692 = vpack.c.b16 %v3340, %v3308
        %v3693 = vpack.c.b16 %v3341, %v3309
        %v3694 = vpack.c.b16 %v3342, %v3310
        %v3695 = vpack.c.b16 %v3375, %v3343
        %v3696 = vpack.c.b16 %v3376, %v3344
        %v3697 = vpack.c.b16 %v3377, %v3345
        %v3698 = vpack.c.b16 %v3378, %v3346
        %v3699 = vpack.c.b16 %v3379, %v3347
        %v3700 = vpack.c.b16 %v3380, %v3348
        %v3701 = vpack.c.b16 %v3381, %v3349
        %v3702 = vpack.c.b16 %v3382, %v3350
        %v3703 = vpack.c.b16 %v3383, %v3351
        %v3704 = vpack.c.b16 %v3384, %v3352
        %v3705 = vpack.c.b16 %v3385, %v3353
        %v3706 = vpack.c.b16 %v3386, %v3354
        %v3707 = vpack.c.b16 %v3387, %v3355
        %v3708 = vpack.c.b16 %v3388, %v3356
        %v3709 = vpack.c.b16 %v3389, %v3357
        %v3710 = vpack.c.b16 %v3390, %v3358
        %v3711 = vpack.c.b16 %v3391, %v3359
        %v3712 = vpack.c.b16 %v3392, %v3360
        %v3713 = vpack.c.b16 %v3393, %v3361
        %v3714 = vpack.c.b16 %v3394, %v3362
        %v3715 = vpack.c.b16 %v3395, %v3363
        %v3716 = vpack.c.b16 %v3396, %v3364
        %v3717 = vpack.c.b16 %v3397, %v3365
        %v3718 = vpack.c.b16 %v3398, %v3366
        %v3719 = vpack.c.b16 %v3399, %v3367
        %v3720 = vpack.c.b16 %v3400, %v3368
        %v3721 = vpack.c.b16 %v3401, %v3369
        %v3722 = vpack.c.b16 %v3402, %v3370
        %v3723 = vpack.c.b16 %v3403, %v3371
        %v3724 = vpack.c.b16 %v3404, %v3372
        %v3725 = vpack.c.b16 %v3405, %v3373
        %v3726 = vpack.c.b16 %v3406, %v3374
        %v3727 = vpack.c.b16 %v3439, %v3407
        %v3728 = vpack.c.b16 %v3440, %v3408
        %v3729 = vpack.c.b16 %v3441, %v3409
        %v3730 = vpack.c.b16 %v3442, %v3410
        %v3731 = vpack.c.b16 %v3443, %v3411
        %v3732 = vpack.c.b16 %v3444, %v3412
        %v3733 = vpack.c.b16 %v3445, %v3413
        %v3734 = vpack.c.b16 %v3446, %v3414
        %v3735 = vpack.c.b16 %v3447, %v3415
        %v3736 = vpack.c.b16 %v3448, %v3416
        %v3737 = vpack.c.b16 %v3449, %v3417
        %v3738 = vpack.c.b16 %v3450, %v3418
        %v3739 = vpack.c.b16 %v3451, %v3419
        %v3740 = vpack.c.b16 %v3452, %v3420
        %v3741 = vpack.c.b16 %v3453, %v3421
        %v3742 = vpack.c.b16 %v3454, %v3422
        %v3743 = vpack.c.b16 %v3455, %v3423
        %v3744 = vpack.c.b16 %v3456, %v3424
        %v3745 = vpack.c.b16 %v3457, %v3425
        %v3746 = vpack.c.b16 %v3458, %v3426
        %v3747 = vpack.c.b16 %v3459, %v3427
        %v3748 = vpack.c.b16 %v3460, %v3428
        %v3749 = vpack.c.b16 %v3461, %v3429
        %v3750 = vpack.c.b16 %v3462, %v3430
        %v3751 = vpack.c.b16 %v3463, %v3431
        %v3752 = vpack.c.b16 %v3464, %v3432
        %v3753 = vpack.c.b16 %v3465, %v3433
        %v3754 = vpack.c.b16 %v3466, %v3434
        %v3755 = vpack.c.b16 %v3467, %v3435
        %v3756 = vpack.c.b16 %v3468, %v3436
        %v3757 = vpack.c.b16 %v3469, %v3437
        %v3758 = vpack.c.b16 %v3470, %v3438
        %v3759 = vpack.c.b16 %v3503, %v3471
        %v3760 = vpack.c.b16 %v3504, %v3472
        %v3761 = vpack.c.b16 %v3505, %v3473
        %v3762 = vpack.c.b16 %v3506, %v3474
        %v3763 = vpack.c.b16 %v3507, %v3475
        %v3764 = vpack.c.b16 %v3508, %v3476
        %v3765 = vpack.c.b16 %v3509, %v3477
        %v3766 = vpack.c.b16 %v3510, %v3478
        %v3767 = vpack.c.b16 %v3511, %v3479
        %v3768 = vpack.c.b16 %v3512, %v3480
        %v3769 = vpack.c.b16 %v3513, %v3481
        %v3770 = vpack.c.b16 %v3514, %v3482
        %v3771 = vpack.c.b16 %v3515, %v3483
        %v3772 = vpack.c.b16 %v3516, %v3484
        %v3773 = vpack.c.b16 %v3517, %v3485
        %v3774 = vpack.c.b16 %v3518, %v3486
        %v3775 = vpack.c.b16 %v3519, %v3487
        %v3776 = vpack.c.b16 %v3520, %v3488
        %v3777 = vpack.c.b16 %v3521, %v3489
        %v3778 = vpack.c.b16 %v3522, %v3490
        %v3779 = vpack.c.b16 %v3523, %v3491
        %v3780 = vpack.c.b16 %v3524, %v3492
        %v3781 = vpack.c.b16 %v3525, %v3493
        %v3782 = vpack.c.b16 %v3526, %v3494
        %v3783 = vpack.c.b16 %v3527, %v3495
        %v3784 = vpack.c.b16 %v3528, %v3496
        %v3785 = vpack.c.b16 %v3529, %v3497
        %v3786 = vpack.c.b16 %v3530, %v3498
        %v3787 = vpack.c.b16 %v3531, %v3499
        %v3788 = vpack.c.b16 %v3532, %v3500
        %v3789 = vpack.c.b16 %v3533, %v3501
        %v3790 = vpack.c.b16 %v3534, %v3502
        %4047 = vmatprep.subr.bf16.mxu0 %v3536
        %4048 = vmatpush1.bf16.msra.mxu0 %v3535
        %4049 = vmatprep.subr.bf16.mxu0 %v3568
        %4050 = vmatpush1.bf16.msra.mxu0 %v3567
        %4051 = vmatprep.subr.bf16.mxu0 %v3600
        %4052 = vmatpush1.bf16.msra.mxu0 %v3599
        %4053 = vmatprep.subr.bf16.mxu0 %v3632
        %4054 = vmatpush1.bf16.msra.mxu0 %v3631
        %4055 = vmatprep.subr.bf16.mxu0 %v3664
        %4056 = vmatpush1.bf16.msra.mxu0 %v3663
        %4057 = vmatprep.subr.bf16.mxu0 %v3696
        %4058 = vmatpush1.bf16.msra.mxu0 %v3695
        %4059 = vmatprep.subr.bf16.mxu0 %v3728
        %4060 = vmatpush1.bf16.msra.mxu0 %v3727
        %4061 = vmatprep.subr.bf16.mxu0 %v3760
        %4062 = vmatpush1.bf16.msra.mxu0 %v3759
        %4063 = vmatprep.subr.bf16.mxu0 0
        %4064 = vmatpush1.bf16.msra.mxu0 0
        %4065 = vmatprep.subr.bf16.mxu0 0
        %4066 = vmatpush1.bf16.msra.mxu0 0
        %4067 = vmatprep.subr.bf16.mxu0 0
        %4068 = vmatpush1.bf16.msra.mxu0 0
        %4069 = vmatprep.subr.bf16.mxu0 0
        %4070 = vmatpush1.bf16.msra.mxu0 0
        %4071 = vmatprep.subr.bf16.mxu0 0
        %4072 = vmatpush1.bf16.msra.mxu0 0
        %4073 = vmatprep.subr.bf16.mxu0 0
        %4074 = vmatpush1.bf16.msra.mxu0 0
        %4075 = vmatprep.subr.bf16.mxu0 0
        %4076 = vmatpush1.bf16.msra.mxu0 0
        %4077 = vmatprep.subr.bf16.mxu0 0
        %4078 = vmatpush1.bf16.msra.mxu0 0
        %4079 = vmatprep.mubr.bf16.mxu0 0
        %4080 = vmatmul.mubr.bf16.gmra.mrb[0].mxu0 %v2765
        %v4081 = vpop.f32.mrb[0].mxu0
        %v4082 = vadd.f32 %v2108, %v4081
        %v4083 = vpop.f32.mrb[0].mxu0
        %v4084 = vadd.f32 %v2110, %v4083
        %v4085 = vpop.f32.mrb[0].mxu0
        %v4086 = vadd.f32 %v2112, %v4085
        %v4087 = vpop.f32.mrb[0].mxu0
        %v4088 = vadd.f32 %v2114, %v4087
        %4089 = vdwg.mxu0
        %4090 = vmatprep.subr.bf16.mxu0 %v3538
        %4091 = vmatpush1.bf16.msra.mxu0 %v3537
        %4092 = vmatprep.subr.bf16.mxu0 %v3570
        %4093 = vmatpush1.bf16.msra.mxu0 %v3569
        %4094 = vmatprep.subr.bf16.mxu0 %v3602
        %4095 = vmatpush1.bf16.msra.mxu0 %v3601
        %4096 = vmatprep.subr.bf16.mxu0 %v3634
        %4097 = vmatpush1.bf16.msra.mxu0 %v3633
        %4098 = vmatprep.subr.bf16.mxu0 %v3666
        %4099 = vmatpush1.bf16.msra.mxu0 %v3665
        %4100 = vmatprep.subr.bf16.mxu0 %v3698
        %4101 = vmatpush1.bf16.msra.mxu0 %v3697
        %4102 = vmatprep.subr.bf16.mxu0 %v3730
        %4103 = vmatpush1.bf16.msra.mxu0 %v3729
        %4104 = vmatprep.subr.bf16.mxu0 %v3762
        %4105 = vmatpush1.bf16.msra.mxu0 %v3761
        %4106 = vmatprep.subr.bf16.mxu0 0
        %4107 = vmatpush1.bf16.msra.mxu0 0
        %4108 = vmatprep.subr.bf16.mxu0 0
        %4109 = vmatpush1.bf16.msra.mxu0 0
        %4110 = vmatprep.subr.bf16.mxu0 0
        %4111 = vmatpush1.bf16.msra.mxu0 0
        %4112 = vmatprep.subr.bf16.mxu0 0
        %4113 = vmatpush1.bf16.msra.mxu0 0
        %4114 = vmatprep.subr.bf16.mxu0 0
        %4115 = vmatpush1.bf16.msra.mxu0 0
        %4116 = vmatprep.subr.bf16.mxu0 0
        %4117 = vmatpush1.bf16.msra.mxu0 0
        %4118 = vmatprep.subr.bf16.mxu0 0
        %4119 = vmatpush1.bf16.msra.mxu0 0
        %4120 = vmatprep.subr.bf16.mxu0 0
        %4121 = vmatpush1.bf16.msra.mxu0 0
        %4122 = vmatprep.mubr.bf16.mxu0 0
        %4123 = vmatmul.mubr.bf16.gmra.mrb[0].mxu0 %v2765
        %v4124 = vpop.f32.mrb[0].mxu0
        %v4125 = vadd.f32 %v2151, %v4124
        %v4126 = vpop.f32.mrb[0].mxu0
        %v4127 = vadd.f32 %v2153, %v4126
        %v4128 = vpop.f32.mrb[0].mxu0
        %v4129 = vadd.f32 %v2155, %v4128
        %v4130 = vpop.f32.mrb[0].mxu0
        %v4131 = vadd.f32 %v2157, %v4130
        %4132 = vdwg.mxu0
        %4133 = vmatprep.subr.bf16.mxu0 %v3540
        %4134 = vmatpush1.bf16.msra.mxu0 %v3539
        %4135 = vmatprep.subr.bf16.mxu0 %v3572
        %4136 = vmatpush1.bf16.msra.mxu0 %v3571
        %4137 = vmatprep.subr.bf16.mxu0 %v3604
        %4138 = vmatpush1.bf16.msra.mxu0 %v3603
        %4139 = vmatprep.subr.bf16.mxu0 %v3636
        %4140 = vmatpush1.bf16.msra.mxu0 %v3635
        %4141 = vmatprep.subr.bf16.mxu0 %v3668
        %4142 = vmatpush1.bf16.msra.mxu0 %v3667
        %4143 = vmatprep.subr.bf16.mxu0 %v3700
        %4144 = vmatpush1.bf16.msra.mxu0 %v3699
        %4145 = vmatprep.subr.bf16.mxu0 %v3732
        %4146 = vmatpush1.bf16.msra.mxu0 %v3731
        %4147 = vmatprep.subr.bf16.mxu0 %v3764
        %4148 = vmatpush1.bf16.msra.mxu0 %v3763
        %4149 = vmatprep.subr.bf16.mxu0 0
        %4150 = vmatpush1.bf16.msra.mxu0 0
        %4151 = vmatprep.subr.bf16.mxu0 0
        %4152 = vmatpush1.bf16.msra.mxu0 0
        %4153 = vmatprep.subr.bf16.mxu0 0
        %4154 = vmatpush1.bf16.msra.mxu0 0
        %4155 = vmatprep.subr.bf16.mxu0 0
        %4156 = vmatpush1.bf16.msra.mxu0 0
        %4157 = vmatprep.subr.bf16.mxu0 0
        %4158 = vmatpush1.bf16.msra.mxu0 0
        %4159 = vmatprep.subr.bf16.mxu0 0
        %4160 = vmatpush1.bf16.msra.mxu0 0
        %4161 = vmatprep.subr.bf16.mxu0 0
        %4162 = vmatpush1.bf16.msra.mxu0 0
        %4163 = vmatprep.subr.bf16.mxu0 0
        %4164 = vmatpush1.bf16.msra.mxu0 0
        %4165 = vmatprep.mubr.bf16.mxu0 0
        %4166 = vmatmul.mubr.bf16.gmra.mrb[0].mxu0 %v2765
        %v4167 = vpop.f32.mrb[0].mxu0
        %v4168 = vadd.f32 %v2194, %v4167
        %v4169 = vpop.f32.mrb[0].mxu0
        %v4170 = vadd.f32 %v2196, %v4169
        %v4171 = vpop.f32.mrb[0].mxu0
        %v4172 = vadd.f32 %v2198, %v4171
        %v4173 = vpop.f32.mrb[0].mxu0
        %v4174 = vadd.f32 %v2200, %v4173
        %4175 = vdwg.mxu0
        %4176 = vmatprep.subr.bf16.mxu0 %v3542
        %4177 = vmatpush1.bf16.msra.mxu0 %v3541
        %4178 = vmatprep.subr.bf16.mxu0 %v3574
        %4179 = vmatpush1.bf16.msra.mxu0 %v3573
        %4180 = vmatprep.subr.bf16.mxu0 %v3606
        %4181 = vmatpush1.bf16.msra.mxu0 %v3605
        %4182 = vmatprep.subr.bf16.mxu0 %v3638
        %4183 = vmatpush1.bf16.msra.mxu0 %v3637
        %4184 = vmatprep.subr.bf16.mxu0 %v3670
        %4185 = vmatpush1.bf16.msra.mxu0 %v3669
        %4186 = vmatprep.subr.bf16.mxu0 %v3702
        %4187 = vmatpush1.bf16.msra.mxu0 %v3701
        %4188 = vmatprep.subr.bf16.mxu0 %v3734
        %4189 = vmatpush1.bf16.msra.mxu0 %v3733
        %4190 = vmatprep.subr.bf16.mxu0 %v3766
        %4191 = vmatpush1.bf16.msra.mxu0 %v3765
        %4192 = vmatprep.subr.bf16.mxu0 0
        %4193 = vmatpush1.bf16.msra.mxu0 0
        %4194 = vmatprep.subr.bf16.mxu0 0
        %4195 = vmatpush1.bf16.msra.mxu0 0
        %4196 = vmatprep.subr.bf16.mxu0 0
        %4197 = vmatpush1.bf16.msra.mxu0 0
        %4198 = vmatprep.subr.bf16.mxu0 0
        %4199 = vmatpush1.bf16.msra.mxu0 0
        %4200 = vmatprep.subr.bf16.mxu0 0
        %4201 = vmatpush1.bf16.msra.mxu0 0
        %4202 = vmatprep.subr.bf16.mxu0 0
        %4203 = vmatpush1.bf16.msra.mxu0 0
        %4204 = vmatprep.subr.bf16.mxu0 0
        %4205 = vmatpush1.bf16.msra.mxu0 0
        %4206 = vmatprep.subr.bf16.mxu0 0
        %4207 = vmatpush1.bf16.msra.mxu0 0
        %4208 = vmatprep.mubr.bf16.mxu0 0
        %4209 = vmatmul.mubr.bf16.gmra.mrb[0].mxu0 %v2765
        %v4210 = vpop.f32.mrb[0].mxu0
        %v4211 = vadd.f32 %v2237, %v4210
        %v4212 = vpop.f32.mrb[0].mxu0
        %v4213 = vadd.f32 %v2239, %v4212
        %v4214 = vpop.f32.mrb[0].mxu0
        %v4215 = vadd.f32 %v2241, %v4214
        %v4216 = vpop.f32.mrb[0].mxu0
        %v4217 = vadd.f32 %v2243, %v4216
        %4218 = vdwg.mxu0
        %4219 = vmatprep.subr.bf16.mxu0 %v3544
        %4220 = vmatpush1.bf16.msra.mxu0 %v3543
        %4221 = vmatprep.subr.bf16.mxu0 %v3576
        %4222 = vmatpush1.bf16.msra.mxu0 %v3575
        %4223 = vmatprep.subr.bf16.mxu0 %v3608
        %4224 = vmatpush1.bf16.msra.mxu0 %v3607
        %4225 = vmatprep.subr.bf16.mxu0 %v3640
        %4226 = vmatpush1.bf16.msra.mxu0 %v3639
        %4227 = vmatprep.subr.bf16.mxu0 %v3672
        %4228 = vmatpush1.bf16.msra.mxu0 %v3671
        %4229 = vmatprep.subr.bf16.mxu0 %v3704
        %4230 = vmatpush1.bf16.msra.mxu0 %v3703
        %4231 = vmatprep.subr.bf16.mxu0 %v3736
        %4232 = vmatpush1.bf16.msra.mxu0 %v3735
        %4233 = vmatprep.subr.bf16.mxu0 %v3768
        %4234 = vmatpush1.bf16.msra.mxu0 %v3767
        %4235 = vmatprep.subr.bf16.mxu0 0
        %4236 = vmatpush1.bf16.msra.mxu0 0
        %4237 = vmatprep.subr.bf16.mxu0 0
        %4238 = vmatpush1.bf16.msra.mxu0 0
        %4239 = vmatprep.subr.bf16.mxu0 0
        %4240 = vmatpush1.bf16.msra.mxu0 0
        %4241 = vmatprep.subr.bf16.mxu0 0
        %4242 = vmatpush1.bf16.msra.mxu0 0
        %4243 = vmatprep.subr.bf16.mxu0 0
        %4244 = vmatpush1.bf16.msra.mxu0 0
        %4245 = vmatprep.subr.bf16.mxu0 0
        %4246 = vmatpush1.bf16.msra.mxu0 0
        %4247 = vmatprep.subr.bf16.mxu0 0
        %4248 = vmatpush1.bf16.msra.mxu0 0
        %4249 = vmatprep.subr.bf16.mxu0 0
        %4250 = vmatpush1.bf16.msra.mxu0 0
        %4251 = vmatprep.mubr.bf16.mxu0 0
        %4252 = vmatmul.mubr.bf16.gmra.mrb[0].mxu0 %v2765
        %v4253 = vpop.f32.mrb[0].mxu0
        %v4254 = vadd.f32 %v2280, %v4253
        %v4255 = vpop.f32.mrb[0].mxu0
        %v4256 = vadd.f32 %v2282, %v4255
        %v4257 = vpop.f32.mrb[0].mxu0
        %v4258 = vadd.f32 %v2284, %v4257
        %v4259 = vpop.f32.mrb[0].mxu0
        %v4260 = vadd.f32 %v2286, %v4259
        %4261 = vdwg.mxu0
        %4262 = vmatprep.subr.bf16.mxu0 %v3546
        %4263 = vmatpush1.bf16.msra.mxu0 %v3545
        %4264 = vmatprep.subr.bf16.mxu0 %v3578
        %4265 = vmatpush1.bf16.msra.mxu0 %v3577
        %4266 = vmatprep.subr.bf16.mxu0 %v3610
        %4267 = vmatpush1.bf16.msra.mxu0 %v3609
        %4268 = vmatprep.subr.bf16.mxu0 %v3642
        %4269 = vmatpush1.bf16.msra.mxu0 %v3641
        %4270 = vmatprep.subr.bf16.mxu0 %v3674
        %4271 = vmatpush1.bf16.msra.mxu0 %v3673
        %4272 = vmatprep.subr.bf16.mxu0 %v3706
        %4273 = vmatpush1.bf16.msra.mxu0 %v3705
        %4274 = vmatprep.subr.bf16.mxu0 %v3738
        %4275 = vmatpush1.bf16.msra.mxu0 %v3737
        %4276 = vmatprep.subr.bf16.mxu0 %v3770
        %4277 = vmatpush1.bf16.msra.mxu0 %v3769
        %4278 = vmatprep.subr.bf16.mxu0 0
        %4279 = vmatpush1.bf16.msra.mxu0 0
        %4280 = vmatprep.subr.bf16.mxu0 0
        %4281 = vmatpush1.bf16.msra.mxu0 0
        %4282 = vmatprep.subr.bf16.mxu0 0
        %4283 = vmatpush1.bf16.msra.mxu0 0
        %4284 = vmatprep.subr.bf16.mxu0 0
        %4285 = vmatpush1.bf16.msra.mxu0 0
        %4286 = vmatprep.subr.bf16.mxu0 0
        %4287 = vmatpush1.bf16.msra.mxu0 0
        %4288 = vmatprep.subr.bf16.mxu0 0
        %4289 = vmatpush1.bf16.msra.mxu0 0
        %4290 = vmatprep.subr.bf16.mxu0 0
        %4291 = vmatpush1.bf16.msra.mxu0 0
        %4292 = vmatprep.subr.bf16.mxu0 0
        %4293 = vmatpush1.bf16.msra.mxu0 0
        %4294 = vmatprep.mubr.bf16.mxu0 0
        %4295 = vmatmul.mubr.bf16.gmra.mrb[0].mxu0 %v2765
        %v4296 = vpop.f32.mrb[0].mxu0
        %v4297 = vadd.f32 %v2323, %v4296
        %v4298 = vpop.f32.mrb[0].mxu0
        %v4299 = vadd.f32 %v2325, %v4298
        %v4300 = vpop.f32.mrb[0].mxu0
        %v4301 = vadd.f32 %v2327, %v4300
        %v4302 = vpop.f32.mrb[0].mxu0
        %v4303 = vadd.f32 %v2329, %v4302
        %4304 = vdwg.mxu0
        %4305 = vmatprep.subr.bf16.mxu0 %v3548
        %4306 = vmatpush1.bf16.msra.mxu0 %v3547
        %4307 = vmatprep.subr.bf16.mxu0 %v3580
        %4308 = vmatpush1.bf16.msra.mxu0 %v3579
        %4309 = vmatprep.subr.bf16.mxu0 %v3612
        %4310 = vmatpush1.bf16.msra.mxu0 %v3611
        %4311 = vmatprep.subr.bf16.mxu0 %v3644
        %4312 = vmatpush1.bf16.msra.mxu0 %v3643
        %4313 = vmatprep.subr.bf16.mxu0 %v3676
        %4314 = vmatpush1.bf16.msra.mxu0 %v3675
        %4315 = vmatprep.subr.bf16.mxu0 %v3708
        %4316 = vmatpush1.bf16.msra.mxu0 %v3707
        %4317 = vmatprep.subr.bf16.mxu0 %v3740
        %4318 = vmatpush1.bf16.msra.mxu0 %v3739
        %4319 = vmatprep.subr.bf16.mxu0 %v3772
        %4320 = vmatpush1.bf16.msra.mxu0 %v3771
        %4321 = vmatprep.subr.bf16.mxu0 0
        %4322 = vmatpush1.bf16.msra.mxu0 0
        %4323 = vmatprep.subr.bf16.mxu0 0
        %4324 = vmatpush1.bf16.msra.mxu0 0
        %4325 = vmatprep.subr.bf16.mxu0 0
        %4326 = vmatpush1.bf16.msra.mxu0 0
        %4327 = vmatprep.subr.bf16.mxu0 0
        %4328 = vmatpush1.bf16.msra.mxu0 0
        %4329 = vmatprep.subr.bf16.mxu0 0
        %4330 = vmatpush1.bf16.msra.mxu0 0
        %4331 = vmatprep.subr.bf16.mxu0 0
        %4332 = vmatpush1.bf16.msra.mxu0 0
        %4333 = vmatprep.subr.bf16.mxu0 0
        %4334 = vmatpush1.bf16.msra.mxu0 0
        %4335 = vmatprep.subr.bf16.mxu0 0
        %4336 = vmatpush1.bf16.msra.mxu0 0
        %4337 = vmatprep.mubr.bf16.mxu0 0
        %4338 = vmatmul.mubr.bf16.gmra.mrb[0].mxu0 %v2765
        %v4339 = vpop.f32.mrb[0].mxu0
        %v4340 = vadd.f32 %v2366, %v4339
        %v4341 = vpop.f32.mrb[0].mxu0
        %v4342 = vadd.f32 %v2368, %v4341
        %v4343 = vpop.f32.mrb[0].mxu0
        %v4344 = vadd.f32 %v2370, %v4343
        %v4345 = vpop.f32.mrb[0].mxu0
        %v4346 = vadd.f32 %v2372, %v4345
        %4347 = vdwg.mxu0
        %4348 = vmatprep.subr.bf16.mxu0 %v3550
        %4349 = vmatpush1.bf16.msra.mxu0 %v3549
        %4350 = vmatprep.subr.bf16.mxu0 %v3582
        %4351 = vmatpush1.bf16.msra.mxu0 %v3581
        %4352 = vmatprep.subr.bf16.mxu0 %v3614
        %4353 = vmatpush1.bf16.msra.mxu0 %v3613
        %4354 = vmatprep.subr.bf16.mxu0 %v3646
        %4355 = vmatpush1.bf16.msra.mxu0 %v3645
        %4356 = vmatprep.subr.bf16.mxu0 %v3678
        %4357 = vmatpush1.bf16.msra.mxu0 %v3677
        %4358 = vmatprep.subr.bf16.mxu0 %v3710
        %4359 = vmatpush1.bf16.msra.mxu0 %v3709
        %4360 = vmatprep.subr.bf16.mxu0 %v3742
        %4361 = vmatpush1.bf16.msra.mxu0 %v3741
        %4362 = vmatprep.subr.bf16.mxu0 %v3774
        %4363 = vmatpush1.bf16.msra.mxu0 %v3773
        %4364 = vmatprep.subr.bf16.mxu0 0
        %4365 = vmatpush1.bf16.msra.mxu0 0
        %4366 = vmatprep.subr.bf16.mxu0 0
        %4367 = vmatpush1.bf16.msra.mxu0 0
        %4368 = vmatprep.subr.bf16.mxu0 0
        %4369 = vmatpush1.bf16.msra.mxu0 0
        %4370 = vmatprep.subr.bf16.mxu0 0
        %4371 = vmatpush1.bf16.msra.mxu0 0
        %4372 = vmatprep.subr.bf16.mxu0 0
        %4373 = vmatpush1.bf16.msra.mxu0 0
        %4374 = vmatprep.subr.bf16.mxu0 0
        %4375 = vmatpush1.bf16.msra.mxu0 0
        %4376 = vmatprep.subr.bf16.mxu0 0
        %4377 = vmatpush1.bf16.msra.mxu0 0
        %4378 = vmatprep.subr.bf16.mxu0 0
        %4379 = vmatpush1.bf16.msra.mxu0 0
        %4380 = vmatprep.mubr.bf16.mxu0 0
        %4381 = vmatmul.mubr.bf16.gmra.mrb[0].mxu0 %v2765
        %v4382 = vpop.f32.mrb[0].mxu0
        %v4383 = vadd.f32 %v2409, %v4382
        %v4384 = vpop.f32.mrb[0].mxu0
        %v4385 = vadd.f32 %v2411, %v4384
        %v4386 = vpop.f32.mrb[0].mxu0
        %v4387 = vadd.f32 %v2413, %v4386
        %v4388 = vpop.f32.mrb[0].mxu0
        %v4389 = vadd.f32 %v2415, %v4388
        %4390 = vdwg.mxu0
        %4391 = vmatprep.subr.bf16.mxu0 %v3552
        %4392 = vmatpush1.bf16.msra.mxu0 %v3551
        %4393 = vmatprep.subr.bf16.mxu0 %v3584
        %4394 = vmatpush1.bf16.msra.mxu0 %v3583
        %4395 = vmatprep.subr.bf16.mxu0 %v3616
        %4396 = vmatpush1.bf16.msra.mxu0 %v3615
        %4397 = vmatprep.subr.bf16.mxu0 %v3648
        %4398 = vmatpush1.bf16.msra.mxu0 %v3647
        %4399 = vmatprep.subr.bf16.mxu0 %v3680
        %4400 = vmatpush1.bf16.msra.mxu0 %v3679
        %4401 = vmatprep.subr.bf16.mxu0 %v3712
        %4402 = vmatpush1.bf16.msra.mxu0 %v3711
        %4403 = vmatprep.subr.bf16.mxu0 %v3744
        %4404 = vmatpush1.bf16.msra.mxu0 %v3743
        %4405 = vmatprep.subr.bf16.mxu0 %v3776
        %4406 = vmatpush1.bf16.msra.mxu0 %v3775
        %4407 = vmatprep.subr.bf16.mxu0 0
        %4408 = vmatpush1.bf16.msra.mxu0 0
        %4409 = vmatprep.subr.bf16.mxu0 0
        %4410 = vmatpush1.bf16.msra.mxu0 0
        %4411 = vmatprep.subr.bf16.mxu0 0
        %4412 = vmatpush1.bf16.msra.mxu0 0
        %4413 = vmatprep.subr.bf16.mxu0 0
        %4414 = vmatpush1.bf16.msra.mxu0 0
        %4415 = vmatprep.subr.bf16.mxu0 0
        %4416 = vmatpush1.bf16.msra.mxu0 0
        %4417 = vmatprep.subr.bf16.mxu0 0
        %4418 = vmatpush1.bf16.msra.mxu0 0
        %4419 = vmatprep.subr.bf16.mxu0 0
        %4420 = vmatpush1.bf16.msra.mxu0 0
        %4421 = vmatprep.subr.bf16.mxu0 0
        %4422 = vmatpush1.bf16.msra.mxu0 0
        %4423 = vmatprep.mubr.bf16.mxu0 0
        %4424 = vmatmul.mubr.bf16.gmra.mrb[0].mxu0 %v2765
        %v4425 = vpop.f32.mrb[0].mxu0
        %v4426 = vadd.f32 %v2452, %v4425
        %v4427 = vpop.f32.mrb[0].mxu0
        %v4428 = vadd.f32 %v2454, %v4427
        %v4429 = vpop.f32.mrb[0].mxu0
        %v4430 = vadd.f32 %v2456, %v4429
        %v4431 = vpop.f32.mrb[0].mxu0
        %v4432 = vadd.f32 %v2458, %v4431
        %4433 = vdwg.mxu0
        %4434 = vmatprep.subr.bf16.mxu0 %v3554
        %4435 = vmatpush1.bf16.msra.mxu0 %v3553
        %4436 = vmatprep.subr.bf16.mxu0 %v3586
        %4437 = vmatpush1.bf16.msra.mxu0 %v3585
        %4438 = vmatprep.subr.bf16.mxu0 %v3618
        %4439 = vmatpush1.bf16.msra.mxu0 %v3617
        %4440 = vmatprep.subr.bf16.mxu0 %v3650
        %4441 = vmatpush1.bf16.msra.mxu0 %v3649
        %4442 = vmatprep.subr.bf16.mxu0 %v3682
        %4443 = vmatpush1.bf16.msra.mxu0 %v3681
        %4444 = vmatprep.subr.bf16.mxu0 %v3714
        %4445 = vmatpush1.bf16.msra.mxu0 %v3713
        %4446 = vmatprep.subr.bf16.mxu0 %v3746
        %4447 = vmatpush1.bf16.msra.mxu0 %v3745
        %4448 = vmatprep.subr.bf16.mxu0 %v3778
        %4449 = vmatpush1.bf16.msra.mxu0 %v3777
        %4450 = vmatprep.subr.bf16.mxu0 0
        %4451 = vmatpush1.bf16.msra.mxu0 0
        %4452 = vmatprep.subr.bf16.mxu0 0
        %4453 = vmatpush1.bf16.msra.mxu0 0
        %4454 = vmatprep.subr.bf16.mxu0 0
        %4455 = vmatpush1.bf16.msra.mxu0 0
        %4456 = vmatprep.subr.bf16.mxu0 0
        %4457 = vmatpush1.bf16.msra.mxu0 0
        %4458 = vmatprep.subr.bf16.mxu0 0
        %4459 = vmatpush1.bf16.msra.mxu0 0
        %4460 = vmatprep.subr.bf16.mxu0 0
        %4461 = vmatpush1.bf16.msra.mxu0 0
        %4462 = vmatprep.subr.bf16.mxu0 0
        %4463 = vmatpush1.bf16.msra.mxu0 0
        %4464 = vmatprep.subr.bf16.mxu0 0
        %4465 = vmatpush1.bf16.msra.mxu0 0
        %4466 = vmatprep.mubr.bf16.mxu0 0
        %4467 = vmatmul.mubr.bf16.gmra.mrb[0].mxu0 %v2765
        %v4468 = vpop.f32.mrb[0].mxu0
        %v4469 = vadd.f32 %v2495, %v4468
        %v4470 = vpop.f32.mrb[0].mxu0
        %v4471 = vadd.f32 %v2497, %v4470
        %v4472 = vpop.f32.mrb[0].mxu0
        %v4473 = vadd.f32 %v2499, %v4472
        %v4474 = vpop.f32.mrb[0].mxu0
        %v4475 = vadd.f32 %v2501, %v4474
        %4476 = vdwg.mxu0
        %4477 = vmatprep.subr.bf16.mxu0 %v3556
        %4478 = vmatpush1.bf16.msra.mxu0 %v3555
        %4479 = vmatprep.subr.bf16.mxu0 %v3588
        %4480 = vmatpush1.bf16.msra.mxu0 %v3587
        %4481 = vmatprep.subr.bf16.mxu0 %v3620
        %4482 = vmatpush1.bf16.msra.mxu0 %v3619
        %4483 = vmatprep.subr.bf16.mxu0 %v3652
        %4484 = vmatpush1.bf16.msra.mxu0 %v3651
        %4485 = vmatprep.subr.bf16.mxu0 %v3684
        %4486 = vmatpush1.bf16.msra.mxu0 %v3683
        %4487 = vmatprep.subr.bf16.mxu0 %v3716
        %4488 = vmatpush1.bf16.msra.mxu0 %v3715
        %4489 = vmatprep.subr.bf16.mxu0 %v3748
        %4490 = vmatpush1.bf16.msra.mxu0 %v3747
        %4491 = vmatprep.subr.bf16.mxu0 %v3780
        %4492 = vmatpush1.bf16.msra.mxu0 %v3779
        %4493 = vmatprep.subr.bf16.mxu0 0
        %4494 = vmatpush1.bf16.msra.mxu0 0
        %4495 = vmatprep.subr.bf16.mxu0 0
        %4496 = vmatpush1.bf16.msra.mxu0 0
        %4497 = vmatprep.subr.bf16.mxu0 0
        %4498 = vmatpush1.bf16.msra.mxu0 0
        %4499 = vmatprep.subr.bf16.mxu0 0
        %4500 = vmatpush1.bf16.msra.mxu0 0
        %4501 = vmatprep.subr.bf16.mxu0 0
        %4502 = vmatpush1.bf16.msra.mxu0 0
        %4503 = vmatprep.subr.bf16.mxu0 0
        %4504 = vmatpush1.bf16.msra.mxu0 0
        %4505 = vmatprep.subr.bf16.mxu0 0
        %4506 = vmatpush1.bf16.msra.mxu0 0
        %4507 = vmatprep.subr.bf16.mxu0 0
        %4508 = vmatpush1.bf16.msra.mxu0 0
        %4509 = vmatprep.mubr.bf16.mxu0 0
        %4510 = vmatmul.mubr.bf16.gmra.mrb[0].mxu0 %v2765
        %v4511 = vpop.f32.mrb[0].mxu0
        %v4512 = vadd.f32 %v2538, %v4511
        %v4513 = vpop.f32.mrb[0].mxu0
        %v4514 = vadd.f32 %v2540, %v4513
        %v4515 = vpop.f32.mrb[0].mxu0
        %v4516 = vadd.f32 %v2542, %v4515
        %v4517 = vpop.f32.mrb[0].mxu0
        %v4518 = vadd.f32 %v2544, %v4517
        %4519 = vdwg.mxu0
        %4520 = vmatprep.subr.bf16.mxu0 %v3558
        %4521 = vmatpush1.bf16.msra.mxu0 %v3557
        %4522 = vmatprep.subr.bf16.mxu0 %v3590
        %4523 = vmatpush1.bf16.msra.mxu0 %v3589
        %4524 = vmatprep.subr.bf16.mxu0 %v3622
        %4525 = vmatpush1.bf16.msra.mxu0 %v3621
        %4526 = vmatprep.subr.bf16.mxu0 %v3654
        %4527 = vmatpush1.bf16.msra.mxu0 %v3653
        %4528 = vmatprep.subr.bf16.mxu0 %v3686
        %4529 = vmatpush1.bf16.msra.mxu0 %v3685
        %4530 = vmatprep.subr.bf16.mxu0 %v3718
        %4531 = vmatpush1.bf16.msra.mxu0 %v3717
        %4532 = vmatprep.subr.bf16.mxu0 %v3750
        %4533 = vmatpush1.bf16.msra.mxu0 %v3749
        %4534 = vmatprep.subr.bf16.mxu0 %v3782
        %4535 = vmatpush1.bf16.msra.mxu0 %v3781
        %4536 = vmatprep.subr.bf16.mxu0 0
        %4537 = vmatpush1.bf16.msra.mxu0 0
        %4538 = vmatprep.subr.bf16.mxu0 0
        %4539 = vmatpush1.bf16.msra.mxu0 0
        %4540 = vmatprep.subr.bf16.mxu0 0
        %4541 = vmatpush1.bf16.msra.mxu0 0
        %4542 = vmatprep.subr.bf16.mxu0 0
        %4543 = vmatpush1.bf16.msra.mxu0 0
        %4544 = vmatprep.subr.bf16.mxu0 0
        %4545 = vmatpush1.bf16.msra.mxu0 0
        %4546 = vmatprep.subr.bf16.mxu0 0
        %4547 = vmatpush1.bf16.msra.mxu0 0
        %4548 = vmatprep.subr.bf16.mxu0 0
        %4549 = vmatpush1.bf16.msra.mxu0 0
        %4550 = vmatprep.subr.bf16.mxu0 0
        %4551 = vmatpush1.bf16.msra.mxu0 0
        %4552 = vmatprep.mubr.bf16.mxu0 0
        %4553 = vmatmul.mubr.bf16.gmra.mrb[0].mxu0 %v2765
        %v4554 = vpop.f32.mrb[0].mxu0
        %v4555 = vadd.f32 %v2581, %v4554
        %v4556 = vpop.f32.mrb[0].mxu0
        %v4557 = vadd.f32 %v2583, %v4556
        %v4558 = vpop.f32.mrb[0].mxu0
        %v4559 = vadd.f32 %v2585, %v4558
        %v4560 = vpop.f32.mrb[0].mxu0
        %v4561 = vadd.f32 %v2587, %v4560
        %4562 = vdwg.mxu0
        %4563 = vmatprep.subr.bf16.mxu0 %v3560
        %4564 = vmatpush1.bf16.msra.mxu0 %v3559
        %4565 = vmatprep.subr.bf16.mxu0 %v3592
        %4566 = vmatpush1.bf16.msra.mxu0 %v3591
        %4567 = vmatprep.subr.bf16.mxu0 %v3624
        %4568 = vmatpush1.bf16.msra.mxu0 %v3623
        %4569 = vmatprep.subr.bf16.mxu0 %v3656
        %4570 = vmatpush1.bf16.msra.mxu0 %v3655
        %4571 = vmatprep.subr.bf16.mxu0 %v3688
        %4572 = vmatpush1.bf16.msra.mxu0 %v3687
        %4573 = vmatprep.subr.bf16.mxu0 %v3720
        %4574 = vmatpush1.bf16.msra.mxu0 %v3719
        %4575 = vmatprep.subr.bf16.mxu0 %v3752
        %4576 = vmatpush1.bf16.msra.mxu0 %v3751
        %4577 = vmatprep.subr.bf16.mxu0 %v3784
        %4578 = vmatpush1.bf16.msra.mxu0 %v3783
        %4579 = vmatprep.subr.bf16.mxu0 0
        %4580 = vmatpush1.bf16.msra.mxu0 0
        %4581 = vmatprep.subr.bf16.mxu0 0
        %4582 = vmatpush1.bf16.msra.mxu0 0
        %4583 = vmatprep.subr.bf16.mxu0 0
        %4584 = vmatpush1.bf16.msra.mxu0 0
        %4585 = vmatprep.subr.bf16.mxu0 0
        %4586 = vmatpush1.bf16.msra.mxu0 0
        %4587 = vmatprep.subr.bf16.mxu0 0
        %4588 = vmatpush1.bf16.msra.mxu0 0
        %4589 = vmatprep.subr.bf16.mxu0 0
        %4590 = vmatpush1.bf16.msra.mxu0 0
        %4591 = vmatprep.subr.bf16.mxu0 0
        %4592 = vmatpush1.bf16.msra.mxu0 0
        %4593 = vmatprep.subr.bf16.mxu0 0
        %4594 = vmatpush1.bf16.msra.mxu0 0
        %4595 = vmatprep.mubr.bf16.mxu0 0
        %4596 = vmatmul.mubr.bf16.gmra.mrb[0].mxu0 %v2765
        %v4597 = vpop.f32.mrb[0].mxu0
        %v4598 = vadd.f32 %v2624, %v4597
        %v4599 = vpop.f32.mrb[0].mxu0
        %v4600 = vadd.f32 %v2626, %v4599
        %v4601 = vpop.f32.mrb[0].mxu0
        %v4602 = vadd.f32 %v2628, %v4601
        %v4603 = vpop.f32.mrb[0].mxu0
        %v4604 = vadd.f32 %v2630, %v4603
        %4605 = vdwg.mxu0
        %4606 = vmatprep.subr.bf16.mxu0 %v3562
        %4607 = vmatpush1.bf16.msra.mxu0 %v3561
        %4608 = vmatprep.subr.bf16.mxu0 %v3594
        %4609 = vmatpush1.bf16.msra.mxu0 %v3593
        %4610 = vmatprep.subr.bf16.mxu0 %v3626
        %4611 = vmatpush1.bf16.msra.mxu0 %v3625
        %4612 = vmatprep.subr.bf16.mxu0 %v3658
        %4613 = vmatpush1.bf16.msra.mxu0 %v3657
        %4614 = vmatprep.subr.bf16.mxu0 %v3690
        %4615 = vmatpush1.bf16.msra.mxu0 %v3689
        %4616 = vmatprep.subr.bf16.mxu0 %v3722
        %4617 = vmatpush1.bf16.msra.mxu0 %v3721
        %4618 = vmatprep.subr.bf16.mxu0 %v3754
        %4619 = vmatpush1.bf16.msra.mxu0 %v3753
        %4620 = vmatprep.subr.bf16.mxu0 %v3786
        %4621 = vmatpush1.bf16.msra.mxu0 %v3785
        %4622 = vmatprep.subr.bf16.mxu0 0
        %4623 = vmatpush1.bf16.msra.mxu0 0
        %4624 = vmatprep.subr.bf16.mxu0 0
        %4625 = vmatpush1.bf16.msra.mxu0 0
        %4626 = vmatprep.subr.bf16.mxu0 0
        %4627 = vmatpush1.bf16.msra.mxu0 0
        %4628 = vmatprep.subr.bf16.mxu0 0
        %4629 = vmatpush1.bf16.msra.mxu0 0
        %4630 = vmatprep.subr.bf16.mxu0 0
        %4631 = vmatpush1.bf16.msra.mxu0 0
        %4632 = vmatprep.subr.bf16.mxu0 0
        %4633 = vmatpush1.bf16.msra.mxu0 0
        %4634 = vmatprep.subr.bf16.mxu0 0
        %4635 = vmatpush1.bf16.msra.mxu0 0
        %4636 = vmatprep.subr.bf16.mxu0 0
        %4637 = vmatpush1.bf16.msra.mxu0 0
        %4638 = vmatprep.mubr.bf16.mxu0 0
        %4639 = vmatmul.mubr.bf16.gmra.mrb[0].mxu0 %v2765
        %v4640 = vpop.f32.mrb[0].mxu0
        %v4641 = vadd.f32 %v2667, %v4640
        %v4642 = vpop.f32.mrb[0].mxu0
        %v4643 = vadd.f32 %v2669, %v4642
        %v4644 = vpop.f32.mrb[0].mxu0
        %v4645 = vadd.f32 %v2671, %v4644
        %v4646 = vpop.f32.mrb[0].mxu0
        %v4647 = vadd.f32 %v2673, %v4646
        %4648 = vdwg.mxu0
        %4649 = vmatprep.subr.bf16.mxu0 %v3564
        %4650 = vmatpush1.bf16.msra.mxu0 %v3563
        %4651 = vmatprep.subr.bf16.mxu0 %v3596
        %4652 = vmatpush1.bf16.msra.mxu0 %v3595
        %4653 = vmatprep.subr.bf16.mxu0 %v3628
        %4654 = vmatpush1.bf16.msra.mxu0 %v3627
        %4655 = vmatprep.subr.bf16.mxu0 %v3660
        %4656 = vmatpush1.bf16.msra.mxu0 %v3659
        %4657 = vmatprep.subr.bf16.mxu0 %v3692
        %4658 = vmatpush1.bf16.msra.mxu0 %v3691
        %4659 = vmatprep.subr.bf16.mxu0 %v3724
        %4660 = vmatpush1.bf16.msra.mxu0 %v3723
        %4661 = vmatprep.subr.bf16.mxu0 %v3756
        %4662 = vmatpush1.bf16.msra.mxu0 %v3755
        %4663 = vmatprep.subr.bf16.mxu0 %v3788
        %4664 = vmatpush1.bf16.msra.mxu0 %v3787
        %4665 = vmatprep.subr.bf16.mxu0 0
        %4666 = vmatpush1.bf16.msra.mxu0 0
        %4667 = vmatprep.subr.bf16.mxu0 0
        %4668 = vmatpush1.bf16.msra.mxu0 0
        %4669 = vmatprep.subr.bf16.mxu0 0
        %4670 = vmatpush1.bf16.msra.mxu0 0
        %4671 = vmatprep.subr.bf16.mxu0 0
        %4672 = vmatpush1.bf16.msra.mxu0 0
        %4673 = vmatprep.subr.bf16.mxu0 0
        %4674 = vmatpush1.bf16.msra.mxu0 0
        %4675 = vmatprep.subr.bf16.mxu0 0
        %4676 = vmatpush1.bf16.msra.mxu0 0
        %4677 = vmatprep.subr.bf16.mxu0 0
        %4678 = vmatpush1.bf16.msra.mxu0 0
        %4679 = vmatprep.subr.bf16.mxu0 0
        %4680 = vmatpush1.bf16.msra.mxu0 0
        %4681 = vmatprep.mubr.bf16.mxu0 0
        %4682 = vmatmul.mubr.bf16.gmra.mrb[0].mxu0 %v2765
        %v4683 = vpop.f32.mrb[0].mxu0
        %v4684 = vadd.f32 %v2710, %v4683
        %v4685 = vpop.f32.mrb[0].mxu0
        %v4686 = vadd.f32 %v2712, %v4685
        %v4687 = vpop.f32.mrb[0].mxu0
        %v4688 = vadd.f32 %v2714, %v4687
        %v4689 = vpop.f32.mrb[0].mxu0
        %v4690 = vadd.f32 %v2716, %v4689
        %4691 = vdwg.mxu0
        %4692 = vmatprep.subr.bf16.mxu0 %v3566
        %4693 = vmatpush1.bf16.msra.mxu0 %v3565
        %4694 = vmatprep.subr.bf16.mxu0 %v3598
        %4695 = vmatpush1.bf16.msra.mxu0 %v3597
        %4696 = vmatprep.subr.bf16.mxu0 %v3630
        %4697 = vmatpush1.bf16.msra.mxu0 %v3629
        %4698 = vmatprep.subr.bf16.mxu0 %v3662
        %4699 = vmatpush1.bf16.msra.mxu0 %v3661
        %4700 = vmatprep.subr.bf16.mxu0 %v3694
        %4701 = vmatpush1.bf16.msra.mxu0 %v3693
        %4702 = vmatprep.subr.bf16.mxu0 %v3726
        %4703 = vmatpush1.bf16.msra.mxu0 %v3725
        %4704 = vmatprep.subr.bf16.mxu0 %v3758
        %4705 = vmatpush1.bf16.msra.mxu0 %v3757
        %4706 = vmatprep.subr.bf16.mxu0 %v3790
        %4707 = vmatpush1.bf16.msra.mxu0 %v3789
        %4708 = vmatprep.subr.bf16.mxu0 0
        %4709 = vmatpush1.bf16.msra.mxu0 0
        %4710 = vmatprep.subr.bf16.mxu0 0
        %4711 = vmatpush1.bf16.msra.mxu0 0
        %4712 = vmatprep.subr.bf16.mxu0 0
        %4713 = vmatpush1.bf16.msra.mxu0 0
        %4714 = vmatprep.subr.bf16.mxu0 0
        %4715 = vmatpush1.bf16.msra.mxu0 0
        %4716 = vmatprep.subr.bf16.mxu0 0
        %4717 = vmatpush1.bf16.msra.mxu0 0
        %4718 = vmatprep.subr.bf16.mxu0 0
        %4719 = vmatpush1.bf16.msra.mxu0 0
        %4720 = vmatprep.subr.bf16.mxu0 0
        %4721 = vmatpush1.bf16.msra.mxu0 0
        %4722 = vmatprep.subr.bf16.mxu0 0
        %4723 = vmatpush1.bf16.msra.mxu0 0
        %4724 = vmatprep.mubr.bf16.mxu0 0
        %4725 = vmatmul.mubr.bf16.gmra.mrb[0].mxu0 %v2765
        %v4726 = vpop.f32.mrb[0].mxu0
        %v4727 = vadd.f32 %v2753, %v4726
        %v4728 = vpop.f32.mrb[0].mxu0
        %v4729 = vadd.f32 %v2755, %v4728
        %v4730 = vpop.f32.mrb[0].mxu0
        %v4731 = vadd.f32 %v2757, %v4730
        %v4732 = vpop.f32.mrb[0].mxu0
        %v4733 = vadd.f32 %v2759, %v4732
        %4734 = vdwg.mxu0
        %v4735 = vand.u32 2147483647, %v4082
        %v4736 = vand.u32 2147483647, %v4084
        %v4737 = vand.u32 2147483647, %v4125
        %v4738 = vand.u32 2147483647, %v4127
        %v4739 = vand.u32 2147483647, %v4168
        %v4740 = vand.u32 2147483647, %v4170
        %v4741 = vand.u32 2147483647, %v4211
        %v4742 = vand.u32 2147483647, %v4213
        %v4743 = vand.u32 2147483647, %v4254
        %v4744 = vand.u32 2147483647, %v4256
        %v4745 = vand.u32 2147483647, %v4297
        %v4746 = vand.u32 2147483647, %v4299
        %v4747 = vand.u32 2147483647, %v4340
        %v4748 = vand.u32 2147483647, %v4342
        %v4749 = vand.u32 2147483647, %v4383
        %v4750 = vand.u32 2147483647, %v4385
        %v4751 = vand.u32 2147483647, %v4426
        %v4752 = vand.u32 2147483647, %v4428
        %v4753 = vand.u32 2147483647, %v4469
        %v4754 = vand.u32 2147483647, %v4471
        %v4755 = vand.u32 2147483647, %v4512
        %v4756 = vand.u32 2147483647, %v4514
        %v4757 = vand.u32 2147483647, %v4555
        %v4758 = vand.u32 2147483647, %v4557
        %v4759 = vand.u32 2147483647, %v4598
        %v4760 = vand.u32 2147483647, %v4600
        %v4761 = vand.u32 2147483647, %v4641
        %v4762 = vand.u32 2147483647, %v4643
        %v4763 = vand.u32 2147483647, %v4684
        %v4764 = vand.u32 2147483647, %v4686
        %v4765 = vand.u32 2147483647, %v4727
        %v4766 = vand.u32 2147483647, %v4729
        %v4767 = vand.u32 2147483647, %v4086
        %v4768 = vand.u32 2147483647, %v4088
        %v4769 = vand.u32 2147483647, %v4129
        %v4770 = vand.u32 2147483647, %v4131
        %v4771 = vand.u32 2147483647, %v4172
        %v4772 = vand.u32 2147483647, %v4174
        %v4773 = vand.u32 2147483647, %v4215
        %v4774 = vand.u32 2147483647, %v4217
        %v4775 = vand.u32 2147483647, %v4258
        %v4776 = vand.u32 2147483647, %v4260
        %v4777 = vand.u32 2147483647, %v4301
        %v4778 = vand.u32 2147483647, %v4303
        %v4779 = vand.u32 2147483647, %v4344
        %v4780 = vand.u32 2147483647, %v4346
        %v4781 = vand.u32 2147483647, %v4387
        %v4782 = vand.u32 2147483647, %v4389
        %v4783 = vand.u32 2147483647, %v4430
        %v4784 = vand.u32 2147483647, %v4432
        %v4785 = vand.u32 2147483647, %v4473
        %v4786 = vand.u32 2147483647, %v4475
        %v4787 = vand.u32 2147483647, %v4516
        %v4788 = vand.u32 2147483647, %v4518
        %v4789 = vand.u32 2147483647, %v4559
        %v4790 = vand.u32 2147483647, %v4561
        %v4791 = vand.u32 2147483647, %v4602
        %v4792 = vand.u32 2147483647, %v4604
        %v4793 = vand.u32 2147483647, %v4645
        %v4794 = vand.u32 2147483647, %v4647
        %v4795 = vand.u32 2147483647, %v4688
        %v4796 = vand.u32 2147483647, %v4690
        %v4797 = vand.u32 2147483647, %v4731
        %v4798 = vand.u32 2147483647, %v4733
        %v4799 = vlaneseq
        %v4800 = vand.u32 %v4799, 127
        %vm4801 = vcmp.lt.s32.totalorder %v4800, 64
        %v4802 = vsel %vm4801, 1, 0
        %v4803 = vcvt.s32.f32 %v4802
        %v4804 = vsub.f32 1.0, %v4803
        %v4805 = vmul.f32 %v4735, %v4803
        %v4806 = vmul.f32 %v4767, %v4803
        %4807 = vadd.xlane.f32.xlu0 %v4805
        %v4808 = vpop.xlane.xlu0 %4807
        %4809 = vadd.xlane.f32.xlu0 %v4806
        %v4810 = vpop.xlane.xlu0 %4809
        %v4811 = vmul.f32 %v4735, %v4804
        %v4812 = vmul.f32 %v4767, %v4804
        %4813 = vadd.xlane.f32.xlu0 %v4811
        %v4814 = vpop.xlane.xlu0 %4813
        %4815 = vadd.xlane.f32.xlu0 %v4812
        %v4816 = vpop.xlane.xlu0 %4815
        %v4817 = vmul.f32 %v4736, %v4803
        %v4818 = vmul.f32 %v4768, %v4803
        %4819 = vadd.xlane.f32.xlu0 %v4817
        %v4820 = vpop.xlane.xlu0 %4819
        %4821 = vadd.xlane.f32.xlu0 %v4818
        %v4822 = vpop.xlane.xlu0 %4821
        %v4823 = vmul.f32 %v4736, %v4804
        %v4824 = vmul.f32 %v4768, %v4804
        %4825 = vadd.xlane.f32.xlu0 %v4823
        %v4826 = vpop.xlane.xlu0 %4825
        %4827 = vadd.xlane.f32.xlu0 %v4824
        %v4828 = vpop.xlane.xlu0 %4827
        %v4829 = vmul.f32 %v4737, %v4803
        %v4830 = vmul.f32 %v4769, %v4803
        %4831 = vadd.xlane.f32.xlu0 %v4829
        %v4832 = vpop.xlane.xlu0 %4831
        %4833 = vadd.xlane.f32.xlu0 %v4830
        %v4834 = vpop.xlane.xlu0 %4833
        %v4835 = vmul.f32 %v4737, %v4804
        %v4836 = vmul.f32 %v4769, %v4804
        %4837 = vadd.xlane.f32.xlu0 %v4835
        %v4838 = vpop.xlane.xlu0 %4837
        %4839 = vadd.xlane.f32.xlu0 %v4836
        %v4840 = vpop.xlane.xlu0 %4839
        %v4841 = vmul.f32 %v4738, %v4803
        %v4842 = vmul.f32 %v4770, %v4803
        %4843 = vadd.xlane.f32.xlu0 %v4841
        %v4844 = vpop.xlane.xlu0 %4843
        %4845 = vadd.xlane.f32.xlu0 %v4842
        %v4846 = vpop.xlane.xlu0 %4845
        %v4847 = vmul.f32 %v4738, %v4804
        %v4848 = vmul.f32 %v4770, %v4804
        %4849 = vadd.xlane.f32.xlu0 %v4847
        %v4850 = vpop.xlane.xlu0 %4849
        %4851 = vadd.xlane.f32.xlu0 %v4848
        %v4852 = vpop.xlane.xlu0 %4851
        %v4853 = vmul.f32 %v4739, %v4803
        %v4854 = vmul.f32 %v4771, %v4803
        %4855 = vadd.xlane.f32.xlu0 %v4853
        %v4856 = vpop.xlane.xlu0 %4855
        %4857 = vadd.xlane.f32.xlu0 %v4854
        %v4858 = vpop.xlane.xlu0 %4857
        %v4859 = vmul.f32 %v4739, %v4804
        %v4860 = vmul.f32 %v4771, %v4804
        %4861 = vadd.xlane.f32.xlu0 %v4859
        %v4862 = vpop.xlane.xlu0 %4861
        %4863 = vadd.xlane.f32.xlu0 %v4860
        %v4864 = vpop.xlane.xlu0 %4863
        %v4865 = vmul.f32 %v4740, %v4803
        %v4866 = vmul.f32 %v4772, %v4803
        %4867 = vadd.xlane.f32.xlu0 %v4865
        %v4868 = vpop.xlane.xlu0 %4867
        %4869 = vadd.xlane.f32.xlu0 %v4866
        %v4870 = vpop.xlane.xlu0 %4869
        %v4871 = vmul.f32 %v4740, %v4804
        %v4872 = vmul.f32 %v4772, %v4804
        %4873 = vadd.xlane.f32.xlu0 %v4871
        %v4874 = vpop.xlane.xlu0 %4873
        %4875 = vadd.xlane.f32.xlu0 %v4872
        %v4876 = vpop.xlane.xlu0 %4875
        %v4877 = vmul.f32 %v4741, %v4803
        %v4878 = vmul.f32 %v4773, %v4803
        %4879 = vadd.xlane.f32.xlu0 %v4877
        %v4880 = vpop.xlane.xlu0 %4879
        %4881 = vadd.xlane.f32.xlu0 %v4878
        %v4882 = vpop.xlane.xlu0 %4881
        %v4883 = vmul.f32 %v4741, %v4804
        %v4884 = vmul.f32 %v4773, %v4804
        %4885 = vadd.xlane.f32.xlu0 %v4883
        %v4886 = vpop.xlane.xlu0 %4885
        %4887 = vadd.xlane.f32.xlu0 %v4884
        %v4888 = vpop.xlane.xlu0 %4887
        %v4889 = vmul.f32 %v4742, %v4803
        %v4890 = vmul.f32 %v4774, %v4803
        %4891 = vadd.xlane.f32.xlu0 %v4889
        %v4892 = vpop.xlane.xlu0 %4891
        %4893 = vadd.xlane.f32.xlu0 %v4890
        %v4894 = vpop.xlane.xlu0 %4893
        %v4895 = vmul.f32 %v4742, %v4804
        %v4896 = vmul.f32 %v4774, %v4804
        %4897 = vadd.xlane.f32.xlu0 %v4895
        %v4898 = vpop.xlane.xlu0 %4897
        %4899 = vadd.xlane.f32.xlu0 %v4896
        %v4900 = vpop.xlane.xlu0 %4899
        %v4901 = vmul.f32 %v4743, %v4803
        %v4902 = vmul.f32 %v4775, %v4803
        %4903 = vadd.xlane.f32.xlu0 %v4901
        %v4904 = vpop.xlane.xlu0 %4903
        %4905 = vadd.xlane.f32.xlu0 %v4902
        %v4906 = vpop.xlane.xlu0 %4905
        %v4907 = vmul.f32 %v4743, %v4804
        %v4908 = vmul.f32 %v4775, %v4804
        %4909 = vadd.xlane.f32.xlu0 %v4907
        %v4910 = vpop.xlane.xlu0 %4909
        %4911 = vadd.xlane.f32.xlu0 %v4908
        %v4912 = vpop.xlane.xlu0 %4911
        %v4913 = vmul.f32 %v4744, %v4803
        %v4914 = vmul.f32 %v4776, %v4803
        %4915 = vadd.xlane.f32.xlu0 %v4913
        %v4916 = vpop.xlane.xlu0 %4915
        %4917 = vadd.xlane.f32.xlu0 %v4914
        %v4918 = vpop.xlane.xlu0 %4917
        %v4919 = vmul.f32 %v4744, %v4804
        %v4920 = vmul.f32 %v4776, %v4804
        %4921 = vadd.xlane.f32.xlu0 %v4919
        %v4922 = vpop.xlane.xlu0 %4921
        %4923 = vadd.xlane.f32.xlu0 %v4920
        %v4924 = vpop.xlane.xlu0 %4923
        %v4925 = vmul.f32 %v4745, %v4803
        %v4926 = vmul.f32 %v4777, %v4803
        %4927 = vadd.xlane.f32.xlu0 %v4925
        %v4928 = vpop.xlane.xlu0 %4927
        %4929 = vadd.xlane.f32.xlu0 %v4926
        %v4930 = vpop.xlane.xlu0 %4929
        %v4931 = vmul.f32 %v4745, %v4804
        %v4932 = vmul.f32 %v4777, %v4804
        %4933 = vadd.xlane.f32.xlu0 %v4931
        %v4934 = vpop.xlane.xlu0 %4933
        %4935 = vadd.xlane.f32.xlu0 %v4932
        %v4936 = vpop.xlane.xlu0 %4935
        %v4937 = vmul.f32 %v4746, %v4803
        %v4938 = vmul.f32 %v4778, %v4803
        %4939 = vadd.xlane.f32.xlu0 %v4937
        %v4940 = vpop.xlane.xlu0 %4939
        %4941 = vadd.xlane.f32.xlu0 %v4938
        %v4942 = vpop.xlane.xlu0 %4941
        %v4943 = vmul.f32 %v4746, %v4804
        %v4944 = vmul.f32 %v4778, %v4804
        %4945 = vadd.xlane.f32.xlu0 %v4943
        %v4946 = vpop.xlane.xlu0 %4945
        %4947 = vadd.xlane.f32.xlu0 %v4944
        %v4948 = vpop.xlane.xlu0 %4947
        %v4949 = vmul.f32 %v4747, %v4803
        %v4950 = vmul.f32 %v4779, %v4803
        %4951 = vadd.xlane.f32.xlu0 %v4949
        %v4952 = vpop.xlane.xlu0 %4951
        %4953 = vadd.xlane.f32.xlu0 %v4950
        %v4954 = vpop.xlane.xlu0 %4953
        %v4955 = vmul.f32 %v4747, %v4804
        %v4956 = vmul.f32 %v4779, %v4804
        %4957 = vadd.xlane.f32.xlu0 %v4955
        %v4958 = vpop.xlane.xlu0 %4957
        %4959 = vadd.xlane.f32.xlu0 %v4956
        %v4960 = vpop.xlane.xlu0 %4959
        %v4961 = vmul.f32 %v4748, %v4803
        %v4962 = vmul.f32 %v4780, %v4803
        %4963 = vadd.xlane.f32.xlu0 %v4961
        %v4964 = vpop.xlane.xlu0 %4963
        %4965 = vadd.xlane.f32.xlu0 %v4962
        %v4966 = vpop.xlane.xlu0 %4965
        %v4967 = vmul.f32 %v4748, %v4804
        %v4968 = vmul.f32 %v4780, %v4804
        %4969 = vadd.xlane.f32.xlu0 %v4967
        %v4970 = vpop.xlane.xlu0 %4969
        %4971 = vadd.xlane.f32.xlu0 %v4968
        %v4972 = vpop.xlane.xlu0 %4971
        %v4973 = vmul.f32 %v4749, %v4803
        %v4974 = vmul.f32 %v4781, %v4803
        %4975 = vadd.xlane.f32.xlu0 %v4973
        %v4976 = vpop.xlane.xlu0 %4975
        %4977 = vadd.xlane.f32.xlu0 %v4974
        %v4978 = vpop.xlane.xlu0 %4977
        %v4979 = vmul.f32 %v4749, %v4804
        %v4980 = vmul.f32 %v4781, %v4804
        %4981 = vadd.xlane.f32.xlu0 %v4979
        %v4982 = vpop.xlane.xlu0 %4981
        %4983 = vadd.xlane.f32.xlu0 %v4980
        %v4984 = vpop.xlane.xlu0 %4983
        %v4985 = vmul.f32 %v4750, %v4803
        %v4986 = vmul.f32 %v4782, %v4803
        %4987 = vadd.xlane.f32.xlu0 %v4985
        %v4988 = vpop.xlane.xlu0 %4987
        %4989 = vadd.xlane.f32.xlu0 %v4986
        %v4990 = vpop.xlane.xlu0 %4989
        %v4991 = vmul.f32 %v4750, %v4804
        %v4992 = vmul.f32 %v4782, %v4804
        %4993 = vadd.xlane.f32.xlu0 %v4991
        %v4994 = vpop.xlane.xlu0 %4993
        %4995 = vadd.xlane.f32.xlu0 %v4992
        %v4996 = vpop.xlane.xlu0 %4995
        %v4997 = vmul.f32 %v4751, %v4803
        %v4998 = vmul.f32 %v4783, %v4803
        %4999 = vadd.xlane.f32.xlu0 %v4997
        %v5000 = vpop.xlane.xlu0 %4999
        %5001 = vadd.xlane.f32.xlu0 %v4998
        %v5002 = vpop.xlane.xlu0 %5001
        %v5003 = vmul.f32 %v4751, %v4804
        %v5004 = vmul.f32 %v4783, %v4804
        %5005 = vadd.xlane.f32.xlu0 %v5003
        %v5006 = vpop.xlane.xlu0 %5005
        %5007 = vadd.xlane.f32.xlu0 %v5004
        %v5008 = vpop.xlane.xlu0 %5007
        %v5009 = vmul.f32 %v4752, %v4803
        %v5010 = vmul.f32 %v4784, %v4803
        %5011 = vadd.xlane.f32.xlu0 %v5009
        %v5012 = vpop.xlane.xlu0 %5011
        %5013 = vadd.xlane.f32.xlu0 %v5010
        %v5014 = vpop.xlane.xlu0 %5013
        %v5015 = vmul.f32 %v4752, %v4804
        %v5016 = vmul.f32 %v4784, %v4804
        %5017 = vadd.xlane.f32.xlu0 %v5015
        %v5018 = vpop.xlane.xlu0 %5017
        %5019 = vadd.xlane.f32.xlu0 %v5016
        %v5020 = vpop.xlane.xlu0 %5019
        %v5021 = vmul.f32 %v4753, %v4803
        %v5022 = vmul.f32 %v4785, %v4803
        %5023 = vadd.xlane.f32.xlu0 %v5021
        %v5024 = vpop.xlane.xlu0 %5023
        %5025 = vadd.xlane.f32.xlu0 %v5022
        %v5026 = vpop.xlane.xlu0 %5025
        %v5027 = vmul.f32 %v4753, %v4804
        %v5028 = vmul.f32 %v4785, %v4804
        %5029 = vadd.xlane.f32.xlu0 %v5027
        %v5030 = vpop.xlane.xlu0 %5029
        %5031 = vadd.xlane.f32.xlu0 %v5028
        %v5032 = vpop.xlane.xlu0 %5031
        %v5033 = vmul.f32 %v4754, %v4803
        %v5034 = vmul.f32 %v4786, %v4803
        %5035 = vadd.xlane.f32.xlu0 %v5033
        %v5036 = vpop.xlane.xlu0 %5035
        %5037 = vadd.xlane.f32.xlu0 %v5034
        %v5038 = vpop.xlane.xlu0 %5037
        %v5039 = vmul.f32 %v4754, %v4804
        %v5040 = vmul.f32 %v4786, %v4804
        %5041 = vadd.xlane.f32.xlu0 %v5039
        %v5042 = vpop.xlane.xlu0 %5041
        %5043 = vadd.xlane.f32.xlu0 %v5040
        %v5044 = vpop.xlane.xlu0 %5043
        %v5045 = vmul.f32 %v4755, %v4803
        %v5046 = vmul.f32 %v4787, %v4803
        %5047 = vadd.xlane.f32.xlu0 %v5045
        %v5048 = vpop.xlane.xlu0 %5047
        %5049 = vadd.xlane.f32.xlu0 %v5046
        %v5050 = vpop.xlane.xlu0 %5049
        %v5051 = vmul.f32 %v4755, %v4804
        %v5052 = vmul.f32 %v4787, %v4804
        %5053 = vadd.xlane.f32.xlu0 %v5051
        %v5054 = vpop.xlane.xlu0 %5053
        %5055 = vadd.xlane.f32.xlu0 %v5052
        %v5056 = vpop.xlane.xlu0 %5055
        %v5057 = vmul.f32 %v4756, %v4803
        %v5058 = vmul.f32 %v4788, %v4803
        %5059 = vadd.xlane.f32.xlu0 %v5057
        %v5060 = vpop.xlane.xlu0 %5059
        %5061 = vadd.xlane.f32.xlu0 %v5058
        %v5062 = vpop.xlane.xlu0 %5061
        %v5063 = vmul.f32 %v4756, %v4804
        %v5064 = vmul.f32 %v4788, %v4804
        %5065 = vadd.xlane.f32.xlu0 %v5063
        %v5066 = vpop.xlane.xlu0 %5065
        %5067 = vadd.xlane.f32.xlu0 %v5064
        %v5068 = vpop.xlane.xlu0 %5067
        %v5069 = vmul.f32 %v4757, %v4803
        %v5070 = vmul.f32 %v4789, %v4803
        %5071 = vadd.xlane.f32.xlu0 %v5069
        %v5072 = vpop.xlane.xlu0 %5071
        %5073 = vadd.xlane.f32.xlu0 %v5070
        %v5074 = vpop.xlane.xlu0 %5073
        %v5075 = vmul.f32 %v4757, %v4804
        %v5076 = vmul.f32 %v4789, %v4804
        %5077 = vadd.xlane.f32.xlu0 %v5075
        %v5078 = vpop.xlane.xlu0 %5077
        %5079 = vadd.xlane.f32.xlu0 %v5076
        %v5080 = vpop.xlane.xlu0 %5079
        %v5081 = vmul.f32 %v4758, %v4803
        %v5082 = vmul.f32 %v4790, %v4803
        %5083 = vadd.xlane.f32.xlu0 %v5081
        %v5084 = vpop.xlane.xlu0 %5083
        %5085 = vadd.xlane.f32.xlu0 %v5082
        %v5086 = vpop.xlane.xlu0 %5085
        %v5087 = vmul.f32 %v4758, %v4804
        %v5088 = vmul.f32 %v4790, %v4804
        %5089 = vadd.xlane.f32.xlu0 %v5087
        %v5090 = vpop.xlane.xlu0 %5089
        %5091 = vadd.xlane.f32.xlu0 %v5088
        %v5092 = vpop.xlane.xlu0 %5091
        %v5093 = vmul.f32 %v4759, %v4803
        %v5094 = vmul.f32 %v4791, %v4803
        %5095 = vadd.xlane.f32.xlu0 %v5093
        %v5096 = vpop.xlane.xlu0 %5095
        %5097 = vadd.xlane.f32.xlu0 %v5094
        %v5098 = vpop.xlane.xlu0 %5097
        %v5099 = vmul.f32 %v4759, %v4804
        %v5100 = vmul.f32 %v4791, %v4804
        %5101 = vadd.xlane.f32.xlu0 %v5099
        %v5102 = vpop.xlane.xlu0 %5101
        %5103 = vadd.xlane.f32.xlu0 %v5100
        %v5104 = vpop.xlane.xlu0 %5103
        %v5105 = vmul.f32 %v4760, %v4803
        %v5106 = vmul.f32 %v4792, %v4803
        %5107 = vadd.xlane.f32.xlu0 %v5105
        %v5108 = vpop.xlane.xlu0 %5107
        %5109 = vadd.xlane.f32.xlu0 %v5106
        %v5110 = vpop.xlane.xlu0 %5109
        %v5111 = vmul.f32 %v4760, %v4804
        %v5112 = vmul.f32 %v4792, %v4804
        %5113 = vadd.xlane.f32.xlu0 %v5111
        %v5114 = vpop.xlane.xlu0 %5113
        %5115 = vadd.xlane.f32.xlu0 %v5112
        %v5116 = vpop.xlane.xlu0 %5115
        %v5117 = vmul.f32 %v4761, %v4803
        %v5118 = vmul.f32 %v4793, %v4803
        %5119 = vadd.xlane.f32.xlu0 %v5117
        %v5120 = vpop.xlane.xlu0 %5119
        %5121 = vadd.xlane.f32.xlu0 %v5118
        %v5122 = vpop.xlane.xlu0 %5121
        %v5123 = vmul.f32 %v4761, %v4804
        %v5124 = vmul.f32 %v4793, %v4804
        %5125 = vadd.xlane.f32.xlu0 %v5123
        %v5126 = vpop.xlane.xlu0 %5125
        %5127 = vadd.xlane.f32.xlu0 %v5124
        %v5128 = vpop.xlane.xlu0 %5127
        %v5129 = vmul.f32 %v4762, %v4803
        %v5130 = vmul.f32 %v4794, %v4803
        %5131 = vadd.xlane.f32.xlu0 %v5129
        %v5132 = vpop.xlane.xlu0 %5131
        %5133 = vadd.xlane.f32.xlu0 %v5130
        %v5134 = vpop.xlane.xlu0 %5133
        %v5135 = vmul.f32 %v4762, %v4804
        %v5136 = vmul.f32 %v4794, %v4804
        %5137 = vadd.xlane.f32.xlu0 %v5135
        %v5138 = vpop.xlane.xlu0 %5137
        %5139 = vadd.xlane.f32.xlu0 %v5136
        %v5140 = vpop.xlane.xlu0 %5139
        %v5141 = vmul.f32 %v4763, %v4803
        %v5142 = vmul.f32 %v4795, %v4803
        %5143 = vadd.xlane.f32.xlu0 %v5141
        %v5144 = vpop.xlane.xlu0 %5143
        %5145 = vadd.xlane.f32.xlu0 %v5142
        %v5146 = vpop.xlane.xlu0 %5145
        %v5147 = vmul.f32 %v4763, %v4804
        %v5148 = vmul.f32 %v4795, %v4804
        %5149 = vadd.xlane.f32.xlu0 %v5147
        %v5150 = vpop.xlane.xlu0 %5149
        %5151 = vadd.xlane.f32.xlu0 %v5148
        %v5152 = vpop.xlane.xlu0 %5151
        %v5153 = vmul.f32 %v4764, %v4803
        %v5154 = vmul.f32 %v4796, %v4803
        %5155 = vadd.xlane.f32.xlu0 %v5153
        %v5156 = vpop.xlane.xlu0 %5155
        %5157 = vadd.xlane.f32.xlu0 %v5154
        %v5158 = vpop.xlane.xlu0 %5157
        %v5159 = vmul.f32 %v4764, %v4804
        %v5160 = vmul.f32 %v4796, %v4804
        %5161 = vadd.xlane.f32.xlu0 %v5159
        %v5162 = vpop.xlane.xlu0 %5161
        %5163 = vadd.xlane.f32.xlu0 %v5160
        %v5164 = vpop.xlane.xlu0 %5163
        %v5165 = vmul.f32 %v4765, %v4803
        %v5166 = vmul.f32 %v4797, %v4803
        %5167 = vadd.xlane.f32.xlu0 %v5165
        %v5168 = vpop.xlane.xlu0 %5167
        %5169 = vadd.xlane.f32.xlu0 %v5166
        %v5170 = vpop.xlane.xlu0 %5169
        %v5171 = vmul.f32 %v4765, %v4804
        %v5172 = vmul.f32 %v4797, %v4804
        %5173 = vadd.xlane.f32.xlu0 %v5171
        %v5174 = vpop.xlane.xlu0 %5173
        %5175 = vadd.xlane.f32.xlu0 %v5172
        %v5176 = vpop.xlane.xlu0 %5175
        %v5177 = vmul.f32 %v4766, %v4803
        %v5178 = vmul.f32 %v4798, %v4803
        %5179 = vadd.xlane.f32.xlu0 %v5177
        %v5180 = vpop.xlane.xlu0 %5179
        %5181 = vadd.xlane.f32.xlu0 %v5178
        %v5182 = vpop.xlane.xlu0 %5181
        %v5183 = vmul.f32 %v4766, %v4804
        %v5184 = vmul.f32 %v4798, %v4804
        %5185 = vadd.xlane.f32.xlu0 %v5183
        %v5186 = vpop.xlane.xlu0 %5185
        %5187 = vadd.xlane.f32.xlu0 %v5184
        %v5188 = vpop.xlane.xlu0 %5187
        %vm5189 = vcmask 7168
        %v5190 = vsel %vm5189, %v4808, %v4820
        %v5191 = vsel %vm5189, %v4810, %v4822
        %vm5192 = vcmask 15360
        %v5193 = vsel %vm5192, %v5190, %v4832
        %v5194 = vsel %vm5192, %v5191, %v4834
        %vm5195 = vcmask 23552
        %v5196 = vsel %vm5195, %v5193, %v4844
        %v5197 = vsel %vm5195, %v5194, %v4846
        %vm5198 = vcmask 31744
        %v5199 = vsel %vm5198, %v5196, %v4856
        %v5200 = vsel %vm5198, %v5197, %v4858
        %vm5201 = vcmask 39936
        %v5202 = vsel %vm5201, %v5199, %v4868
        %v5203 = vsel %vm5201, %v5200, %v4870
        %vm5204 = vcmask 48128
        %v5205 = vsel %vm5204, %v5202, %v4880
        %v5206 = vsel %vm5204, %v5203, %v4882
        %vm5207 = vcmask 56320
        %v5208 = vsel %vm5207, %v5205, %v4892
        %v5209 = vsel %vm5207, %v5206, %v4894
        %vm5210 = vcmask 64512
        %v5211 = vsel %vm5210, %v5208, %v4904
        %v5212 = vsel %vm5210, %v5209, %v4906
        %vm5213 = vcmask 72704
        %v5214 = vsel %vm5213, %v5211, %v4916
        %v5215 = vsel %vm5213, %v5212, %v4918
        %vm5216 = vcmask 80896
        %v5217 = vsel %vm5216, %v5214, %v4928
        %v5218 = vsel %vm5216, %v5215, %v4930
        %vm5219 = vcmask 89088
        %v5220 = vsel %vm5219, %v5217, %v4940
        %v5221 = vsel %vm5219, %v5218, %v4942
        %vm5222 = vcmask 97280
        %v5223 = vsel %vm5222, %v5220, %v4952
        %v5224 = vsel %vm5222, %v5221, %v4954
        %vm5225 = vcmask 105472
        %v5226 = vsel %vm5225, %v5223, %v4964
        %v5227 = vsel %vm5225, %v5224, %v4966
        %vm5228 = vcmask 113664
        %v5229 = vsel %vm5228, %v5226, %v4976
        %v5230 = vsel %vm5228, %v5227, %v4978
        %vm5231 = vcmask 121856
        %v5232 = vsel %vm5231, %v5229, %v4988
        %v5233 = vsel %vm5231, %v5230, %v4990
        %v5234 = vsel %vm5189, %v5000, %v5012
        %v5235 = vsel %vm5189, %v5002, %v5014
        %v5236 = vsel %vm5192, %v5234, %v5024
        %v5237 = vsel %vm5192, %v5235, %v5026
        %v5238 = vsel %vm5195, %v5236, %v5036
        %v5239 = vsel %vm5195, %v5237, %v5038
        %v5240 = vsel %vm5198, %v5238, %v5048
        %v5241 = vsel %vm5198, %v5239, %v5050
        %v5242 = vsel %vm5201, %v5240, %v5060
        %v5243 = vsel %vm5201, %v5241, %v5062
        %v5244 = vsel %vm5204, %v5242, %v5072
        %v5245 = vsel %vm5204, %v5243, %v5074
        %v5246 = vsel %vm5207, %v5244, %v5084
        %v5247 = vsel %vm5207, %v5245, %v5086
        %v5248 = vsel %vm5210, %v5246, %v5096
        %v5249 = vsel %vm5210, %v5247, %v5098
        %v5250 = vsel %vm5213, %v5248, %v5108
        %v5251 = vsel %vm5213, %v5249, %v5110
        %v5252 = vsel %vm5216, %v5250, %v5120
        %v5253 = vsel %vm5216, %v5251, %v5122
        %v5254 = vsel %vm5219, %v5252, %v5132
        %v5255 = vsel %vm5219, %v5253, %v5134
        %v5256 = vsel %vm5222, %v5254, %v5144
        %v5257 = vsel %vm5222, %v5255, %v5146
        %v5258 = vsel %vm5225, %v5256, %v5156
        %v5259 = vsel %vm5225, %v5257, %v5158
        %v5260 = vsel %vm5228, %v5258, %v5168
        %v5261 = vsel %vm5228, %v5259, %v5170
        %v5262 = vsel %vm5231, %v5260, %v5180
        %v5263 = vsel %vm5231, %v5261, %v5182
        %5266 = vrot.lane.b32.xlu0 %v5262, 16
        %v5267 = vpop.permute.xlu0 %5266
        %5268 = vrot.lane.b32.xlu0 %v5263, 16
        %v5269 = vpop.permute.xlu0 %5268
        %vm5272 = vcmask 130048
        %v5273 = vsel %vm5272, %v5232, %v5267
        %v5274 = vsel %vm5272, %v5233, %v5269
        %v5275 = vmul.f32 %v5273, 0.015625
        %v5276 = vmul.f32 %v5274, 0.015625
        %v5277 = vsel %vm5189, %v4814, %v4826
        %v5278 = vsel %vm5189, %v4816, %v4828
        %v5279 = vsel %vm5192, %v5277, %v4838
        %v5280 = vsel %vm5192, %v5278, %v4840
        %v5281 = vsel %vm5195, %v5279, %v4850
        %v5282 = vsel %vm5195, %v5280, %v4852
        %v5283 = vsel %vm5198, %v5281, %v4862
        %v5284 = vsel %vm5198, %v5282, %v4864
        %v5285 = vsel %vm5201, %v5283, %v4874
        %v5286 = vsel %vm5201, %v5284, %v4876
        %v5287 = vsel %vm5204, %v5285, %v4886
        %v5288 = vsel %vm5204, %v5286, %v4888
        %v5289 = vsel %vm5207, %v5287, %v4898
        %v5290 = vsel %vm5207, %v5288, %v4900
        %v5291 = vsel %vm5210, %v5289, %v4910
        %v5292 = vsel %vm5210, %v5290, %v4912
        %v5293 = vsel %vm5213, %v5291, %v4922
        %v5294 = vsel %vm5213, %v5292, %v4924
        %v5295 = vsel %vm5216, %v5293, %v4934
        %v5296 = vsel %vm5216, %v5294, %v4936
        %v5297 = vsel %vm5219, %v5295, %v4946
        %v5298 = vsel %vm5219, %v5296, %v4948
        %v5299 = vsel %vm5222, %v5297, %v4958
        %v5300 = vsel %vm5222, %v5298, %v4960
        %v5301 = vsel %vm5225, %v5299, %v4970
        %v5302 = vsel %vm5225, %v5300, %v4972
        %v5303 = vsel %vm5228, %v5301, %v4982
        %v5304 = vsel %vm5228, %v5302, %v4984
        %v5305 = vsel %vm5231, %v5303, %v4994
        %v5306 = vsel %vm5231, %v5304, %v4996
        %v5307 = vsel %vm5189, %v5006, %v5018
        %v5308 = vsel %vm5189, %v5008, %v5020
        %v5309 = vsel %vm5192, %v5307, %v5030
        %v5310 = vsel %vm5192, %v5308, %v5032
        %v5311 = vsel %vm5195, %v5309, %v5042
        %v5312 = vsel %vm5195, %v5310, %v5044
        %v5313 = vsel %vm5198, %v5311, %v5054
        %v5314 = vsel %vm5198, %v5312, %v5056
        %v5315 = vsel %vm5201, %v5313, %v5066
        %v5316 = vsel %vm5201, %v5314, %v5068
        %v5317 = vsel %vm5204, %v5315, %v5078
        %v5318 = vsel %vm5204, %v5316, %v5080
        %v5319 = vsel %vm5207, %v5317, %v5090
        %v5320 = vsel %vm5207, %v5318, %v5092
        %v5321 = vsel %vm5210, %v5319, %v5102
        %v5322 = vsel %vm5210, %v5320, %v5104
        %v5323 = vsel %vm5213, %v5321, %v5114
        %v5324 = vsel %vm5213, %v5322, %v5116
        %v5325 = vsel %vm5216, %v5323, %v5126
        %v5326 = vsel %vm5216, %v5324, %v5128
        %v5327 = vsel %vm5219, %v5325, %v5138
        %v5328 = vsel %vm5219, %v5326, %v5140
        %v5329 = vsel %vm5222, %v5327, %v5150
        %v5330 = vsel %vm5222, %v5328, %v5152
        %v5331 = vsel %vm5225, %v5329, %v5162
        %v5332 = vsel %vm5225, %v5330, %v5164
        %v5333 = vsel %vm5228, %v5331, %v5174
        %v5334 = vsel %vm5228, %v5332, %v5176
        %v5335 = vsel %vm5231, %v5333, %v5186
        %v5336 = vsel %vm5231, %v5334, %v5188
        %5339 = vrot.lane.b32.xlu0 %v5335, 16
        %v5340 = vpop.permute.xlu0 %5339
        %5341 = vrot.lane.b32.xlu0 %v5336, 16
        %v5342 = vpop.permute.xlu0 %5341
        %v5345 = vsel %vm5272, %v5305, %v5340
        %v5346 = vsel %vm5272, %v5306, %v5342
        %v5347 = vmul.f32 %v5345, 0.015625
        %v5348 = vmul.f32 %v5346, 0.015625
        %vm5351 = vcmask 1040384
        %v5352 = vrot.slane %v5347, 7
        %v5353 = vrot.slane %v5348, 7
        %v5354 = vsel %vm5351, %v5352, %v5353
        %v5357 = vsel %vm5351, 0.0, %v5352
        %v5358 = vadd.f32 %v5357, %v5275
        %v5359 = vadd.f32 %v5354, %v5276
        %v5360 = vmul.f32 %v5358, 0.5
        %v5361 = vmul.f32 %v5359, 0.5
        %v5362 = vadd.f32 %v5275, %v5347
        %v5363 = vadd.f32 %v5276, %v5348
        %v5364 = vmul.f32 %v5362, 0.5
        %v5365 = vmul.f32 %v5363, 0.5
        %v5367 = vrot.slane %v5360, 5
        %v5370 = vrot.slane %v5364, 4
        %v5372 = vrot.slane %v5360, 4
        %v5374 = vrot.slane %v5364, 3
        %v5376 = vrot.slane %v5360, 3
        %v5378 = vrot.slane %v5364, 2
        %v5380 = vrot.slane %v5360, 2
        %v5382 = vrot.slane %v5364, 1
        %v5384 = vrot.slane %v5360, 1
        %v5386 = vrot.slane %v5364, 7
        %v5388 = vrot.slane %v5360, 7
        %v5390 = vrot.slane %v5364, 6
        %v5392 = vrot.slane %v5360, 6
        %vm5394 = vcmask 1042432
        %v5395 = vsel %vm5394, 0.0, %v5367
        %vm5396 = vcmask 1043456
        %v5397 = vsel %vm5396, %v5395, %v5370
        %vm5398 = vcmask 1044480
        %v5399 = vsel %vm5398, %v5397, %v5372
        %vm5400 = vcmask 1045504
        %v5401 = vsel %vm5400, %v5399, %v5374
        %vm5402 = vcmask 1046528
        %v5403 = vsel %vm5402, %v5401, %v5376
        %v5404 = vsel %vm5351, %v5378, %v5380
        %vm5405 = vcmask 1041408
        %v5406 = vsel %vm5405, %v5404, %v5382
        %v5407 = vsel %vm5394, %v5406, %v5384
        %v5408 = vsel %vm5396, %v5407, %v5364
        %v5409 = vsel %vm5398, %v5408, %v5360
        %v5410 = vsel %vm5400, %v5409, %v5386
        %v5411 = vsel %vm5402, %v5410, %v5388
        %v5412 = vsel %vm5351, %v5390, %v5392
        %v5414 = vrot.slane %v5361, 7
        %v5417 = vrot.slane %v5365, 6
        %v5419 = vrot.slane %v5361, 6
        %v5421 = vrot.slane %v5365, 5
        %v5423 = vrot.slane %v5361, 5
        %v5425 = vrot.slane %v5365, 4
        %v5427 = vrot.slane %v5361, 4
        %v5429 = vrot.slane %v5365, 3
        %v5431 = vrot.slane %v5361, 3
        %v5433 = vrot.slane %v5365, 2
        %v5435 = vrot.slane %v5361, 2
        %v5437 = vrot.slane %v5365, 1
        %v5439 = vrot.slane %v5361, 1
        %v5441 = vsel %vm5351, %v5386, %v5414
        %v5442 = vsel %vm5405, %v5441, %v5417
        %v5443 = vsel %vm5394, %v5442, %v5419
        %v5444 = vsel %vm5396, %v5443, %v5421
        %v5445 = vsel %vm5398, %v5444, %v5423
        %v5446 = vsel %vm5400, %v5445, %v5425
        %v5447 = vsel %vm5402, %v5446, %v5427
        %v5448 = vsel %vm5351, %v5429, %v5431
        %v5449 = vsel %vm5405, %v5448, %v5433
        %v5450 = vsel %vm5394, %v5449, %v5435
        %v5451 = vsel %vm5396, %v5450, %v5437
        %v5452 = vsel %vm5398, %v5451, %v5439
        %v5453 = vsel %vm5400, %v5452, %v5365
        %v5454 = vsel %vm5402, %v5453, %v5361
        %v5455 = vrot.slane %v5365, 7
        %v5457 = vsel %vm5351, %v5455, 0.0
        %v5460 = vrot.slane %v5447, 6
        %v5461 = vrot.slane %v5454, 6
        %v5462 = vsel %vm5405, %v5460, %v5461
        %v5466 = vrot.slane %v5457, 6
        %v5468 = vsel %vm5405, %v5412, %v5460
        %v5469 = vsel %vm5405, %v5461, %v5466
        %v5470 = vld [vmem:[%s4] sm:$0xff]
        %v5471 = vld [vmem:[%s4 + $0x8] sm:$0xff]
        %v5472 = vld [vmem:[%s4 + $0x10] sm:$0xff]
        %v5473 = vld [vmem:[%s4 + $0x18] sm:$0xff]
        %s5474 = scalar_lea.vmem %s4, 32
        %v5475 = vld [vmem:[%s5474] sm:$0xff]
        %v5476 = vld [vmem:[%s5474 + $0x8] sm:$0xff]
        %v5477 = vld [vmem:[%s5474 + $0x10] sm:$0xff]
        %v5478 = vld [vmem:[%s5474 + $0x18] sm:$0xff]
        %v5483 = vrot.slane %v5403, 1
        %v5484 = vrot.slane %v5411, 1
        %v5485 = vsel %vm5402, %v5483, %v5484
        %v5486 = vrot.slane %v5468, 1
        %v5487 = vsel %vm5402, %v5484, %v5486
        %v5488 = vrot.slane %v5462, 1
        %v5489 = vsel %vm5402, %v5486, %v5488
        %v5490 = vrot.slane %v5469, 1
        %v5491 = vsel %vm5402, %v5488, %v5490
        %vm5492 = vcmask 261120
        %v5494 = vsel %vm5492, %v5475, 0
        %v5497 = vsel %vm5492, %v5476, 0
        %v5500 = vsel %vm5492, %v5477, 0
        %v5503 = vsel %vm5492, %v5478, 0
        %v5505 = vsel %vm5492, %v5485, 0
        %v5507 = vsel %vm5492, %v5487, 0
        %v5509 = vsel %vm5492, %v5489, 0
        %v5511 = vsel %vm5492, %v5491, 0
        %5513 = vmatprep.subr.mxu0 0.0
        %5514 = vmatpush1.xpose.msra.mxu0 %v5505
        %5515 = vmatprep.subr.mxu0 0.0
        %5516 = vmatpush1.xpose.msra.mxu0 %v5507
        %5517 = vmatprep.subr.mxu0 0.0
        %5518 = vmatpush1.xpose.msra.mxu0 %v5509
        %5519 = vmatprep.subr.mxu0 0.0
        %5520 = vmatpush1.xpose.msra.mxu0 %v5511
        %5521 = vmatprep.subr.mxu0 0.0
        %5522 = vmatpush1.xpose.msra.mxu0 0.0
        %5523 = vmatprep.subr.mxu0 0.0
        %5524 = vmatpush1.xpose.msra.mxu0 0.0
        %5525 = vmatprep.subr.mxu0 0.0
        %5526 = vmatpush1.xpose.msra.mxu0 0.0
        %5527 = vmatprep.subr.mxu0 0.0
        %5528 = vmatpush1.xpose.msra.mxu0 0.0
        %5529 = vmatprep.subr.mxu0 0.0
        %5530 = vmatpush1.xpose.msra.mxu0 0.0
        %5531 = vmatprep.subr.mxu0 0.0
        %5532 = vmatpush1.xpose.msra.mxu0 0.0
        %5533 = vmatprep.subr.mxu0 0.0
        %5534 = vmatpush1.xpose.msra.mxu0 0.0
        %5535 = vmatprep.subr.mxu0 0.0
        %5536 = vmatpush1.xpose.msra.mxu0 0.0
        %5537 = vmatprep.subr.mxu0 0.0
        %5538 = vmatpush1.xpose.msra.mxu0 0.0
        %5539 = vmatprep.subr.mxu0 0.0
        %5540 = vmatpush1.xpose.msra.mxu0 0.0
        %5541 = vmatprep.subr.mxu0 0.0
        %5542 = vmatpush1.xpose.msra.mxu0 0.0
        %5543 = vmatprep.subr.mxu0 0.0
        %5544 = vmatpush1.xpose.msra.mxu0 0.0
        %5545 = vmatprep.subr.mxu0 0.0
        %5546 = vmatpush1.xpose.msra.mxu0 0.0
        %5547 = vmatprep.subr.mxu0 0.0
        %5548 = vmatpush1.xpose.msra.mxu0 0.0
        %5549 = vmatprep.subr.mxu0 0.0
        %5550 = vmatpush1.xpose.msra.mxu0 0.0
        %5551 = vmatprep.subr.mxu0 0.0
        %5552 = vmatpush1.xpose.msra.mxu0 0.0
        %5553 = vmatprep.subr.mxu0 0.0
        %5554 = vmatpush1.xpose.msra.mxu0 0.0
        %5555 = vmatprep.subr.mxu0 0.0
        %5556 = vmatpush1.xpose.msra.mxu0 0.0
        %5557 = vmatprep.subr.mxu0 0.0
        %5558 = vmatpush1.xpose.msra.mxu0 0.0
        %5559 = vmatprep.subr.mxu0 0.0
        %5560 = vmatpush1.xpose.msra.mxu0 0.0
        %5561 = vmatprep.subr.mxu0 0.0
        %5562 = vmatpush1.xpose.msra.mxu0 0.0
        %5563 = vmatprep.subr.mxu0 0.0
        %5564 = vmatpush1.xpose.msra.mxu0 0.0
        %5565 = vmatprep.subr.mxu0 0.0
        %5566 = vmatpush1.xpose.msra.mxu0 0.0
        %5567 = vmatprep.subr.mxu0 0.0
        %5568 = vmatpush1.xpose.msra.mxu0 0.0
        %5569 = vmatprep.subr.mxu0 0.0
        %5570 = vmatpush1.xpose.msra.mxu0 0.0
        %5571 = vmatprep.subr.mxu0 0.0
        %5572 = vmatpush1.xpose.msra.mxu0 0.0
        %5573 = vmatprep.subr.mxu0 0.0
        %5574 = vmatpush1.xpose.msra.mxu0 0.0
        %5575 = vmatprep.subr.mxu0 0.0
        %5576 = vmatpush1.xpose.msra.mxu0 0.0
        %5577 = vmatprep.mubr.f32.mxu0 0.0
        %5578 = vmatmul.mubr.f32.gmra.mrb[0].mxu0 %v5494
        %v5579 = vpop.f32.mrb[0].mxu0
        %v5580 = vadd.f32 0.0, %v5579
        %v5581 = vpop.f32.mrb[0].mxu0
        %5582 = vmatprep.mubr.f32.mxu0 0.0
        %5583 = vmatmul.mubr.f32.gmra.mrb[0].mxu0 %v5497
        %v5584 = vpop.f32.mrb[0].mxu0
        %v5585 = vadd.f32 0.0, %v5584
        %v5586 = vpop.f32.mrb[0].mxu0
        %5587 = vmatprep.mubr.f32.mxu0 0.0
        %5588 = vmatmul.mubr.f32.gmra.mrb[0].mxu0 %v5500
        %v5589 = vpop.f32.mrb[0].mxu0
        %v5590 = vadd.f32 0.0, %v5589
        %v5591 = vpop.f32.mrb[0].mxu0
        %5592 = vmatprep.mubr.f32.mxu0 0.0
        %5593 = vmatmul.mubr.f32.gmra.mrb[0].mxu0 %v5503
        %v5594 = vpop.f32.mrb[0].mxu0
        %v5595 = vadd.f32 0.0, %v5594
        %v5596 = vpop.f32.mrb[0].mxu0
        %5597 = vdwg.mxu0
        %v5599 = vsel %vm5492, %v5470, 0
        %v5602 = vsel %vm5492, %v5471, 0
        %v5605 = vsel %vm5492, %v5472, 0
        %v5608 = vsel %vm5492, %v5473, 0
        %v5610 = vsel %vm5492, %v5403, 0
        %v5612 = vsel %vm5492, %v5411, 0
        %v5614 = vsel %vm5492, %v5468, 0
        %v5616 = vsel %vm5492, %v5462, 0
        %5618 = vmatprep.subr.mxu0 0.0
        %5619 = vmatpush1.xpose.msra.mxu0 %v5610
        %5620 = vmatprep.subr.mxu0 0.0
        %5621 = vmatpush1.xpose.msra.mxu0 %v5612
        %5622 = vmatprep.subr.mxu0 0.0
        %5623 = vmatpush1.xpose.msra.mxu0 %v5614
        %5624 = vmatprep.subr.mxu0 0.0
        %5625 = vmatpush1.xpose.msra.mxu0 %v5616
        %5626 = vmatprep.subr.mxu0 0.0
        %5627 = vmatpush1.xpose.msra.mxu0 0.0
        %5628 = vmatprep.subr.mxu0 0.0
        %5629 = vmatpush1.xpose.msra.mxu0 0.0
        %5630 = vmatprep.subr.mxu0 0.0
        %5631 = vmatpush1.xpose.msra.mxu0 0.0
        %5632 = vmatprep.subr.mxu0 0.0
        %5633 = vmatpush1.xpose.msra.mxu0 0.0
        %5634 = vmatprep.subr.mxu0 0.0
        %5635 = vmatpush1.xpose.msra.mxu0 0.0
        %5636 = vmatprep.subr.mxu0 0.0
        %5637 = vmatpush1.xpose.msra.mxu0 0.0
        %5638 = vmatprep.subr.mxu0 0.0
        %5639 = vmatpush1.xpose.msra.mxu0 0.0
        %5640 = vmatprep.subr.mxu0 0.0
        %5641 = vmatpush1.xpose.msra.mxu0 0.0
        %5642 = vmatprep.subr.mxu0 0.0
        %5643 = vmatpush1.xpose.msra.mxu0 0.0
        %5644 = vmatprep.subr.mxu0 0.0
        %5645 = vmatpush1.xpose.msra.mxu0 0.0
        %5646 = vmatprep.subr.mxu0 0.0
        %5647 = vmatpush1.xpose.msra.mxu0 0.0
        %5648 = vmatprep.subr.mxu0 0.0
        %5649 = vmatpush1.xpose.msra.mxu0 0.0
        %5650 = vmatprep.subr.mxu0 0.0
        %5651 = vmatpush1.xpose.msra.mxu0 0.0
        %5652 = vmatprep.subr.mxu0 0.0
        %5653 = vmatpush1.xpose.msra.mxu0 0.0
        %5654 = vmatprep.subr.mxu0 0.0
        %5655 = vmatpush1.xpose.msra.mxu0 0.0
        %5656 = vmatprep.subr.mxu0 0.0
        %5657 = vmatpush1.xpose.msra.mxu0 0.0
        %5658 = vmatprep.subr.mxu0 0.0
        %5659 = vmatpush1.xpose.msra.mxu0 0.0
        %5660 = vmatprep.subr.mxu0 0.0
        %5661 = vmatpush1.xpose.msra.mxu0 0.0
        %5662 = vmatprep.subr.mxu0 0.0
        %5663 = vmatpush1.xpose.msra.mxu0 0.0
        %5664 = vmatprep.subr.mxu0 0.0
        %5665 = vmatpush1.xpose.msra.mxu0 0.0
        %5666 = vmatprep.subr.mxu0 0.0
        %5667 = vmatpush1.xpose.msra.mxu0 0.0
        %5668 = vmatprep.subr.mxu0 0.0
        %5669 = vmatpush1.xpose.msra.mxu0 0.0
        %5670 = vmatprep.subr.mxu0 0.0
        %5671 = vmatpush1.xpose.msra.mxu0 0.0
        %5672 = vmatprep.subr.mxu0 0.0
        %5673 = vmatpush1.xpose.msra.mxu0 0.0
        %5674 = vmatprep.subr.mxu0 0.0
        %5675 = vmatpush1.xpose.msra.mxu0 0.0
        %5676 = vmatprep.subr.mxu0 0.0
        %5677 = vmatpush1.xpose.msra.mxu0 0.0
        %5678 = vmatprep.subr.mxu0 0.0
        %5679 = vmatpush1.xpose.msra.mxu0 0.0
        %5680 = vmatprep.subr.mxu0 0.0
        %5681 = vmatpush1.xpose.msra.mxu0 0.0
        %5682 = vmatprep.mubr.f32.mxu0 0.0
        %5683 = vmatmul.mubr.f32.gmra.mrb[0].mxu0 %v5599
        %v5684 = vpop.f32.mrb[0].mxu0
        %v5685 = vadd.f32 %v5580, %v5684
        %v5686 = vpop.f32.mrb[0].mxu0
        %5687 = vmatprep.mubr.f32.mxu0 0.0
        %5688 = vmatmul.mubr.f32.gmra.mrb[0].mxu0 %v5602
        %v5689 = vpop.f32.mrb[0].mxu0
        %v5690 = vadd.f32 %v5585, %v5689
        %v5691 = vpop.f32.mrb[0].mxu0
        %5692 = vmatprep.mubr.f32.mxu0 0.0
        %5693 = vmatmul.mubr.f32.gmra.mrb[0].mxu0 %v5605
        %v5694 = vpop.f32.mrb[0].mxu0
        %v5695 = vadd.f32 %v5590, %v5694
        %v5696 = vpop.f32.mrb[0].mxu0
        %5697 = vmatprep.mubr.f32.mxu0 0.0
        %5698 = vmatmul.mubr.f32.gmra.mrb[0].mxu0 %v5608
        %v5699 = vpop.f32.mrb[0].mxu0
        %v5700 = vadd.f32 %v5595, %v5699
        %v5701 = vpop.f32.mrb[0].mxu0
        %5702 = vdwg.mxu0
        %s5703 = scalar_lea.vmem %s4, 64
        %v5704 = vld [vmem:[%s5703] sm:$0xff]
        %v5705 = vld [vmem:[%s5703 + $0x8] sm:$0xff]
        %v5706 = vld [vmem:[%s5703 + $0x10] sm:$0xff]
        %v5707 = vld [vmem:[%s5703 + $0x18] sm:$0xff]
        %v5708 = vrot.slane %v5403, 2
        %v5709 = vrot.slane %v5411, 2
        %v5710 = vsel %vm5400, %v5708, %v5709
        %v5711 = vrot.slane %v5468, 2
        %v5712 = vsel %vm5400, %v5709, %v5711
        %v5713 = vrot.slane %v5462, 2
        %v5714 = vsel %vm5400, %v5711, %v5713
        %v5715 = vrot.slane %v5469, 2
        %v5716 = vsel %vm5400, %v5713, %v5715
        %v5718 = vsel %vm5492, %v5704, 0
        %v5721 = vsel %vm5492, %v5705, 0
        %v5724 = vsel %vm5492, %v5706, 0
        %v5727 = vsel %vm5492, %v5707, 0
        %v5729 = vsel %vm5492, %v5710, 0
        %v5731 = vsel %vm5492, %v5712, 0
        %v5733 = vsel %vm5492, %v5714, 0
        %v5735 = vsel %vm5492, %v5716, 0
        %5737 = vmatprep.subr.mxu0 0.0
        %5738 = vmatpush1.xpose.msra.mxu0 %v5729
        %5739 = vmatprep.subr.mxu0 0.0
        %5740 = vmatpush1.xpose.msra.mxu0 %v5731
        %5741 = vmatprep.subr.mxu0 0.0
        %5742 = vmatpush1.xpose.msra.mxu0 %v5733
        %5743 = vmatprep.subr.mxu0 0.0
        %5744 = vmatpush1.xpose.msra.mxu0 %v5735
        %5745 = vmatprep.subr.mxu0 0.0
        %5746 = vmatpush1.xpose.msra.mxu0 0.0
        %5747 = vmatprep.subr.mxu0 0.0
        %5748 = vmatpush1.xpose.msra.mxu0 0.0
        %5749 = vmatprep.subr.mxu0 0.0
        %5750 = vmatpush1.xpose.msra.mxu0 0.0
        %5751 = vmatprep.subr.mxu0 0.0
        %5752 = vmatpush1.xpose.msra.mxu0 0.0
        %5753 = vmatprep.subr.mxu0 0.0
        %5754 = vmatpush1.xpose.msra.mxu0 0.0
        %5755 = vmatprep.subr.mxu0 0.0
        %5756 = vmatpush1.xpose.msra.mxu0 0.0
        %5757 = vmatprep.subr.mxu0 0.0
        %5758 = vmatpush1.xpose.msra.mxu0 0.0
        %5759 = vmatprep.subr.mxu0 0.0
        %5760 = vmatpush1.xpose.msra.mxu0 0.0
        %5761 = vmatprep.subr.mxu0 0.0
        %5762 = vmatpush1.xpose.msra.mxu0 0.0
        %5763 = vmatprep.subr.mxu0 0.0
        %5764 = vmatpush1.xpose.msra.mxu0 0.0
        %5765 = vmatprep.subr.mxu0 0.0
        %5766 = vmatpush1.xpose.msra.mxu0 0.0
        %5767 = vmatprep.subr.mxu0 0.0
        %5768 = vmatpush1.xpose.msra.mxu0 0.0
        %5769 = vmatprep.subr.mxu0 0.0
        %5770 = vmatpush1.xpose.msra.mxu0 0.0
        %5771 = vmatprep.subr.mxu0 0.0
        %5772 = vmatpush1.xpose.msra.mxu0 0.0
        %5773 = vmatprep.subr.mxu0 0.0
        %5774 = vmatpush1.xpose.msra.mxu0 0.0
        %5775 = vmatprep.subr.mxu0 0.0
        %5776 = vmatpush1.xpose.msra.mxu0 0.0
        %5777 = vmatprep.subr.mxu0 0.0
        %5778 = vmatpush1.xpose.msra.mxu0 0.0
        %5779 = vmatprep.subr.mxu0 0.0
        %5780 = vmatpush1.xpose.msra.mxu0 0.0
        %5781 = vmatprep.subr.mxu0 0.0
        %5782 = vmatpush1.xpose.msra.mxu0 0.0
        %5783 = vmatprep.subr.mxu0 0.0
        %5784 = vmatpush1.xpose.msra.mxu0 0.0
        %5785 = vmatprep.subr.mxu0 0.0
        %5786 = vmatpush1.xpose.msra.mxu0 0.0
        %5787 = vmatprep.subr.mxu0 0.0
        %5788 = vmatpush1.xpose.msra.mxu0 0.0
        %5789 = vmatprep.subr.mxu0 0.0
        %5790 = vmatpush1.xpose.msra.mxu0 0.0
        %5791 = vmatprep.subr.mxu0 0.0
        %5792 = vmatpush1.xpose.msra.mxu0 0.0
        %5793 = vmatprep.subr.mxu0 0.0
        %5794 = vmatpush1.xpose.msra.mxu0 0.0
        %5795 = vmatprep.subr.mxu0 0.0
        %5796 = vmatpush1.xpose.msra.mxu0 0.0
        %5797 = vmatprep.subr.mxu0 0.0
        %5798 = vmatpush1.xpose.msra.mxu0 0.0
        %5799 = vmatprep.subr.mxu0 0.0
        %5800 = vmatpush1.xpose.msra.mxu0 0.0
        %5801 = vmatprep.mubr.f32.mxu0 0.0
        %5802 = vmatmul.mubr.f32.gmra.mrb[0].mxu0 %v5718
        %v5803 = vpop.f32.mrb[0].mxu0
        %v5804 = vadd.f32 0.0, %v5803
        %v5805 = vpop.f32.mrb[0].mxu0
        %5806 = vmatprep.mubr.f32.mxu0 0.0
        %5807 = vmatmul.mubr.f32.gmra.mrb[0].mxu0 %v5721
        %v5808 = vpop.f32.mrb[0].mxu0
        %v5809 = vadd.f32 0.0, %v5808
        %v5810 = vpop.f32.mrb[0].mxu0
        %5811 = vmatprep.mubr.f32.mxu0 0.0
        %5812 = vmatmul.mubr.f32.gmra.mrb[0].mxu0 %v5724
        %v5813 = vpop.f32.mrb[0].mxu0
        %v5814 = vadd.f32 0.0, %v5813
        %v5815 = vpop.f32.mrb[0].mxu0
        %5816 = vmatprep.mubr.f32.mxu0 0.0
        %5817 = vmatmul.mubr.f32.gmra.mrb[0].mxu0 %v5727
        %v5818 = vpop.f32.mrb[0].mxu0
        %v5819 = vadd.f32 0.0, %v5818
        %v5820 = vpop.f32.mrb[0].mxu0
        %5821 = vdwg.mxu0
        %v5822 = vadd.f32 %v5685, %v5804
        %v5823 = vadd.f32 %v5690, %v5809
        %v5824 = vadd.f32 %v5695, %v5814
        %v5825 = vadd.f32 %v5700, %v5819
        %s5826 = scalar_lea.vmem %s4, 96
        %v5827 = vld [vmem:[%s5826] sm:$0xff]
        %v5828 = vld [vmem:[%s5826 + $0x8] sm:$0xff]
        %v5829 = vld [vmem:[%s5826 + $0x10] sm:$0xff]
        %v5830 = vld [vmem:[%s5826 + $0x18] sm:$0xff]
        %v5831 = vrot.slane %v5403, 3
        %v5832 = vrot.slane %v5411, 3
        %v5833 = vsel %vm5398, %v5831, %v5832
        %v5834 = vrot.slane %v5468, 3
        %v5835 = vsel %vm5398, %v5832, %v5834
        %v5836 = vrot.slane %v5462, 3
        %v5837 = vsel %vm5398, %v5834, %v5836
        %v5838 = vrot.slane %v5469, 3
        %v5839 = vsel %vm5398, %v5836, %v5838
        %v5841 = vsel %vm5492, %v5827, 0
        %v5844 = vsel %vm5492, %v5828, 0
        %v5847 = vsel %vm5492, %v5829, 0
        %v5850 = vsel %vm5492, %v5830, 0
        %v5852 = vsel %vm5492, %v5833, 0
        %v5854 = vsel %vm5492, %v5835, 0
        %v5856 = vsel %vm5492, %v5837, 0
        %v5858 = vsel %vm5492, %v5839, 0
        %5860 = vmatprep.subr.mxu0 0.0
        %5861 = vmatpush1.xpose.msra.mxu0 %v5852
        %5862 = vmatprep.subr.mxu0 0.0
        %5863 = vmatpush1.xpose.msra.mxu0 %v5854
        %5864 = vmatprep.subr.mxu0 0.0
        %5865 = vmatpush1.xpose.msra.mxu0 %v5856
        %5866 = vmatprep.subr.mxu0 0.0
        %5867 = vmatpush1.xpose.msra.mxu0 %v5858
        %5868 = vmatprep.subr.mxu0 0.0
        %5869 = vmatpush1.xpose.msra.mxu0 0.0
        %5870 = vmatprep.subr.mxu0 0.0
        %5871 = vmatpush1.xpose.msra.mxu0 0.0
        %5872 = vmatprep.subr.mxu0 0.0
        %5873 = vmatpush1.xpose.msra.mxu0 0.0
        %5874 = vmatprep.subr.mxu0 0.0
        %5875 = vmatpush1.xpose.msra.mxu0 0.0
        %5876 = vmatprep.subr.mxu0 0.0
        %5877 = vmatpush1.xpose.msra.mxu0 0.0
        %5878 = vmatprep.subr.mxu0 0.0
        %5879 = vmatpush1.xpose.msra.mxu0 0.0
        %5880 = vmatprep.subr.mxu0 0.0
        %5881 = vmatpush1.xpose.msra.mxu0 0.0
        %5882 = vmatprep.subr.mxu0 0.0
        %5883 = vmatpush1.xpose.msra.mxu0 0.0
        %5884 = vmatprep.subr.mxu0 0.0
        %5885 = vmatpush1.xpose.msra.mxu0 0.0
        %5886 = vmatprep.subr.mxu0 0.0
        %5887 = vmatpush1.xpose.msra.mxu0 0.0
        %5888 = vmatprep.subr.mxu0 0.0
        %5889 = vmatpush1.xpose.msra.mxu0 0.0
        %5890 = vmatprep.subr.mxu0 0.0
        %5891 = vmatpush1.xpose.msra.mxu0 0.0
        %5892 = vmatprep.subr.mxu0 0.0
        %5893 = vmatpush1.xpose.msra.mxu0 0.0
        %5894 = vmatprep.subr.mxu0 0.0
        %5895 = vmatpush1.xpose.msra.mxu0 0.0
        %5896 = vmatprep.subr.mxu0 0.0
        %5897 = vmatpush1.xpose.msra.mxu0 0.0
        %5898 = vmatprep.subr.mxu0 0.0
        %5899 = vmatpush1.xpose.msra.mxu0 0.0
        %5900 = vmatprep.subr.mxu0 0.0
        %5901 = vmatpush1.xpose.msra.mxu0 0.0
        %5902 = vmatprep.subr.mxu0 0.0
        %5903 = vmatpush1.xpose.msra.mxu0 0.0
        %5904 = vmatprep.subr.mxu0 0.0
        %5905 = vmatpush1.xpose.msra.mxu0 0.0
        %5906 = vmatprep.subr.mxu0 0.0
        %5907 = vmatpush1.xpose.msra.mxu0 0.0
        %5908 = vmatprep.subr.mxu0 0.0
        %5909 = vmatpush1.xpose.msra.mxu0 0.0
        %5910 = vmatprep.subr.mxu0 0.0
        %5911 = vmatpush1.xpose.msra.mxu0 0.0
        %5912 = vmatprep.subr.mxu0 0.0
        %5913 = vmatpush1.xpose.msra.mxu0 0.0
        %5914 = vmatprep.subr.mxu0 0.0
        %5915 = vmatpush1.xpose.msra.mxu0 0.0
        %5916 = vmatprep.subr.mxu0 0.0
        %5917 = vmatpush1.xpose.msra.mxu0 0.0
        %5918 = vmatprep.subr.mxu0 0.0
        %5919 = vmatpush1.xpose.msra.mxu0 0.0
        %5920 = vmatprep.subr.mxu0 0.0
        %5921 = vmatpush1.xpose.msra.mxu0 0.0
        %5922 = vmatprep.subr.mxu0 0.0
        %5923 = vmatpush1.xpose.msra.mxu0 0.0
        %5924 = vmatprep.mubr.f32.mxu0 0.0
        %5925 = vmatmul.mubr.f32.gmra.mrb[0].mxu0 %v5841
        %v5926 = vpop.f32.mrb[0].mxu0
        %v5927 = vadd.f32 0.0, %v5926
        %v5928 = vpop.f32.mrb[0].mxu0
        %5929 = vmatprep.mubr.f32.mxu0 0.0
        %5930 = vmatmul.mubr.f32.gmra.mrb[0].mxu0 %v5844
        %v5931 = vpop.f32.mrb[0].mxu0
        %v5932 = vadd.f32 0.0, %v5931
        %v5933 = vpop.f32.mrb[0].mxu0
        %5934 = vmatprep.mubr.f32.mxu0 0.0
        %5935 = vmatmul.mubr.f32.gmra.mrb[0].mxu0 %v5847
        %v5936 = vpop.f32.mrb[0].mxu0
        %v5937 = vadd.f32 0.0, %v5936
        %v5938 = vpop.f32.mrb[0].mxu0
        %5939 = vmatprep.mubr.f32.mxu0 0.0
        %5940 = vmatmul.mubr.f32.gmra.mrb[0].mxu0 %v5850
        %v5941 = vpop.f32.mrb[0].mxu0
        %v5942 = vadd.f32 0.0, %v5941
        %v5943 = vpop.f32.mrb[0].mxu0
        %5944 = vdwg.mxu0
        %v5945 = vadd.f32 %v5822, %v5927
        %v5946 = vadd.f32 %v5823, %v5932
        %v5947 = vadd.f32 %v5824, %v5937
        %v5948 = vadd.f32 %v5825, %v5942
        %s5949 = scalar_lea.vmem %s4, 128
        %v5950 = vld [vmem:[%s5949] sm:$0xff]
        %v5951 = vld [vmem:[%s5949 + $0x8] sm:$0xff]
        %v5952 = vld [vmem:[%s5949 + $0x10] sm:$0xff]
        %v5953 = vld [vmem:[%s5949 + $0x18] sm:$0xff]
        %v5954 = vrot.slane %v5403, 4
        %v5955 = vrot.slane %v5411, 4
        %v5956 = vsel %vm5396, %v5954, %v5955
        %v5957 = vrot.slane %v5468, 4
        %v5958 = vsel %vm5396, %v5955, %v5957
        %v5959 = vrot.slane %v5462, 4
        %v5960 = vsel %vm5396, %v5957, %v5959
        %v5961 = vrot.slane %v5469, 4
        %v5962 = vsel %vm5396, %v5959, %v5961
        %v5964 = vsel %vm5492, %v5950, 0
        %v5967 = vsel %vm5492, %v5951, 0
        %v5970 = vsel %vm5492, %v5952, 0
        %v5973 = vsel %vm5492, %v5953, 0
        %v5975 = vsel %vm5492, %v5956, 0
        %v5977 = vsel %vm5492, %v5958, 0
        %v5979 = vsel %vm5492, %v5960, 0
        %v5981 = vsel %vm5492, %v5962, 0
        %5983 = vmatprep.subr.mxu0 0.0
        %5984 = vmatpush1.xpose.msra.mxu0 %v5975
        %5985 = vmatprep.subr.mxu0 0.0
        %5986 = vmatpush1.xpose.msra.mxu0 %v5977
        %5987 = vmatprep.subr.mxu0 0.0
        %5988 = vmatpush1.xpose.msra.mxu0 %v5979
        %5989 = vmatprep.subr.mxu0 0.0
        %5990 = vmatpush1.xpose.msra.mxu0 %v5981
        %5991 = vmatprep.subr.mxu0 0.0
        %5992 = vmatpush1.xpose.msra.mxu0 0.0
        %5993 = vmatprep.subr.mxu0 0.0
        %5994 = vmatpush1.xpose.msra.mxu0 0.0
        %5995 = vmatprep.subr.mxu0 0.0
        %5996 = vmatpush1.xpose.msra.mxu0 0.0
        %5997 = vmatprep.subr.mxu0 0.0
        %5998 = vmatpush1.xpose.msra.mxu0 0.0
        %5999 = vmatprep.subr.mxu0 0.0
        %6000 = vmatpush1.xpose.msra.mxu0 0.0
        %6001 = vmatprep.subr.mxu0 0.0
        %6002 = vmatpush1.xpose.msra.mxu0 0.0
        %6003 = vmatprep.subr.mxu0 0.0
        %6004 = vmatpush1.xpose.msra.mxu0 0.0
        %6005 = vmatprep.subr.mxu0 0.0
        %6006 = vmatpush1.xpose.msra.mxu0 0.0
        %6007 = vmatprep.subr.mxu0 0.0
        %6008 = vmatpush1.xpose.msra.mxu0 0.0
        %6009 = vmatprep.subr.mxu0 0.0
        %6010 = vmatpush1.xpose.msra.mxu0 0.0
        %6011 = vmatprep.subr.mxu0 0.0
        %6012 = vmatpush1.xpose.msra.mxu0 0.0
        %6013 = vmatprep.subr.mxu0 0.0
        %6014 = vmatpush1.xpose.msra.mxu0 0.0
        %6015 = vmatprep.subr.mxu0 0.0
        %6016 = vmatpush1.xpose.msra.mxu0 0.0
        %6017 = vmatprep.subr.mxu0 0.0
        %6018 = vmatpush1.xpose.msra.mxu0 0.0
        %6019 = vmatprep.subr.mxu0 0.0
        %6020 = vmatpush1.xpose.msra.mxu0 0.0
        %6021 = vmatprep.subr.mxu0 0.0
        %6022 = vmatpush1.xpose.msra.mxu0 0.0
        %6023 = vmatprep.subr.mxu0 0.0
        %6024 = vmatpush1.xpose.msra.mxu0 0.0
        %6025 = vmatprep.subr.mxu0 0.0
        %6026 = vmatpush1.xpose.msra.mxu0 0.0
        %6027 = vmatprep.subr.mxu0 0.0
        %6028 = vmatpush1.xpose.msra.mxu0 0.0
        %6029 = vmatprep.subr.mxu0 0.0
        %6030 = vmatpush1.xpose.msra.mxu0 0.0
        %6031 = vmatprep.subr.mxu0 0.0
        %6032 = vmatpush1.xpose.msra.mxu0 0.0
        %6033 = vmatprep.subr.mxu0 0.0
        %6034 = vmatpush1.xpose.msra.mxu0 0.0
        %6035 = vmatprep.subr.mxu0 0.0
        %6036 = vmatpush1.xpose.msra.mxu0 0.0
        %6037 = vmatprep.subr.mxu0 0.0
        %6038 = vmatpush1.xpose.msra.mxu0 0.0
        %6039 = vmatprep.subr.mxu0 0.0
        %6040 = vmatpush1.xpose.msra.mxu0 0.0
        %6041 = vmatprep.subr.mxu0 0.0
        %6042 = vmatpush1.xpose.msra.mxu0 0.0
        %6043 = vmatprep.subr.mxu0 0.0
        %6044 = vmatpush1.xpose.msra.mxu0 0.0
        %6045 = vmatprep.subr.mxu0 0.0
        %6046 = vmatpush1.xpose.msra.mxu0 0.0
        %6047 = vmatprep.mubr.f32.mxu0 0.0
        %6048 = vmatmul.mubr.f32.gmra.mrb[0].mxu0 %v5964
        %v6049 = vpop.f32.mrb[0].mxu0
        %v6050 = vadd.f32 0.0, %v6049
        %v6051 = vpop.f32.mrb[0].mxu0
        %6052 = vmatprep.mubr.f32.mxu0 0.0
        %6053 = vmatmul.mubr.f32.gmra.mrb[0].mxu0 %v5967
        %v6054 = vpop.f32.mrb[0].mxu0
        %v6055 = vadd.f32 0.0, %v6054
        %v6056 = vpop.f32.mrb[0].mxu0
        %6057 = vmatprep.mubr.f32.mxu0 0.0
        %6058 = vmatmul.mubr.f32.gmra.mrb[0].mxu0 %v5970
        %v6059 = vpop.f32.mrb[0].mxu0
        %v6060 = vadd.f32 0.0, %v6059
        %v6061 = vpop.f32.mrb[0].mxu0
        %6062 = vmatprep.mubr.f32.mxu0 0.0
        %6063 = vmatmul.mubr.f32.gmra.mrb[0].mxu0 %v5973
        %v6064 = vpop.f32.mrb[0].mxu0
        %v6065 = vadd.f32 0.0, %v6064
        %v6066 = vpop.f32.mrb[0].mxu0
        %6067 = vdwg.mxu0
        %v6068 = vadd.f32 %v5945, %v6050
        %v6069 = vadd.f32 %v5946, %v6055
        %v6070 = vadd.f32 %v5947, %v6060
        %v6071 = vadd.f32 %v5948, %v6065
        %s6072 = scalar_lea.vmem %s4, 160
        %v6073 = vld [vmem:[%s6072] sm:$0xff]
        %v6074 = vld [vmem:[%s6072 + $0x8] sm:$0xff]
        %v6075 = vld [vmem:[%s6072 + $0x10] sm:$0xff]
        %v6076 = vld [vmem:[%s6072 + $0x18] sm:$0xff]
        %v6077 = vrot.slane %v5403, 5
        %v6078 = vrot.slane %v5411, 5
        %v6079 = vsel %vm5394, %v6077, %v6078
        %v6080 = vrot.slane %v5468, 5
        %v6081 = vsel %vm5394, %v6078, %v6080
        %v6082 = vrot.slane %v5462, 5
        %v6083 = vsel %vm5394, %v6080, %v6082
        %v6084 = vrot.slane %v5469, 5
        %v6085 = vsel %vm5394, %v6082, %v6084
        %v6087 = vsel %vm5492, %v6073, 0
        %v6090 = vsel %vm5492, %v6074, 0
        %v6093 = vsel %vm5492, %v6075, 0
        %v6096 = vsel %vm5492, %v6076, 0
        %v6098 = vsel %vm5492, %v6079, 0
        %v6100 = vsel %vm5492, %v6081, 0
        %v6102 = vsel %vm5492, %v6083, 0
        %v6104 = vsel %vm5492, %v6085, 0
        %6106 = vmatprep.subr.mxu0 0.0
        %6107 = vmatpush1.xpose.msra.mxu0 %v6098
        %6108 = vmatprep.subr.mxu0 0.0
        %6109 = vmatpush1.xpose.msra.mxu0 %v6100
        %6110 = vmatprep.subr.mxu0 0.0
        %6111 = vmatpush1.xpose.msra.mxu0 %v6102
        %6112 = vmatprep.subr.mxu0 0.0
        %6113 = vmatpush1.xpose.msra.mxu0 %v6104
        %6114 = vmatprep.subr.mxu0 0.0
        %6115 = vmatpush1.xpose.msra.mxu0 0.0
        %6116 = vmatprep.subr.mxu0 0.0
        %6117 = vmatpush1.xpose.msra.mxu0 0.0
        %6118 = vmatprep.subr.mxu0 0.0
        %6119 = vmatpush1.xpose.msra.mxu0 0.0
        %6120 = vmatprep.subr.mxu0 0.0
        %6121 = vmatpush1.xpose.msra.mxu0 0.0
        %6122 = vmatprep.subr.mxu0 0.0
        %6123 = vmatpush1.xpose.msra.mxu0 0.0
        %6124 = vmatprep.subr.mxu0 0.0
        %6125 = vmatpush1.xpose.msra.mxu0 0.0
        %6126 = vmatprep.subr.mxu0 0.0
        %6127 = vmatpush1.xpose.msra.mxu0 0.0
        %6128 = vmatprep.subr.mxu0 0.0
        %6129 = vmatpush1.xpose.msra.mxu0 0.0
        %6130 = vmatprep.subr.mxu0 0.0
        %6131 = vmatpush1.xpose.msra.mxu0 0.0
        %6132 = vmatprep.subr.mxu0 0.0
        %6133 = vmatpush1.xpose.msra.mxu0 0.0
        %6134 = vmatprep.subr.mxu0 0.0
        %6135 = vmatpush1.xpose.msra.mxu0 0.0
        %6136 = vmatprep.subr.mxu0 0.0
        %6137 = vmatpush1.xpose.msra.mxu0 0.0
        %6138 = vmatprep.subr.mxu0 0.0
        %6139 = vmatpush1.xpose.msra.mxu0 0.0
        %6140 = vmatprep.subr.mxu0 0.0
        %6141 = vmatpush1.xpose.msra.mxu0 0.0
        %6142 = vmatprep.subr.mxu0 0.0
        %6143 = vmatpush1.xpose.msra.mxu0 0.0
        %6144 = vmatprep.subr.mxu0 0.0
        %6145 = vmatpush1.xpose.msra.mxu0 0.0
        %6146 = vmatprep.subr.mxu0 0.0
        %6147 = vmatpush1.xpose.msra.mxu0 0.0
        %6148 = vmatprep.subr.mxu0 0.0
        %6149 = vmatpush1.xpose.msra.mxu0 0.0
        %6150 = vmatprep.subr.mxu0 0.0
        %6151 = vmatpush1.xpose.msra.mxu0 0.0
        %6152 = vmatprep.subr.mxu0 0.0
        %6153 = vmatpush1.xpose.msra.mxu0 0.0
        %6154 = vmatprep.subr.mxu0 0.0
        %6155 = vmatpush1.xpose.msra.mxu0 0.0
        %6156 = vmatprep.subr.mxu0 0.0
        %6157 = vmatpush1.xpose.msra.mxu0 0.0
        %6158 = vmatprep.subr.mxu0 0.0
        %6159 = vmatpush1.xpose.msra.mxu0 0.0
        %6160 = vmatprep.subr.mxu0 0.0
        %6161 = vmatpush1.xpose.msra.mxu0 0.0
        %6162 = vmatprep.subr.mxu0 0.0
        %6163 = vmatpush1.xpose.msra.mxu0 0.0
        %6164 = vmatprep.subr.mxu0 0.0
        %6165 = vmatpush1.xpose.msra.mxu0 0.0
        %6166 = vmatprep.subr.mxu0 0.0
        %6167 = vmatpush1.xpose.msra.mxu0 0.0
        %6168 = vmatprep.subr.mxu0 0.0
        %6169 = vmatpush1.xpose.msra.mxu0 0.0
        %6170 = vmatprep.mubr.f32.mxu0 0.0
        %6171 = vmatmul.mubr.f32.gmra.mrb[0].mxu0 %v6087
        %v6172 = vpop.f32.mrb[0].mxu0
        %v6173 = vadd.f32 0.0, %v6172
        %v6174 = vpop.f32.mrb[0].mxu0
        %6175 = vmatprep.mubr.f32.mxu0 0.0
        %6176 = vmatmul.mubr.f32.gmra.mrb[0].mxu0 %v6090
        %v6177 = vpop.f32.mrb[0].mxu0
        %v6178 = vadd.f32 0.0, %v6177
        %v6179 = vpop.f32.mrb[0].mxu0
        %6180 = vmatprep.mubr.f32.mxu0 0.0
        %6181 = vmatmul.mubr.f32.gmra.mrb[0].mxu0 %v6093
        %v6182 = vpop.f32.mrb[0].mxu0
        %v6183 = vadd.f32 0.0, %v6182
        %v6184 = vpop.f32.mrb[0].mxu0
        %6185 = vmatprep.mubr.f32.mxu0 0.0
        %6186 = vmatmul.mubr.f32.gmra.mrb[0].mxu0 %v6096
        %v6187 = vpop.f32.mrb[0].mxu0
        %v6188 = vadd.f32 0.0, %v6187
        %v6189 = vpop.f32.mrb[0].mxu0
        %6190 = vdwg.mxu0
        %v6191 = vadd.f32 %v6068, %v6173
        %v6192 = vadd.f32 %v6069, %v6178
        %v6193 = vadd.f32 %v6070, %v6183
        %v6194 = vadd.f32 %v6071, %v6188
        %s6195 = scalar_lea.vmem %s4, 192
        %v6196 = vld [vmem:[%s6195] sm:$0xff]
        %v6197 = vld [vmem:[%s6195 + $0x8] sm:$0xff]
        %v6198 = vld [vmem:[%s6195 + $0x10] sm:$0xff]
        %v6199 = vld [vmem:[%s6195 + $0x18] sm:$0xff]
        %v6200 = vrot.slane %v5403, 6
        %v6201 = vrot.slane %v5411, 6
        %v6202 = vsel %vm5405, %v6200, %v6201
        %v6203 = vrot.slane %v5468, 6
        %v6204 = vsel %vm5405, %v6201, %v6203
        %v6205 = vrot.slane %v5462, 6
        %v6206 = vsel %vm5405, %v6203, %v6205
        %v6207 = vrot.slane %v5469, 6
        %v6208 = vsel %vm5405, %v6205, %v6207
        %v6210 = vsel %vm5492, %v6196, 0
        %v6213 = vsel %vm5492, %v6197, 0
        %v6216 = vsel %vm5492, %v6198, 0
        %v6219 = vsel %vm5492, %v6199, 0
        %v6221 = vsel %vm5492, %v6202, 0
        %v6223 = vsel %vm5492, %v6204, 0
        %v6225 = vsel %vm5492, %v6206, 0
        %v6227 = vsel %vm5492, %v6208, 0
        %6229 = vmatprep.subr.mxu0 0.0
        %6230 = vmatpush1.xpose.msra.mxu0 %v6221
        %6231 = vmatprep.subr.mxu0 0.0
        %6232 = vmatpush1.xpose.msra.mxu0 %v6223
        %6233 = vmatprep.subr.mxu0 0.0
        %6234 = vmatpush1.xpose.msra.mxu0 %v6225
        %6235 = vmatprep.subr.mxu0 0.0
        %6236 = vmatpush1.xpose.msra.mxu0 %v6227
        %6237 = vmatprep.subr.mxu0 0.0
        %6238 = vmatpush1.xpose.msra.mxu0 0.0
        %6239 = vmatprep.subr.mxu0 0.0
        %6240 = vmatpush1.xpose.msra.mxu0 0.0
        %6241 = vmatprep.subr.mxu0 0.0
        %6242 = vmatpush1.xpose.msra.mxu0 0.0
        %6243 = vmatprep.subr.mxu0 0.0
        %6244 = vmatpush1.xpose.msra.mxu0 0.0
        %6245 = vmatprep.subr.mxu0 0.0
        %6246 = vmatpush1.xpose.msra.mxu0 0.0
        %6247 = vmatprep.subr.mxu0 0.0
        %6248 = vmatpush1.xpose.msra.mxu0 0.0
        %6249 = vmatprep.subr.mxu0 0.0
        %6250 = vmatpush1.xpose.msra.mxu0 0.0
        %6251 = vmatprep.subr.mxu0 0.0
        %6252 = vmatpush1.xpose.msra.mxu0 0.0
        %6253 = vmatprep.subr.mxu0 0.0
        %6254 = vmatpush1.xpose.msra.mxu0 0.0
        %6255 = vmatprep.subr.mxu0 0.0
        %6256 = vmatpush1.xpose.msra.mxu0 0.0
        %6257 = vmatprep.subr.mxu0 0.0
        %6258 = vmatpush1.xpose.msra.mxu0 0.0
        %6259 = vmatprep.subr.mxu0 0.0
        %6260 = vmatpush1.xpose.msra.mxu0 0.0
        %6261 = vmatprep.subr.mxu0 0.0
        %6262 = vmatpush1.xpose.msra.mxu0 0.0
        %6263 = vmatprep.subr.mxu0 0.0
        %6264 = vmatpush1.xpose.msra.mxu0 0.0
        %6265 = vmatprep.subr.mxu0 0.0
        %6266 = vmatpush1.xpose.msra.mxu0 0.0
        %6267 = vmatprep.subr.mxu0 0.0
        %6268 = vmatpush1.xpose.msra.mxu0 0.0
        %6269 = vmatprep.subr.mxu0 0.0
        %6270 = vmatpush1.xpose.msra.mxu0 0.0
        %6271 = vmatprep.subr.mxu0 0.0
        %6272 = vmatpush1.xpose.msra.mxu0 0.0
        %6273 = vmatprep.subr.mxu0 0.0
        %6274 = vmatpush1.xpose.msra.mxu0 0.0
        %6275 = vmatprep.subr.mxu0 0.0
        %6276 = vmatpush1.xpose.msra.mxu0 0.0
        %6277 = vmatprep.subr.mxu0 0.0
        %6278 = vmatpush1.xpose.msra.mxu0 0.0
        %6279 = vmatprep.subr.mxu0 0.0
        %6280 = vmatpush1.xpose.msra.mxu0 0.0
        %6281 = vmatprep.subr.mxu0 0.0
        %6282 = vmatpush1.xpose.msra.mxu0 0.0
        %6283 = vmatprep.subr.mxu0 0.0
        %6284 = vmatpush1.xpose.msra.mxu0 0.0
        %6285 = vmatprep.subr.mxu0 0.0
        %6286 = vmatpush1.xpose.msra.mxu0 0.0
        %6287 = vmatprep.subr.mxu0 0.0
        %6288 = vmatpush1.xpose.msra.mxu0 0.0
        %6289 = vmatprep.subr.mxu0 0.0
        %6290 = vmatpush1.xpose.msra.mxu0 0.0
        %6291 = vmatprep.subr.mxu0 0.0
        %6292 = vmatpush1.xpose.msra.mxu0 0.0
        %6293 = vmatprep.mubr.f32.mxu0 0.0
        %6294 = vmatmul.mubr.f32.gmra.mrb[0].mxu0 %v6210
        %v6295 = vpop.f32.mrb[0].mxu0
        %v6296 = vadd.f32 0.0, %v6295
        %v6297 = vpop.f32.mrb[0].mxu0
        %6298 = vmatprep.mubr.f32.mxu0 0.0
        %6299 = vmatmul.mubr.f32.gmra.mrb[0].mxu0 %v6213
        %v6300 = vpop.f32.mrb[0].mxu0
        %v6301 = vadd.f32 0.0, %v6300
        %v6302 = vpop.f32.mrb[0].mxu0
        %6303 = vmatprep.mubr.f32.mxu0 0.0
        %6304 = vmatmul.mubr.f32.gmra.mrb[0].mxu0 %v6216
        %v6305 = vpop.f32.mrb[0].mxu0
        %v6306 = vadd.f32 0.0, %v6305
        %v6307 = vpop.f32.mrb[0].mxu0
        %6308 = vmatprep.mubr.f32.mxu0 0.0
        %6309 = vmatmul.mubr.f32.gmra.mrb[0].mxu0 %v6219
        %v6310 = vpop.f32.mrb[0].mxu0
        %v6311 = vadd.f32 0.0, %v6310
        %v6312 = vpop.f32.mrb[0].mxu0
        %6313 = vdwg.mxu0
        %v6314 = vadd.f32 %v6191, %v6296
        %v6315 = vadd.f32 %v6192, %v6301
        %v6316 = vadd.f32 %v6193, %v6306
        %v6317 = vadd.f32 %v6194, %v6311
        %v6318 = vld [vmem:[%s5] sm:$0xff]
        %v6319 = vld [vmem:[%s5 + $0x8] sm:$0xff]
        %v6320 = vld [vmem:[%s5 + $0x10] sm:$0xff]
        %v6321 = vld [vmem:[%s5 + $0x18] sm:$0xff]
        %6323 = vset.pattern.permute.xlu0 0
        %6324 = vperm.xlu0 %6323, %v6318
        %v6325 = vpop.permute.xlu0 %6324
        %6328 = vset.pattern.permute.xlu0 0
        %6329 = vperm.xlu0 %6328, %v6319
        %v6330 = vpop.permute.xlu0 %6329
        %6333 = vset.pattern.permute.xlu0 0
        %6334 = vperm.xlu0 %6333, %v6320
        %v6335 = vpop.permute.xlu0 %6334
        %6338 = vset.pattern.permute.xlu0 0
        %6339 = vperm.xlu0 %6338, %v6321
        %v6340 = vpop.permute.xlu0 %6339
        %v6342 = vadd.f32 %v6314, %v6325
        %v6343 = vadd.f32 %v6315, %v6330
        %v6344 = vadd.f32 %v6316, %v6335
        %v6345 = vadd.f32 %v6317, %v6340
        %6346 = vst.msk [vmem:[%s259] sm:$0xff] %vm5492, %v6342
        %6347 = vst.msk [vmem:[%s259 + $0x8] sm:$0xff] %vm5492, %v6343
        %6348 = vst.msk [vmem:[%s259 + $0x10] sm:$0xff] %vm5492, %v6344
        %6349 = vst.msk [vmem:[%s259 + $0x18] sm:$0xff] %vm5492, %v6345
        %s6350 = sand.u32 %s164, 1
        %s6351 = scalar_lea.sflag [#allocation3], %s6350
        %s6352 = sand.u32 %s164, 1
        %s6353 = smul.addr %s6352, 32
        %s6354 = scalar_lea.vmem [#allocation2], %s6353
        // Predicated region
        $region45: #{audio_analysis.1} parent=43 // pred_check
          %p6355 = pneg %p174
        $region46: #{audio_analysis.1} parent=43 // pred_check_branch
          %6357 = sbr.rel (%p6355) target = $region48
        $region47: #{audio_analysis.1} parent=43 // pred_region
          %s6359 = ssub.s32 512, 512
          %6360 = vsyncadd %s6351, %s6359
          %s6361 = smul.addr %s20, 4
          %s6362 = smul.addr %s6361, 128
          %s6363 = scalar_lea.hbm %s6, %s6362
          %s6364 = sshll.u32 %s6354, 4
          %s6365 = int_to_ptr.vmem [resolvable:$true] %s6364
          %6370 = dma.vmem_to_hbm [thread:$0]  %s6365, 512, %s6363, %s6351, 128, 128, 8
        $region48: #{audio_analysis.1} parent=43 // pred_fallthru
          _
      $region44: #{audio_analysis.1} parent=5 // pred_fallthru
        _
      %p6371 = scmp.le.s32.totalorder 2, %s15
      // Predicated region
      $region49: #{audio_analysis.1} parent=5 // pred_check
        %p6372 = pneg %p6371
      $region50: #{audio_analysis.1} parent=5 // pred_check_branch
        %6374 = sbr.rel (%p6372) target = $region52
      $region51: #{audio_analysis.1} parent=5 // pred_region
        %s6375 = ssub.s32 %s15, 2
        // Predicated region
        $region53: #{audio_analysis.1} parent=51 // pred_check
          %p6376 = pneg %p180
        $region54: #{audio_analysis.1} parent=51 // pred_check_branch
          %6378 = sbr.rel (%p6376) target = $region56
        $region55: #{audio_analysis.1} parent=51 // pred_region
          %s6379 = sand.u32 %s165, 1
          %s6380 = scalar_lea.sflag [#allocation3], %s6379
          %s6381 = sand.u32 %s165, 1
          %s6382 = smul.addr %s6381, 32
          %s6383 = scalar_lea.vmem [#allocation2], %s6382
          %6384 = dma.done %s6380, 512
        $region56: #{audio_analysis.1} parent=51 // pred_fallthru
          _
      $region52: #{audio_analysis.1} parent=5 // pred_fallthru
        _
    $region6: #{audio_analysis.1} parent=1 // loop_footer
      %s19 = sadd.s32 1, %s15
    $region7: #{audio_analysis.1} parent=1 // loop_footer_branch
      %14 = sbr.rel target = $region3
    $region8: #{audio_analysis.1} parent=1 // loop_exit
      _
    %6385 = vsyncpa [#allocation3], 1
    %s6386 = scalar_lea.sflag [#allocation3], 1
    %6387 = vsyncpa %s6386, 1

</llo_original>
